<compile_context>
chip_gen: v6e
topology: v6e:2x2x1
jax: 0.10.0
libtpu: 0.0.40
codegen_flags: <defaults>
</compile_context>

<pallas_src>
import jax
import jax.numpy as jnp
import numpy as np
from jax.experimental import pallas as pl
from jax.experimental.pallas import tpu as pltpu

EPS = 1e-3  # BatchNorm2d eps=0.001


def fused_kernel(x_ref, w1_ref, g1_ref, w2_ref, g2_ref, b2_ref, o_ref):
    """One grid step == one C_out tile of conv2d51 + its BatchNorm2d."""
    m = x_ref.shape[1]
    inv_m = 1.0 / m  # hoisted constant; no divides below

    # ---- conv2d50: 1x1 conv == (C_mid, C_in) @ (C_in, M) on the MXU (bf16 in, f32 acc)
    y1 = jnp.dot(w1_ref[...], x_ref[...], preferred_element_type=jnp.float32)

    # ---- batchnorm2d38 batch stats (f32).  Single-pass E[y^2] - E[y]^2, clamped so
    # catastrophic cancellation on near-constant channels can't feed rsqrt a negative.
    m1 = jnp.sum(y1, axis=1, keepdims=True) * inv_m
    v1 = jnp.sum(y1 * y1, axis=1, keepdims=True) * inv_m - m1 * m1
    scale1 = g1_ref[...] * jax.lax.rsqrt(jnp.maximum(v1, 0.0) + EPS)

    # Centred BN1 output: y1c = BN1(y1) - beta1.  A BatchNorm output has per-channel
    # batch mean exactly beta1, so y1c is zero-mean per channel, hence
    # y2c = w2 @ y1c is zero-mean per output channel.  BN2's mean subtraction therefore
    # vanishes (and beta1 cancels from the final result), removing one full cross-lane
    # reduction over the largest (C_out, M) tensor.
    y1c = ((y1 - m1) * scale1).astype(jnp.bfloat16)

    # ---- conv2d51 (this C_out tile): (C_out_t, C_mid) @ (C_mid, M) (bf16 in, f32 acc)
    y2c = jnp.dot(w2_ref[...], y1c, preferred_element_type=jnp.float32)

    # ---- batchnorm2d39: mean(y2c) == 0 per channel, so Var(y2) == E[y2c^2].
    v2 = jnp.sum(y2c * y2c, axis=1, keepdims=True) * inv_m
    scale2 = g2_ref[...] * jax.lax.rsqrt(jnp.maximum(v2, 0.0) + EPS)
    o_ref[...] = (y2c * scale2 + b2_ref[...]).astype(o_ref.dtype)


def fused_forward(x_nchw, w1, g1, b1, w2, g2, b2):
    """x_nchw: (N, 672, H, W) f32; w1: (160, 672); w2: (960, 160) -> (N, 960, H, W) f32.

    beta1 (b1) provably cancels out of the module output (BN2 subtracts the batch mean,
    and beta1 only shifts conv2d51's input mean), so it is accepted for interface
    parity but not passed to the kernel.
    """
    del b1
    N, C_in, H, W = x_nchw.shape
    C_mid = w1.shape[0]
    C_out = w2.shape[0]
    M = N * H * W

    # (C, M) layout: pure reshape for N == 1.
    if N == 1:
        x2d = x_nchw.reshape(C_in, M)
    else:
        x2d = jnp.transpose(x_nchw, (1, 0, 2, 3)).reshape(C_in, M)

    # bf16 MXU operands (f32 accumulation happens inside the kernel).
    x_bf = x2d.astype(jnp.bfloat16)
    w1_bf = w1.astype(jnp.bfloat16)
    w2_bf = w2.astype(jnp.bfloat16)

    g1_2d = g1.reshape(C_mid, 1).astype(jnp.float32)
    g2_2d = g2.reshape(C_out, 1).astype(jnp.float32)
    b2_2d = b2.reshape(C_out, 1).astype(jnp.float32)

    # 2 parallel C_out tiles (fallback to 1 if C_out can't be split 8-aligned).
    n_co = 2 if C_out % 16 == 0 else 1
    co_t = C_out // n_co

    bytes_accessed = (
        2 * (C_in * M + C_mid * C_in + C_out * C_mid)  # bf16 inputs
        + 4 * (C_out * M)                              # f32 output
        + 4 * (C_mid + 2 * C_out)                      # BN params
    )
    flops = 2 * M * C_in * C_mid * n_co + 2 * M * C_mid * C_out

    out2d = pl.pallas_call(
        fused_kernel,
        out_shape=jax.ShapeDtypeStruct((C_out, M), jnp.float32),
        grid=(n_co,),
        in_specs=[
            pl.BlockSpec((C_in, M), lambda j: (0, 0)),      # x (shared by all tiles)
            pl.BlockSpec((C_mid, C_in), lambda j: (0, 0)),  # w1
            pl.BlockSpec((C_mid, 1), lambda j: (0, 0)),     # gamma1
            pl.BlockSpec((co_t, C_mid), lambda j: (j, 0)),  # w2 tile
            pl.BlockSpec((co_t, 1), lambda j: (j, 0)),      # gamma2 tile
            pl.BlockSpec((co_t, 1), lambda j: (j, 0)),      # beta2 tile
        ],
        out_specs=pl.BlockSpec((co_t, M), lambda j: (j, 0)),
        compiler_params=pltpu.CompilerParams(dimension_semantics=("parallel",)),
        cost_estimate=pl.CostEstimate(
            flops=flops,
            transcendentals=n_co * C_mid + C_out,
            bytes_accessed=bytes_accessed,
        ),
    )(x_bf, w1_bf, g1_2d, w2_bf, g2_2d, b2_2d)

    # (C_out, M) -> NCHW; free reshape for N == 1.
    if N == 1:
        return out2d.reshape(1, C_out, H, W)
    return jnp.transpose(out2d.reshape(C_out, N, H, W), (1, 0, 2, 3))


def reference_forward(x_nchw, w1, g1, b1, w2, g2, b2):
    """Pure-JAX f32 reference with torch BatchNorm2d training-mode semantics."""
    N, C_in, H, W = x_nchw.shape
    C_out = w2.shape[0]
    x2d = jnp.transpose(x_nchw, (0, 2, 3, 1)).reshape(-1, C_in)  # (M, C_in)

    y1 = jnp.dot(x2d, w1.T, precision=jax.lax.Precision.HIGHEST)
    m1 = jnp.mean(y1, axis=0, keepdims=True)
    v1 = jnp.mean((y1 - m1) ** 2, axis=0, keepdims=True)
    y1 = (y1 - m1) / jnp.sqrt(v1 + EPS) * g1[None, :] + b1[None, :]

    y2 = jnp.dot(y1, w2.T, precision=jax.lax.Precision.HIGHEST)
    m2 = jnp.mean(y2, axis=0, keepdims=True)
    v2 = jnp.mean((y2 - m2) ** 2, axis=0, keepdims=True)
    y2 = (y2 - m2) / jnp.sqrt(v2 + EPS) * g2[None, :] + b2[None, :]

    return jnp.transpose(y2.reshape(N, H, W, C_out), (0, 3, 1, 2))


if __name__ == "__main__":
    # Shapes implied by the module: 1x1 convs 672 -> 160 -> 960; input 1x672x14x14.
    N, C_IN, C_MID, C_OUT, H, W = 1, 672, 160, 960, 14, 14

    key = jax.random.PRNGKey(0)
    k_x, k_w1, k_w2, k_g1, k_b1, k_g2, k_b2 = jax.random.split(key, 7)

    x = jax.random.normal(k_x, (N, C_IN, H, W), dtype=jnp.float32)

    # Conv weights in torch layout (out, in) (1x1 kernel squeezed).
    w1 = jax.random.normal(k_w1, (C_MID, C_IN), dtype=jnp.float32) * 0.05
    w2 = jax.random.normal(k_w2, (C_OUT, C_MID), dtype=jnp.float32) * 0.05

    # BatchNorm affine params.
    g1 = 1.0 + 0.1 * jax.random.normal(k_g1, (C_MID,), dtype=jnp.float32)
    b1 = 0.1 * jax.random.normal(k_b1, (C_MID,), dtype=jnp.float32)
    g2 = 1.0 + 0.1 * jax.random.normal(k_g2, (C_OUT,), dtype=jnp.float32)
    b2 = 0.1 * jax.random.normal(k_b2, (C_OUT,), dtype=jnp.float32)

    out = jax.block_until_ready(jax.jit(fused_forward)(x, w1, g1, b1, w2, g2, b2))
    ref = jax.block_until_ready(reference_forward(x, w1, g1, b1, w2, g2, b2))

    assert out.shape == (N, C_OUT, H, W), out.shape
    # bf16 MXU operands -> relaxed tolerance vs. the f32 reference.
    np.testing.assert_allclose(np.asarray(out), np.asarray(ref), rtol=2e-2, atol=2e-2)

    print("KERNEL_OK")
</pallas_src>

<mosaic_0001>
module attributes {stable_mosaic.version = 11 : i64} {
  func.func @fused_kernel(%arg0: i32, %arg1: memref<672x196xbf16, #tpu.memory_space<vmem>>, %arg2: memref<160x672xbf16, #tpu.memory_space<vmem>>, %arg3: memref<160x1xf32, #tpu.memory_space<vmem>>, %arg4: memref<480x160xbf16, #tpu.memory_space<vmem>>, %arg5: memref<480x1xf32, #tpu.memory_space<vmem>>, %arg6: memref<480x1xf32, #tpu.memory_space<vmem>>, %arg7: memref<480x196xf32, #tpu.memory_space<vmem>>) attributes {dimension_semantics = [#tpu.dimension_semantics<parallel>], iteration_bounds = array<i64: 2>, scalar_prefetch = 0 : i64, scratch_operands = 0 : i64, tpu.core_type = #tpu.core_type<tc>, window_params = [{pipeline_mode = #tpu.pipeline_mode<synchronous>, transform_indices = @transform_0, window_bounds = array<i64: 672, 196>}, {pipeline_mode = #tpu.pipeline_mode<synchronous>, transform_indices = @transform_1, window_bounds = array<i64: 160, 672>}, {pipeline_mode = #tpu.pipeline_mode<synchronous>, transform_indices = @transform_2, window_bounds = array<i64: 160, 1>}, {transform_indices = @transform_3, window_bounds = array<i64: 480, 160>}, {transform_indices = @transform_4, window_bounds = array<i64: 480, 1>}, {transform_indices = @transform_5, window_bounds = array<i64: 480, 1>}, {transform_indices = @transform_6, window_bounds = array<i64: 480, 196>}]} {
    %c0 = arith.constant 0 : index
    %c0_0 = arith.constant 0 : index
    %0 = vector.load %arg2[%c0, %c0_0] : memref<160x672xbf16, #tpu.memory_space<vmem>>, vector<160x672xbf16>
    %c0_1 = arith.constant 0 : index
    %c0_2 = arith.constant 0 : index
    %1 = vector.load %arg1[%c0_1, %c0_2] : memref<672x196xbf16, #tpu.memory_space<vmem>>, vector<672x196xbf16>
    %cst = arith.constant dense<0.000000e+00> : vector<160x196xf32>
    %2 = tpu.matmul %0, %1, %cst {dimension_numbers = #tpu.dot_dimension_numbers<[1], [0], [0], [1], [0, 0, 1, 1], [], []>} : vector<160x672xbf16>, vector<672x196xbf16>, vector<160x196xf32> -> vector<160x196xf32>
    %cst_3 = arith.constant dense<0.000000e+00> : vector<160xf32>
    %3 = vector.multi_reduction <add>, %2, %cst_3 [1] : vector<160x196xf32> to vector<160xf32>
    %4 = vector.shape_cast %3 : vector<160xf32> to vector<160x1xf32>
    %cst_4 = arith.constant 0.00510204071 : f32
    %5 = vector.broadcast %cst_4 : f32 to vector<160x1xf32>
    %6 = arith.mulf %4, %5 : vector<160x1xf32>
    %7 = arith.mulf %2, %2 : vector<160x196xf32>
    %cst_5 = arith.constant dense<0.000000e+00> : vector<160xf32>
    %8 = vector.multi_reduction <add>, %7, %cst_5 [1] : vector<160x196xf32> to vector<160xf32>
    %9 = vector.shape_cast %8 : vector<160xf32> to vector<160x1xf32>
    %cst_6 = arith.constant 0.00510204071 : f32
    %10 = vector.broadcast %cst_6 : f32 to vector<160x1xf32>
    %11 = arith.mulf %9, %10 : vector<160x1xf32>
    %12 = arith.mulf %6, %6 : vector<160x1xf32>
    %13 = arith.subf %11, %12 : vector<160x1xf32>
    %c0_7 = arith.constant 0 : index
    %c0_8 = arith.constant 0 : index
    %14 = vector.load %arg3[%c0_7, %c0_8] : memref<160x1xf32, #tpu.memory_space<vmem>>, vector<160x1xf32>
    %cst_9 = arith.constant 0.000000e+00 : f32
    %15 = vector.broadcast %cst_9 : f32 to vector<160x1xf32>
    %16 = arith.maximumf %13, %15 : vector<160x1xf32>
    %cst_10 = arith.constant 1.000000e-03 : f32
    %17 = vector.broadcast %cst_10 : f32 to vector<160x1xf32>
    %18 = arith.addf %16, %17 : vector<160x1xf32>
    %19 = math.rsqrt %18 : vector<160x1xf32>
    %20 = arith.mulf %14, %19 : vector<160x1xf32>
    %21 = vector.broadcast %6 : vector<160x1xf32> to vector<160x196xf32>
    %22 = arith.subf %2, %21 : vector<160x196xf32>
    %23 = vector.broadcast %20 : vector<160x1xf32> to vector<160x196xf32>
    %24 = arith.mulf %22, %23 : vector<160x196xf32>
    %25 = arith.truncf %24 : vector<160x196xf32> to vector<160x196xbf16>
    %c0_11 = arith.constant 0 : index
    %c0_12 = arith.constant 0 : index
    %26 = vector.load %arg4[%c0_11, %c0_12] : memref<480x160xbf16, #tpu.memory_space<vmem>>, vector<480x160xbf16>
    %cst_13 = arith.constant dense<0.000000e+00> : vector<480x196xf32>
    %27 = tpu.matmul %26, %25, %cst_13 {dimension_numbers = #tpu.dot_dimension_numbers<[1], [0], [0], [1], [0, 0, 1, 1], [], []>} : vector<480x160xbf16>, vector<160x196xbf16>, vector<480x196xf32> -> vector<480x196xf32>
    %28 = arith.mulf %27, %27 : vector<480x196xf32>
    %cst_14 = arith.constant dense<0.000000e+00> : vector<480xf32>
    %29 = vector.multi_reduction <add>, %28, %cst_14 [1] : vector<480x196xf32> to vector<480xf32>
    %30 = vector.shape_cast %29 : vector<480xf32> to vector<480x1xf32>
    %cst_15 = arith.constant 0.00510204071 : f32
    %31 = vector.broadcast %cst_15 : f32 to vector<480x1xf32>
    %32 = arith.mulf %30, %31 : vector<480x1xf32>
    %c0_16 = arith.constant 0 : index
    %c0_17 = arith.constant 0 : index
    %33 = vector.load %arg5[%c0_16, %c0_17] : memref<480x1xf32, #tpu.memory_space<vmem>>, vector<480x1xf32>
    %cst_18 = arith.constant 0.000000e+00 : f32
    %34 = vector.broadcast %cst_18 : f32 to vector<480x1xf32>
    %35 = arith.maximumf %32, %34 : vector<480x1xf32>
    %cst_19 = arith.constant 1.000000e-03 : f32
    %36 = vector.broadcast %cst_19 : f32 to vector<480x1xf32>
    %37 = arith.addf %35, %36 : vector<480x1xf32>
    %38 = math.rsqrt %37 : vector<480x1xf32>
    %39 = arith.mulf %33, %38 : vector<480x1xf32>
    %40 = vector.broadcast %39 : vector<480x1xf32> to vector<480x196xf32>
    %41 = arith.mulf %27, %40 : vector<480x196xf32>
    %c0_20 = arith.constant 0 : index
    %c0_21 = arith.constant 0 : index
    %42 = vector.load %arg6[%c0_20, %c0_21] : memref<480x1xf32, #tpu.memory_space<vmem>>, vector<480x1xf32>
    %43 = vector.broadcast %42 : vector<480x1xf32> to vector<480x196xf32>
    %44 = arith.addf %41, %43 : vector<480x196xf32>
    %c0_22 = arith.constant 0 : index
    %c0_23 = arith.constant 0 : index
    %45 = vector.load %arg7[%c0_22, %c0_23] : memref<480x196xf32, #tpu.memory_space<vmem>>, vector<480x196xf32>
    tpu.vector_store %arg7[%c0_22, %c0_23], %44 {strides = array<i32>} : memref<480x196xf32, #tpu.memory_space<vmem>>, vector<480x196xf32>,
    return
  }
  func.func @transform_0(%arg0: i32) -> (i32, i32) {
    %c0_i32 = arith.constant 0 : i32
    %c0_i32_0 = arith.constant 0 : i32
    %c0_i32_1 = arith.constant 0 : i32
    return %c0_i32, %c0_i32_0 : i32, i32
  }
  func.func @transform_1(%arg0: i32) -> (i32, i32) {
    %c0_i32 = arith.constant 0 : i32
    %c0_i32_0 = arith.constant 0 : i32
    %c0_i32_1 = arith.constant 0 : i32
    return %c0_i32, %c0_i32_0 : i32, i32
  }
  func.func @transform_2(%arg0: i32) -> (i32, i32) {
    %c0_i32 = arith.constant 0 : i32
    %c0_i32_0 = arith.constant 0 : i32
    %c0_i32_1 = arith.constant 0 : i32
    return %c0_i32, %c0_i32_0 : i32, i32
  }
  func.func @transform_3(%arg0: i32) -> (i32, i32) {
    %c0_i32 = arith.constant 0 : i32
    %c0_i32_0 = arith.constant 0 : i32
    return %arg0, %c0_i32 : i32, i32
  }
  func.func @transform_4(%arg0: i32) -> (i32, i32) {
    %c0_i32 = arith.constant 0 : i32
    %c0_i32_0 = arith.constant 0 : i32
    return %arg0, %c0_i32 : i32, i32
  }
  func.func @transform_5(%arg0: i32) -> (i32, i32) {
    %c0_i32 = arith.constant 0 : i32
    %c0_i32_0 = arith.constant 0 : i32
    return %arg0, %c0_i32 : i32, i32
  }
  func.func @transform_6(%arg0: i32) -> (i32, i32) {
    %c0_i32 = arith.constant 0 : i32
    %c0_i32_0 = arith.constant 0 : i32
    return %arg0, %c0_i32 : i32, i32
  }
}

</mosaic_0001>

<llo_original>
// kernel: fused_forward.1
$region0: #{fused_forward.1}
  #allocation0 [shape = 'u32[]', space=smem, size = 0x4, offset = 0x4, fixed_abs, tag = 'smem constant byte address 0x4 - core index']
  #allocation1 [shape = 'u32[144,128]{1,0:T(1,128)}', space=vmem, size = 0x12000, scoped, tag = 'internal scratch']
  %s0 = inlined_call_operand.vmem [shape: bf16[672,196], index: 0, kind: input, shape index: {}]
  %s1 = inlined_call_operand.vmem [shape: bf16[160,672], index: 1, kind: input, shape index: {}]
  %s2 = inlined_call_operand.vmem [shape: f32[160,1], index: 2, kind: input, shape index: {}]
  %s3 = inlined_call_operand.vmem [shape: bf16[960,160], index: 3, kind: input, shape index: {}]
  %s4 = inlined_call_operand.vmem [shape: f32[960,1], index: 4, kind: input, shape index: {}]
  %s5 = inlined_call_operand.vmem [shape: f32[960,1], index: 5, kind: input, shape index: {}]
  %s6 = inlined_call_operand.vmem [shape: f32[960,196], index: 6, kind: output, shape index: {}]
  %s7 = sld [smem:[#allocation0]]
  $region57: #{fused_forward.1} parent=0
    _
  %s9 = ssub.s32 1, %s7
  %s10 = scalar_select 0, %s9, %s7
  loop: start=0, step=1, limit=4
  $region2: #{fused_forward.1} parent=0 // loop_pre_header
    _
  $region3: #{fused_forward.1} parent=0 // loop_header
    %s12 = sphi 0, %s16
    %p13 = scmp.ge.s32.totalorder %s12, 4
    %s20 = sphi 0, %s20
    %s22 = sphi 0, %s20
    %s23 = sphi 0, %s22
    %s37 = sphi 0, %s23
    %s41 = sphi 0, %s41
    %s43 = sphi 0, %s41
    %s44 = sphi 0, %s43
    %s58 = sphi 0, %s44
    %s62 = sphi 0, %s62
    %s64 = sphi 0, %s62
    %s65 = sphi 0, %s64
    %s79 = sphi 0, %s65
    %s85 = sphi 0, %s87
    %s88 = sphi 0, %s85
    %s89 = sphi 0, %s88
    %s105 = sphi 0, %s89
    %s111 = sphi 0, %s113
    %s114 = sphi 0, %s111
    %s115 = sphi 0, %s114
    %s131 = sphi 0, %s115
    %s137 = sphi 0, %s139
    %s140 = sphi 0, %s137
    %s141 = sphi 0, %s140
    %s157 = sphi 0, %s141
    %s163 = sphi 0, %s165
    %s166 = sphi 0, %s163
    %s167 = sphi 0, %s166
    %s183 = sphi 0, %s167
  $region4: #{fused_forward.1} parent=0 // loop_header_branch
    %15 = sbr.rel (%p13) target = $region8
  $region5: #{fused_forward.1} parent=0 // loop_body
    %s17 = ssub.s32 %s12, 1
    %s18 = ssub.s32 %s12, 2
    %s19 = sadd.s32 %s12, 1
    %s21 = sadd.s32 %s20, 1
    %p24 = scmp.eq.s32.totalorder %s12, 1
    %p25 = scmp.ne.s32.totalorder %s20, %s22
    %p26 = scmp.eq.s32.totalorder %s12, 0
    %p27 = por %p25, %p26
    %p28 = scmp.ne.s32.totalorder %s20, %s22
    %p29 = scmp.eq.s32.totalorder %s17, 1
    %p30 = por %p28, %p29
    %p31 = scmp.ne.s32.totalorder %s22, %s23
    %p32 = scmp.eq.s32.totalorder %s17, 0
    %p33 = por %p31, %p32
    %p34 = scmp.ne.s32.totalorder %s22, %s23
    %p35 = scmp.eq.s32.totalorder %s18, 1
    %p36 = por %p34, %p35
    %p38 = scmp.ne.s32.totalorder %s23, %s37
    %p39 = scmp.eq.s32.totalorder %s18, 0
    %p40 = por %p38, %p39
    %s42 = sadd.s32 %s41, 1
    %p45 = scmp.eq.s32.totalorder %s12, 1
    %p46 = scmp.ne.s32.totalorder %s41, %s43
    %p47 = scmp.eq.s32.totalorder %s12, 0
    %p48 = por %p46, %p47
    %p49 = scmp.ne.s32.totalorder %s41, %s43
    %p50 = scmp.eq.s32.totalorder %s17, 1
    %p51 = por %p49, %p50
    %p52 = scmp.ne.s32.totalorder %s43, %s44
    %p53 = scmp.eq.s32.totalorder %s17, 0
    %p54 = por %p52, %p53
    %p55 = scmp.ne.s32.totalorder %s43, %s44
    %p56 = scmp.eq.s32.totalorder %s18, 1
    %p57 = por %p55, %p56
    %p59 = scmp.ne.s32.totalorder %s44, %s58
    %p60 = scmp.eq.s32.totalorder %s18, 0
    %p61 = por %p59, %p60
    %s63 = sadd.s32 %s62, 1
    %p66 = scmp.eq.s32.totalorder %s12, 1
    %p67 = scmp.ne.s32.totalorder %s62, %s64
    %p68 = scmp.eq.s32.totalorder %s12, 0
    %p69 = por %p67, %p68
    %p70 = scmp.ne.s32.totalorder %s62, %s64
    %p71 = scmp.eq.s32.totalorder %s17, 1
    %p72 = por %p70, %p71
    %p73 = scmp.ne.s32.totalorder %s64, %s65
    %p74 = scmp.eq.s32.totalorder %s17, 0
    %p75 = por %p73, %p74
    %p76 = scmp.ne.s32.totalorder %s64, %s65
    %p77 = scmp.eq.s32.totalorder %s18, 1
    %p78 = por %p76, %p77
    %p80 = scmp.ne.s32.totalorder %s65, %s79
    %p81 = scmp.eq.s32.totalorder %s18, 0
    %p82 = por %p80, %p81
    %s83 = ssub.s32 %s12, %s19
    %p84 = scmp.eq.s32.totalorder %s83, 0
    %s86 = sadd.s32 %s85, 1
    %s87 = scalar_select %p84, %s85, %s86
    %p90 = pneg %p84
    %p91 = scmp.eq.s32.totalorder %s12, 1
    %p92 = por %p90, %p91
    %p93 = scmp.ne.s32.totalorder %s85, %s88
    %p94 = scmp.eq.s32.totalorder %s12, 0
    %p95 = por %p93, %p94
    %p96 = scmp.ne.s32.totalorder %s85, %s88
    %p97 = scmp.eq.s32.totalorder %s17, 1
    %p98 = por %p96, %p97
    %p99 = scmp.ne.s32.totalorder %s88, %s89
    %p100 = scmp.eq.s32.totalorder %s17, 0
    %p101 = por %p99, %p100
    %p102 = scmp.ne.s32.totalorder %s88, %s89
    %p103 = scmp.eq.s32.totalorder %s18, 1
    %p104 = por %p102, %p103
    %p106 = scmp.ne.s32.totalorder %s89, %s105
    %p107 = scmp.eq.s32.totalorder %s18, 0
    %p108 = por %p106, %p107
    %s109 = ssub.s32 %s12, %s19
    %p110 = scmp.eq.s32.totalorder %s109, 0
    %s112 = sadd.s32 %s111, 1
    %s113 = scalar_select %p110, %s111, %s112
    %p116 = pneg %p110
    %p117 = scmp.eq.s32.totalorder %s12, 1
    %p118 = por %p116, %p117
    %p119 = scmp.ne.s32.totalorder %s111, %s114
    %p120 = scmp.eq.s32.totalorder %s12, 0
    %p121 = por %p119, %p120
    %p122 = scmp.ne.s32.totalorder %s111, %s114
    %p123 = scmp.eq.s32.totalorder %s17, 1
    %p124 = por %p122, %p123
    %p125 = scmp.ne.s32.totalorder %s114, %s115
    %p126 = scmp.eq.s32.totalorder %s17, 0
    %p127 = por %p125, %p126
    %p128 = scmp.ne.s32.totalorder %s114, %s115
    %p129 = scmp.eq.s32.totalorder %s18, 1
    %p130 = por %p128, %p129
    %p132 = scmp.ne.s32.totalorder %s115, %s131
    %p133 = scmp.eq.s32.totalorder %s18, 0
    %p134 = por %p132, %p133
    %s135 = ssub.s32 %s12, %s19
    %p136 = scmp.eq.s32.totalorder %s135, 0
    %s138 = sadd.s32 %s137, 1
    %s139 = scalar_select %p136, %s137, %s138
    %p142 = pneg %p136
    %p143 = scmp.eq.s32.totalorder %s12, 1
    %p144 = por %p142, %p143
    %p145 = scmp.ne.s32.totalorder %s137, %s140
    %p146 = scmp.eq.s32.totalorder %s12, 0
    %p147 = por %p145, %p146
    %p148 = scmp.ne.s32.totalorder %s137, %s140
    %p149 = scmp.eq.s32.totalorder %s17, 1
    %p150 = por %p148, %p149
    %p151 = scmp.ne.s32.totalorder %s140, %s141
    %p152 = scmp.eq.s32.totalorder %s17, 0
    %p153 = por %p151, %p152
    %p154 = scmp.ne.s32.totalorder %s140, %s141
    %p155 = scmp.eq.s32.totalorder %s18, 1
    %p156 = por %p154, %p155
    %p158 = scmp.ne.s32.totalorder %s141, %s157
    %p159 = scmp.eq.s32.totalorder %s18, 0
    %p160 = por %p158, %p159
    %s161 = ssub.s32 %s12, %s19
    %p162 = scmp.eq.s32.totalorder %s161, 0
    %s164 = sadd.s32 %s163, 1
    %s165 = scalar_select %p162, %s163, %s164
    %p168 = pneg %p162
    %p169 = scmp.eq.s32.totalorder %s12, 1
    %p170 = por %p168, %p169
    %p171 = scmp.ne.s32.totalorder %s163, %s166
    %p172 = scmp.eq.s32.totalorder %s12, 0
    %p173 = por %p171, %p172
    %p174 = scmp.ne.s32.totalorder %s163, %s166
    %p175 = scmp.eq.s32.totalorder %s17, 1
    %p176 = por %p174, %p175
    %p177 = scmp.ne.s32.totalorder %s166, %s167
    %p178 = scmp.eq.s32.totalorder %s17, 0
    %p179 = por %p177, %p178
    %p180 = scmp.ne.s32.totalorder %s166, %s167
    %p181 = scmp.eq.s32.totalorder %s18, 1
    %p182 = por %p180, %p181
    %p184 = scmp.ne.s32.totalorder %s167, %s183
    %p185 = scmp.eq.s32.totalorder %s18, 0
    %p186 = por %p184, %p185
    %p187 = scmp.le.s32.totalorder 1, %s12
    %p188 = scmp.lt.s32.totalorder %s12, 3
    %p189 = pnand %p187, %p188
    %p190 = pneg %p189
    // Predicated region
    $region9: #{fused_forward.1} parent=5 // pred_check
      _
    $region10: #{fused_forward.1} parent=5 // pred_check_branch
      %192 = sbr.rel (%p189) target = $region12
    $region11: #{fused_forward.1} parent=5 // pred_region
      %s193 = ssub.s32 %s12, 1
      // Predicated region
      $region13: #{fused_forward.1} parent=11 // pred_check
        %p194 = pneg %p33
      $region14: #{fused_forward.1} parent=11 // pred_check_branch
        %196 = sbr.rel (%p194) target = $region16
      $region15: #{fused_forward.1} parent=11 // pred_region
        _
      $region16: #{fused_forward.1} parent=11 // pred_fallthru
        _
      // Predicated region
      $region17: #{fused_forward.1} parent=11 // pred_check
        %p197 = pneg %p54
      $region18: #{fused_forward.1} parent=11 // pred_check_branch
        %199 = sbr.rel (%p197) target = $region20
      $region19: #{fused_forward.1} parent=11 // pred_region
        _
      $region20: #{fused_forward.1} parent=11 // pred_fallthru
        _
      // Predicated region
      $region21: #{fused_forward.1} parent=11 // pred_check
        %p200 = pneg %p75
      $region22: #{fused_forward.1} parent=11 // pred_check_branch
        %202 = sbr.rel (%p200) target = $region24
      $region23: #{fused_forward.1} parent=11 // pred_region
        _
      $region24: #{fused_forward.1} parent=11 // pred_fallthru
        _
    $region12: #{fused_forward.1} parent=5 // pred_fallthru
      _
    %p203 = scmp.lt.s32.totalorder %s12, 2
    // Predicated region
    $region25: #{fused_forward.1} parent=5 // pred_check
      %p204 = pneg %p203
    $region26: #{fused_forward.1} parent=5 // pred_check_branch
      %206 = sbr.rel (%p204) target = $region28
    $region27: #{fused_forward.1} parent=5 // pred_region
      // Predicated region
      $region29: #{fused_forward.1} parent=27 // pred_check
        %p207 = pneg %p95
      $region30: #{fused_forward.1} parent=27 // pred_check_branch
        %209 = sbr.rel (%p207) target = $region32
      $region31: #{fused_forward.1} parent=27 // pred_region
        %s210 = smul.u32 60, %s12
        %p211 = scmp.lt.s32.totalorder %s210, 119
        %s212 = scalar_select %p211, %s210, 119
        %s213 = smul.addr %s212, 2
        %s214 = smul.addr %s213, 4
        %s215 = scalar_lea.vmem %s3, %s214
        %s216 = smul.u32 60, %s12
      $region32: #{fused_forward.1} parent=27 // pred_fallthru
        _
      // Predicated region
      $region33: #{fused_forward.1} parent=27 // pred_check
        %p217 = pneg %p121
      $region34: #{fused_forward.1} parent=27 // pred_check_branch
        %219 = sbr.rel (%p217) target = $region36
      $region35: #{fused_forward.1} parent=27 // pred_region
        %s220 = smul.u32 60, %s12
        %p221 = scmp.lt.s32.totalorder %s220, 119
        %s222 = scalar_select %p221, %s220, 119
        %s223 = smul.addr %s222, 8
        %s224 = scalar_lea.vmem %s4, %s223
        %s225 = smul.u32 60, %s12
      $region36: #{fused_forward.1} parent=27 // pred_fallthru
        _
      // Predicated region
      $region37: #{fused_forward.1} parent=27 // pred_check
        %p226 = pneg %p147
      $region38: #{fused_forward.1} parent=27 // pred_check_branch
        %228 = sbr.rel (%p226) target = $region40
      $region39: #{fused_forward.1} parent=27 // pred_region
        %s229 = smul.u32 60, %s12
        %p230 = scmp.lt.s32.totalorder %s229, 119
        %s231 = scalar_select %p230, %s229, 119
        %s232 = smul.addr %s231, 8
        %s233 = scalar_lea.vmem %s5, %s232
        %s234 = smul.u32 60, %s12
      $region40: #{fused_forward.1} parent=27 // pred_fallthru
        _
    $region28: #{fused_forward.1} parent=5 // pred_fallthru
      _
    %p235 = scmp.le.s32.totalorder 1, %s12
    %p236 = scmp.lt.s32.totalorder %s12, 3
    %p237 = pnand %p235, %p236
    %p238 = pneg %p237
    // Predicated region
    $region41: #{fused_forward.1} parent=5 // pred_check
      _
    $region42: #{fused_forward.1} parent=5 // pred_check_branch
      %240 = sbr.rel (%p237) target = $region44
    $region43: #{fused_forward.1} parent=5 // pred_region
      %s241 = ssub.s32 %s12, 1
      %p242 = pneg %p33
      %p243 = pneg %p30
      %p244 = pneg %p54
      %p245 = pneg %p51
      %p246 = pneg %p75
      %p247 = pneg %p72
      %s248 = smul.u32 60, %s17
      %p249 = scmp.lt.s32.totalorder %s248, 119
      %s250 = scalar_select %p249, %s248, 119
      %s251 = smul.addr %s250, 2
      %s252 = smul.addr %s251, 4
      %s253 = scalar_lea.vmem %s3, %s252
      %p254 = pneg %p101
      %p255 = pneg %p98
      %s256 = smul.u32 60, %s17
      %p257 = scmp.lt.s32.totalorder %s256, 119
      %s258 = scalar_select %p257, %s256, 119
      %s259 = smul.addr %s258, 8
      %s260 = scalar_lea.vmem %s4, %s259
      %p261 = pneg %p127
      %p262 = pneg %p124
      %s263 = smul.u32 60, %s17
      %p264 = scmp.lt.s32.totalorder %s263, 119
      %s265 = scalar_select %p264, %s263, 119
      %s266 = smul.addr %s265, 8
      %s267 = scalar_lea.vmem %s5, %s266
      %p268 = pneg %p153
      %p269 = pneg %p150
      %p270 = pneg %p179
      %p271 = pneg %p176
      %s272 = smul.u32 60, %s17
      %p273 = scmp.lt.s32.totalorder %s272, 119
      %s274 = scalar_select %p273, %s272, 119
      %s275 = smul.addr %s274, 2
      %s276 = smul.addr %s275, 8
      %s277 = scalar_lea.vmem %s6, %s276
      %s278 = smul.u32 60, %s17
      %p279 = scmp.lt.s32.totalorder %s278, 119
      %s280 = scalar_select %p279, %s278, 119
      %s281 = smul.addr %s280, 2
      %s282 = smul.addr %s281, 4
      %s283 = scalar_lea.vmem %s3, %s282
      %s284 = smul.u32 60, %s17
      %s285 = smul.u32 60, %s17
      %p286 = scmp.lt.s32.totalorder %s285, 119
      %s287 = scalar_select %p286, %s285, 119
      %s288 = smul.addr %s287, 8
      %s289 = scalar_lea.vmem %s4, %s288
      %s290 = smul.u32 60, %s17
      %s291 = smul.u32 60, %s17
      %p292 = scmp.lt.s32.totalorder %s291, 119
      %s293 = scalar_select %p292, %s291, 119
      %s294 = smul.addr %s293, 8
      %s295 = scalar_lea.vmem %s5, %s294
      %s296 = smul.u32 60, %s17
      %s297 = smul.u32 60, %s17
      %p298 = scmp.lt.s32.totalorder %s297, 119
      %s299 = scalar_select %p298, %s297, 119
      %s300 = smul.addr %s299, 2
      %s301 = smul.addr %s300, 8
      %s302 = scalar_lea.vmem %s6, %s301
      %s303 = smul.u32 60, %s17
      %v305 = vld [vmem:[%s1] sm:$0xff]
      %v306 = vld [vmem:[%s1 + $0x8] sm:$0xff]
      %v307 = vld [vmem:[%s1 + $0x10] sm:$0xff]
      %v308 = vld [vmem:[%s1 + $0x18] sm:$0xff]
      %v309 = vld [vmem:[%s1 + $0x20] sm:$0xff]
      %v310 = vld [vmem:[%s1 + $0x28] sm:$0xff]
      %v311 = vld [vmem:[%s1 + $0x30] sm:$0xff]
      %v312 = vld [vmem:[%s1 + $0x38] sm:$0xff]
      %v313 = vld [vmem:[%s1 + $0x40] sm:$0xff]
      %v314 = vld [vmem:[%s1 + $0x48] sm:$0xff]
      %v315 = vld [vmem:[%s1 + $0x50] sm:$0xff]
      %v316 = vld [vmem:[%s1 + $0x58] sm:$0xff]
      %v317 = vld [vmem:[%s1 + $0x60] sm:$0xff]
      %v318 = vld [vmem:[%s1 + $0x68] sm:$0xff]
      %v319 = vld [vmem:[%s1 + $0x70] sm:$0xff]
      %v320 = vld [vmem:[%s1 + $0x78] sm:$0xff]
      %v321 = vld [vmem:[%s1 + $0x80] sm:$0xff]
      %v322 = vld [vmem:[%s1 + $0x88] sm:$0xff]
      %v323 = vld [vmem:[%s1 + $0x90] sm:$0xff]
      %v324 = vld [vmem:[%s1 + $0x98] sm:$0xff]
      %v325 = vld [vmem:[%s1 + $0xa0] sm:$0xff]
      %v326 = vld [vmem:[%s1 + $0xa8] sm:$0xff]
      %v327 = vld [vmem:[%s1 + $0xb0] sm:$0xff]
      %v328 = vld [vmem:[%s1 + $0xb8] sm:$0xff]
      %v329 = vld [vmem:[%s1 + $0xc0] sm:$0xff]
      %v330 = vld [vmem:[%s1 + $0xc8] sm:$0xff]
      %v331 = vld [vmem:[%s1 + $0xd0] sm:$0xff]
      %v332 = vld [vmem:[%s1 + $0xd8] sm:$0xff]
      %v333 = vld [vmem:[%s1 + $0xe0] sm:$0xff]
      %v334 = vld [vmem:[%s1 + $0xe8] sm:$0xff]
      %v335 = vld [vmem:[%s1 + $0xf0] sm:$0xff]
      %v336 = vld [vmem:[%s1 + $0xf8] sm:$0xff]
      %v337 = vld [vmem:[%s1 + $0x100] sm:$0xff]
      %v338 = vld [vmem:[%s1 + $0x108] sm:$0xff]
      %v339 = vld [vmem:[%s1 + $0x110] sm:$0xff]
      %v340 = vld [vmem:[%s1 + $0x118] sm:$0xff]
      %v341 = vld [vmem:[%s1 + $0x120] sm:$0xff]
      %v342 = vld [vmem:[%s1 + $0x128] sm:$0xff]
      %v343 = vld [vmem:[%s1 + $0x130] sm:$0xff]
      %v344 = vld [vmem:[%s1 + $0x138] sm:$0xff]
      %v345 = vld [vmem:[%s1 + $0x140] sm:$0xff]
      %v346 = vld [vmem:[%s1 + $0x148] sm:$0xff]
      %v347 = vld [vmem:[%s1 + $0x150] sm:$0xff]
      %v348 = vld [vmem:[%s1 + $0x158] sm:$0xff]
      %v349 = vld [vmem:[%s1 + $0x160] sm:$0xff]
      %v350 = vld [vmem:[%s1 + $0x168] sm:$0xff]
      %v351 = vld [vmem:[%s1 + $0x170] sm:$0xff]
      %v352 = vld [vmem:[%s1 + $0x178] sm:$0xff]
      %v353 = vld [vmem:[%s1 + $0x180] sm:$0xff]
      %v354 = vld [vmem:[%s1 + $0x188] sm:$0xff]
      %v355 = vld [vmem:[%s1 + $0x190] sm:$0xff]
      %v356 = vld [vmem:[%s1 + $0x198] sm:$0xff]
      %v357 = vld [vmem:[%s1 + $0x1a0] sm:$0xff]
      %v358 = vld [vmem:[%s1 + $0x1a8] sm:$0xff]
      %v359 = vld [vmem:[%s1 + $0x1b0] sm:$0xff]
      %v360 = vld [vmem:[%s1 + $0x1b8] sm:$0xff]
      %v361 = vld [vmem:[%s1 + $0x1c0] sm:$0xff]
      %v362 = vld [vmem:[%s1 + $0x1c8] sm:$0xff]
      %v363 = vld [vmem:[%s1 + $0x1d0] sm:$0xff]
      %v364 = vld [vmem:[%s1 + $0x1d8] sm:$0xff]
      %v365 = vld [vmem:[%s0] sm:$0xff]
      %v366 = vld [vmem:[%s0 + $0x8] sm:$0xff]
      %v367 = vld [vmem:[%s0 + $0x10] sm:$0xff]
      %v368 = vld [vmem:[%s0 + $0x18] sm:$0xff]
      %v369 = vld [vmem:[%s0 + $0x20] sm:$0xff]
      %v370 = vld [vmem:[%s0 + $0x28] sm:$0xff]
      %v371 = vld [vmem:[%s0 + $0x30] sm:$0xff]
      %v372 = vld [vmem:[%s0 + $0x38] sm:$0xff]
      %v373 = vld [vmem:[%s0 + $0x40] sm:$0xff]
      %v374 = vld [vmem:[%s0 + $0x48] sm:$0xff]
      %v375 = vld [vmem:[%s0 + $0x50] sm:$0xff]
      %v376 = vld [vmem:[%s0 + $0x58] sm:$0xff]
      %v377 = vld [vmem:[%s0 + $0x60] sm:$0xff]
      %v378 = vld [vmem:[%s0 + $0x68] sm:$0xff]
      %v379 = vld [vmem:[%s0 + $0x70] sm:$0xff]
      %v380 = vld [vmem:[%s0 + $0x78] sm:$0xff]
      %v381 = vld [vmem:[%s0 + $0x80] sm:$0xff]
      %v382 = vld [vmem:[%s0 + $0x88] sm:$0xff]
      %v383 = vld [vmem:[%s0 + $0x90] sm:$0xff]
      %v384 = vld [vmem:[%s0 + $0x98] sm:$0xff]
      %v385 = vld [vmem:[%s0 + $0xa0] sm:$0xff]
      %v386 = vld [vmem:[%s0 + $0xa8] sm:$0xff]
      %v387 = vld [vmem:[%s0 + $0xb0] sm:$0xff]
      %v388 = vld [vmem:[%s0 + $0xb8] sm:$0xff]
      %v389 = vld [vmem:[%s0 + $0xc0] sm:$0xff]
      %v390 = vld [vmem:[%s0 + $0xc8] sm:$0xff]
      %v391 = vld [vmem:[%s0 + $0xd0] sm:$0xff]
      %v392 = vld [vmem:[%s0 + $0xd8] sm:$0xff]
      %v393 = vld [vmem:[%s0 + $0xe0] sm:$0xff]
      %v394 = vld [vmem:[%s0 + $0xe8] sm:$0xff]
      %v395 = vld [vmem:[%s0 + $0xf0] sm:$0xff]
      %v396 = vld [vmem:[%s0 + $0xf8] sm:$0xff]
      %v397 = vld [vmem:[%s0 + $0x100] sm:$0xff]
      %v398 = vld [vmem:[%s0 + $0x108] sm:$0xff]
      %v399 = vld [vmem:[%s0 + $0x110] sm:$0xff]
      %v400 = vld [vmem:[%s0 + $0x118] sm:$0xff]
      %v401 = vld [vmem:[%s0 + $0x120] sm:$0xff]
      %v402 = vld [vmem:[%s0 + $0x128] sm:$0xff]
      %v403 = vld [vmem:[%s0 + $0x130] sm:$0xff]
      %v404 = vld [vmem:[%s0 + $0x138] sm:$0xff]
      %v405 = vld [vmem:[%s0 + $0x140] sm:$0xff]
      %v406 = vld [vmem:[%s0 + $0x148] sm:$0xff]
      %v407 = vld [vmem:[%s0 + $0x150] sm:$0xff]
      %v408 = vld [vmem:[%s0 + $0x158] sm:$0xff]
      %v409 = vld [vmem:[%s0 + $0x160] sm:$0xff]
      %v410 = vld [vmem:[%s0 + $0x168] sm:$0xff]
      %v411 = vld [vmem:[%s0 + $0x170] sm:$0xff]
      %v412 = vld [vmem:[%s0 + $0x178] sm:$0xff]
      %v413 = vld [vmem:[%s0 + $0x180] sm:$0xff]
      %v414 = vld [vmem:[%s0 + $0x188] sm:$0xff]
      %v415 = vld [vmem:[%s0 + $0x190] sm:$0xff]
      %v416 = vld [vmem:[%s0 + $0x198] sm:$0xff]
      %v417 = vld [vmem:[%s0 + $0x1a0] sm:$0xff]
      %v418 = vld [vmem:[%s0 + $0x1a8] sm:$0xff]
      %v419 = vld [vmem:[%s0 + $0x1b0] sm:$0xff]
      %v420 = vld [vmem:[%s0 + $0x1b8] sm:$0xff]
      %v421 = vld [vmem:[%s0 + $0x1c0] sm:$0xff]
      %v422 = vld [vmem:[%s0 + $0x1c8] sm:$0xff]
      %v423 = vld [vmem:[%s0 + $0x1d0] sm:$0xff]
      %v424 = vld [vmem:[%s0 + $0x1d8] sm:$0xff]
      %v425 = vld [vmem:[%s0 + $0x1e0] sm:$0xff]
      %v426 = vld [vmem:[%s0 + $0x1e8] sm:$0xff]
      %v427 = vld [vmem:[%s0 + $0x1f0] sm:$0xff]
      %v428 = vld [vmem:[%s0 + $0x1f8] sm:$0xff]
      %v429 = vld [vmem:[%s0 + $0x200] sm:$0xff]
      %v430 = vld [vmem:[%s0 + $0x208] sm:$0xff]
      %v431 = vld [vmem:[%s0 + $0x210] sm:$0xff]
      %v432 = vld [vmem:[%s0 + $0x218] sm:$0xff]
      %v433 = vld [vmem:[%s0 + $0x220] sm:$0xff]
      %v434 = vld [vmem:[%s0 + $0x228] sm:$0xff]
      %v435 = vld [vmem:[%s0 + $0x230] sm:$0xff]
      %v436 = vld [vmem:[%s0 + $0x238] sm:$0xff]
      %v437 = vld [vmem:[%s0 + $0x240] sm:$0xff]
      %v438 = vld [vmem:[%s0 + $0x248] sm:$0xff]
      %v439 = vld [vmem:[%s0 + $0x250] sm:$0xff]
      %v440 = vld [vmem:[%s0 + $0x258] sm:$0xff]
      %v441 = vld [vmem:[%s0 + $0x260] sm:$0xff]
      %v442 = vld [vmem:[%s0 + $0x268] sm:$0xff]
      %v443 = vld [vmem:[%s0 + $0x270] sm:$0xff]
      %v444 = vld [vmem:[%s0 + $0x278] sm:$0xff]
      %v445 = vld [vmem:[%s0 + $0x280] sm:$0xff]
      %v446 = vld [vmem:[%s0 + $0x288] sm:$0xff]
      %v447 = vld [vmem:[%s0 + $0x290] sm:$0xff]
      %v448 = vld [vmem:[%s0 + $0x298] sm:$0xff]
      %v509 = vunpack.c.l.b16 %v305
      %v510 = vunpack.c.h.b16 %v305
      %v511 = vunpack.c.l.b16 %v306
      %v512 = vunpack.c.h.b16 %v306
      %v513 = vunpack.c.l.b16 %v307
      %v514 = vunpack.c.h.b16 %v307
      %v515 = vunpack.c.l.b16 %v308
      %v516 = vunpack.c.h.b16 %v308
      %v517 = vunpack.c.l.b16 %v309
      %v518 = vunpack.c.h.b16 %v309
      %v519 = vunpack.c.l.b16 %v310
      %v520 = vunpack.c.h.b16 %v310
      %v521 = vunpack.c.l.b16 %v311
      %v522 = vunpack.c.h.b16 %v311
      %v523 = vunpack.c.l.b16 %v312
      %v524 = vunpack.c.h.b16 %v312
      %v525 = vunpack.c.l.b16 %v313
      %v526 = vunpack.c.h.b16 %v313
      %v527 = vunpack.c.l.b16 %v314
      %v528 = vunpack.c.h.b16 %v314
      %v529 = vunpack.c.l.b16 %v315
      %v530 = vunpack.c.h.b16 %v315
      %v531 = vunpack.c.l.b16 %v316
      %v532 = vunpack.c.h.b16 %v316
      %v533 = vunpack.c.l.b16 %v317
      %v534 = vunpack.c.h.b16 %v317
      %v535 = vunpack.c.l.b16 %v318
      %v536 = vunpack.c.h.b16 %v318
      %v537 = vunpack.c.l.b16 %v319
      %v538 = vunpack.c.h.b16 %v319
      %v539 = vunpack.c.l.b16 %v320
      %v540 = vunpack.c.h.b16 %v320
      %v541 = vunpack.c.l.b16 %v321
      %v542 = vunpack.c.h.b16 %v321
      %v543 = vunpack.c.l.b16 %v322
      %v544 = vunpack.c.h.b16 %v322
      %v545 = vunpack.c.l.b16 %v323
      %v546 = vunpack.c.h.b16 %v323
      %v547 = vunpack.c.l.b16 %v324
      %v548 = vunpack.c.h.b16 %v324
      %v549 = vunpack.c.l.b16 %v325
      %v550 = vunpack.c.h.b16 %v325
      %v551 = vunpack.c.l.b16 %v326
      %v552 = vunpack.c.h.b16 %v326
      %v553 = vunpack.c.l.b16 %v327
      %v554 = vunpack.c.h.b16 %v327
      %v555 = vunpack.c.l.b16 %v328
      %v556 = vunpack.c.h.b16 %v328
      %v557 = vunpack.c.l.b16 %v329
      %v558 = vunpack.c.h.b16 %v329
      %v559 = vunpack.c.l.b16 %v330
      %v560 = vunpack.c.h.b16 %v330
      %v561 = vunpack.c.l.b16 %v331
      %v562 = vunpack.c.h.b16 %v331
      %v563 = vunpack.c.l.b16 %v332
      %v564 = vunpack.c.h.b16 %v332
      %v565 = vunpack.c.l.b16 %v333
      %v566 = vunpack.c.h.b16 %v333
      %v567 = vunpack.c.l.b16 %v334
      %v568 = vunpack.c.h.b16 %v334
      %v569 = vunpack.c.l.b16 %v335
      %v570 = vunpack.c.h.b16 %v335
      %v571 = vunpack.c.l.b16 %v336
      %v572 = vunpack.c.h.b16 %v336
      %v573 = vunpack.c.l.b16 %v337
      %v574 = vunpack.c.h.b16 %v337
      %v575 = vunpack.c.l.b16 %v338
      %v576 = vunpack.c.h.b16 %v338
      %v577 = vunpack.c.l.b16 %v339
      %v578 = vunpack.c.h.b16 %v339
      %v579 = vunpack.c.l.b16 %v340
      %v580 = vunpack.c.h.b16 %v340
      %v581 = vunpack.c.l.b16 %v341
      %v582 = vunpack.c.h.b16 %v341
      %v583 = vunpack.c.l.b16 %v342
      %v584 = vunpack.c.h.b16 %v342
      %v585 = vunpack.c.l.b16 %v343
      %v586 = vunpack.c.h.b16 %v343
      %v587 = vunpack.c.l.b16 %v344
      %v588 = vunpack.c.h.b16 %v344
      %v589 = vunpack.c.l.b16 %v345
      %v590 = vunpack.c.h.b16 %v345
      %v591 = vunpack.c.l.b16 %v346
      %v592 = vunpack.c.h.b16 %v346
      %v593 = vunpack.c.l.b16 %v347
      %v594 = vunpack.c.h.b16 %v347
      %v595 = vunpack.c.l.b16 %v348
      %v596 = vunpack.c.h.b16 %v348
      %v597 = vunpack.c.l.b16 %v349
      %v598 = vunpack.c.h.b16 %v349
      %v599 = vunpack.c.l.b16 %v350
      %v600 = vunpack.c.h.b16 %v350
      %v601 = vunpack.c.l.b16 %v351
      %v602 = vunpack.c.h.b16 %v351
      %v603 = vunpack.c.l.b16 %v352
      %v604 = vunpack.c.h.b16 %v352
      %v605 = vunpack.c.l.b16 %v353
      %v606 = vunpack.c.h.b16 %v353
      %v607 = vunpack.c.l.b16 %v354
      %v608 = vunpack.c.h.b16 %v354
      %v609 = vunpack.c.l.b16 %v355
      %v610 = vunpack.c.h.b16 %v355
      %v611 = vunpack.c.l.b16 %v356
      %v612 = vunpack.c.h.b16 %v356
      %v613 = vunpack.c.l.b16 %v357
      %v614 = vunpack.c.h.b16 %v357
      %v615 = vunpack.c.l.b16 %v358
      %v616 = vunpack.c.h.b16 %v358
      %v617 = vunpack.c.l.b16 %v359
      %v618 = vunpack.c.h.b16 %v359
      %v619 = vunpack.c.l.b16 %v360
      %v620 = vunpack.c.h.b16 %v360
      %v621 = vunpack.c.l.b16 %v361
      %v622 = vunpack.c.h.b16 %v361
      %v623 = vunpack.c.l.b16 %v362
      %v624 = vunpack.c.h.b16 %v362
      %v625 = vunpack.c.l.b16 %v363
      %v626 = vunpack.c.h.b16 %v363
      %v627 = vunpack.c.l.b16 %v364
      %v628 = vunpack.c.h.b16 %v364
      %v629 = vpack.c.b16 %v515, %v509
      %v630 = vpack.c.b16 %v516, %v510
      %v631 = vpack.c.b16 %v517, %v511
      %v632 = vpack.c.b16 %v518, %v512
      %v633 = vpack.c.b16 %v519, %v513
      %v634 = vpack.c.b16 %v520, %v514
      %v635 = vpack.c.b16 %v527, %v521
      %v636 = vpack.c.b16 %v528, %v522
      %v637 = vpack.c.b16 %v529, %v523
      %v638 = vpack.c.b16 %v530, %v524
      %v639 = vpack.c.b16 %v531, %v525
      %v640 = vpack.c.b16 %v532, %v526
      %v641 = vpack.c.b16 %v539, %v533
      %v642 = vpack.c.b16 %v540, %v534
      %v643 = vpack.c.b16 %v541, %v535
      %v644 = vpack.c.b16 %v542, %v536
      %v645 = vpack.c.b16 %v543, %v537
      %v646 = vpack.c.b16 %v544, %v538
      %v647 = vpack.c.b16 %v551, %v545
      %v648 = vpack.c.b16 %v552, %v546
      %v649 = vpack.c.b16 %v553, %v547
      %v650 = vpack.c.b16 %v554, %v548
      %v651 = vpack.c.b16 %v555, %v549
      %v652 = vpack.c.b16 %v556, %v550
      %v653 = vpack.c.b16 %v563, %v557
      %v654 = vpack.c.b16 %v564, %v558
      %v655 = vpack.c.b16 %v565, %v559
      %v656 = vpack.c.b16 %v566, %v560
      %v657 = vpack.c.b16 %v567, %v561
      %v658 = vpack.c.b16 %v568, %v562
      %v659 = vpack.c.b16 %v575, %v569
      %v660 = vpack.c.b16 %v576, %v570
      %v661 = vpack.c.b16 %v577, %v571
      %v662 = vpack.c.b16 %v578, %v572
      %v663 = vpack.c.b16 %v579, %v573
      %v664 = vpack.c.b16 %v580, %v574
      %v665 = vpack.c.b16 %v587, %v581
      %v666 = vpack.c.b16 %v588, %v582
      %v667 = vpack.c.b16 %v589, %v583
      %v668 = vpack.c.b16 %v590, %v584
      %v669 = vpack.c.b16 %v591, %v585
      %v670 = vpack.c.b16 %v592, %v586
      %v671 = vpack.c.b16 %v599, %v593
      %v672 = vpack.c.b16 %v600, %v594
      %v673 = vpack.c.b16 %v601, %v595
      %v674 = vpack.c.b16 %v602, %v596
      %v675 = vpack.c.b16 %v603, %v597
      %v676 = vpack.c.b16 %v604, %v598
      %v677 = vpack.c.b16 %v611, %v605
      %v678 = vpack.c.b16 %v612, %v606
      %v679 = vpack.c.b16 %v613, %v607
      %v680 = vpack.c.b16 %v614, %v608
      %v681 = vpack.c.b16 %v615, %v609
      %v682 = vpack.c.b16 %v616, %v610
      %v683 = vpack.c.b16 %v623, %v617
      %v684 = vpack.c.b16 %v624, %v618
      %v685 = vpack.c.b16 %v625, %v619
      %v686 = vpack.c.b16 %v626, %v620
      %v687 = vpack.c.b16 %v627, %v621
      %v688 = vpack.c.b16 %v628, %v622
      %v823 = vunpack.c.l.b16 %v365
      %v824 = vunpack.c.h.b16 %v365
      %v825 = vunpack.c.l.b16 %v366
      %v826 = vunpack.c.h.b16 %v366
      %v827 = vunpack.c.l.b16 %v367
      %v828 = vunpack.c.h.b16 %v367
      %v829 = vunpack.c.l.b16 %v368
      %v830 = vunpack.c.h.b16 %v368
      %v831 = vunpack.c.l.b16 %v369
      %v832 = vunpack.c.h.b16 %v369
      %v833 = vunpack.c.l.b16 %v370
      %v834 = vunpack.c.h.b16 %v370
      %v835 = vunpack.c.l.b16 %v371
      %v836 = vunpack.c.h.b16 %v371
      %v837 = vunpack.c.l.b16 %v372
      %v838 = vunpack.c.h.b16 %v372
      %v839 = vunpack.c.l.b16 %v373
      %v840 = vunpack.c.h.b16 %v373
      %v841 = vunpack.c.l.b16 %v374
      %v842 = vunpack.c.h.b16 %v374
      %v843 = vunpack.c.l.b16 %v375
      %v844 = vunpack.c.h.b16 %v375
      %v845 = vunpack.c.l.b16 %v376
      %v846 = vunpack.c.h.b16 %v376
      %v847 = vunpack.c.l.b16 %v377
      %v848 = vunpack.c.h.b16 %v377
      %v849 = vunpack.c.l.b16 %v378
      %v850 = vunpack.c.h.b16 %v378
      %v851 = vunpack.c.l.b16 %v379
      %v852 = vunpack.c.h.b16 %v379
      %v853 = vunpack.c.l.b16 %v380
      %v854 = vunpack.c.h.b16 %v380
      %v855 = vunpack.c.l.b16 %v381
      %v856 = vunpack.c.h.b16 %v381
      %v857 = vunpack.c.l.b16 %v382
      %v858 = vunpack.c.h.b16 %v382
      %v859 = vunpack.c.l.b16 %v383
      %v860 = vunpack.c.h.b16 %v383
      %v861 = vunpack.c.l.b16 %v384
      %v862 = vunpack.c.h.b16 %v384
      %v863 = vunpack.c.l.b16 %v385
      %v864 = vunpack.c.h.b16 %v385
      %v865 = vunpack.c.l.b16 %v386
      %v866 = vunpack.c.h.b16 %v386
      %v867 = vunpack.c.l.b16 %v387
      %v868 = vunpack.c.h.b16 %v387
      %v869 = vunpack.c.l.b16 %v388
      %v870 = vunpack.c.h.b16 %v388
      %v871 = vunpack.c.l.b16 %v389
      %v872 = vunpack.c.h.b16 %v389
      %v873 = vunpack.c.l.b16 %v390
      %v874 = vunpack.c.h.b16 %v390
      %v875 = vunpack.c.l.b16 %v391
      %v876 = vunpack.c.h.b16 %v391
      %v877 = vunpack.c.l.b16 %v392
      %v878 = vunpack.c.h.b16 %v392
      %v879 = vunpack.c.l.b16 %v393
      %v880 = vunpack.c.h.b16 %v393
      %v881 = vunpack.c.l.b16 %v394
      %v882 = vunpack.c.h.b16 %v394
      %v883 = vunpack.c.l.b16 %v395
      %v884 = vunpack.c.h.b16 %v395
      %v885 = vunpack.c.l.b16 %v396
      %v886 = vunpack.c.h.b16 %v396
      %v887 = vunpack.c.l.b16 %v397
      %v888 = vunpack.c.h.b16 %v397
      %v889 = vunpack.c.l.b16 %v398
      %v890 = vunpack.c.h.b16 %v398
      %v891 = vunpack.c.l.b16 %v399
      %v892 = vunpack.c.h.b16 %v399
      %v893 = vunpack.c.l.b16 %v400
      %v894 = vunpack.c.h.b16 %v400
      %v895 = vunpack.c.l.b16 %v401
      %v896 = vunpack.c.h.b16 %v401
      %v897 = vunpack.c.l.b16 %v402
      %v898 = vunpack.c.h.b16 %v402
      %v899 = vunpack.c.l.b16 %v403
      %v900 = vunpack.c.h.b16 %v403
      %v901 = vunpack.c.l.b16 %v404
      %v902 = vunpack.c.h.b16 %v404
      %v903 = vunpack.c.l.b16 %v405
      %v904 = vunpack.c.h.b16 %v405
      %v905 = vunpack.c.l.b16 %v406
      %v906 = vunpack.c.h.b16 %v406
      %v907 = vunpack.c.l.b16 %v407
      %v908 = vunpack.c.h.b16 %v407
      %v909 = vunpack.c.l.b16 %v408
      %v910 = vunpack.c.h.b16 %v408
      %v911 = vunpack.c.l.b16 %v409
      %v912 = vunpack.c.h.b16 %v409
      %v913 = vunpack.c.l.b16 %v410
      %v914 = vunpack.c.h.b16 %v410
      %v915 = vunpack.c.l.b16 %v411
      %v916 = vunpack.c.h.b16 %v411
      %v917 = vunpack.c.l.b16 %v412
      %v918 = vunpack.c.h.b16 %v412
      %v919 = vunpack.c.l.b16 %v413
      %v920 = vunpack.c.h.b16 %v413
      %v921 = vunpack.c.l.b16 %v414
      %v922 = vunpack.c.h.b16 %v414
      %v923 = vunpack.c.l.b16 %v415
      %v924 = vunpack.c.h.b16 %v415
      %v925 = vunpack.c.l.b16 %v416
      %v926 = vunpack.c.h.b16 %v416
      %v927 = vunpack.c.l.b16 %v417
      %v928 = vunpack.c.h.b16 %v417
      %v929 = vunpack.c.l.b16 %v418
      %v930 = vunpack.c.h.b16 %v418
      %v931 = vunpack.c.l.b16 %v419
      %v932 = vunpack.c.h.b16 %v419
      %v933 = vunpack.c.l.b16 %v420
      %v934 = vunpack.c.h.b16 %v420
      %v935 = vunpack.c.l.b16 %v421
      %v936 = vunpack.c.h.b16 %v421
      %v937 = vunpack.c.l.b16 %v422
      %v938 = vunpack.c.h.b16 %v422
      %v939 = vunpack.c.l.b16 %v423
      %v940 = vunpack.c.h.b16 %v423
      %v941 = vunpack.c.l.b16 %v424
      %v942 = vunpack.c.h.b16 %v424
      %v943 = vunpack.c.l.b16 %v425
      %v944 = vunpack.c.h.b16 %v425
      %v945 = vunpack.c.l.b16 %v426
      %v946 = vunpack.c.h.b16 %v426
      %v947 = vunpack.c.l.b16 %v427
      %v948 = vunpack.c.h.b16 %v427
      %v949 = vunpack.c.l.b16 %v428
      %v950 = vunpack.c.h.b16 %v428
      %v951 = vunpack.c.l.b16 %v429
      %v952 = vunpack.c.h.b16 %v429
      %v953 = vunpack.c.l.b16 %v430
      %v954 = vunpack.c.h.b16 %v430
      %v955 = vunpack.c.l.b16 %v431
      %v956 = vunpack.c.h.b16 %v431
      %v957 = vunpack.c.l.b16 %v432
      %v958 = vunpack.c.h.b16 %v432
      %v959 = vunpack.c.l.b16 %v433
      %v960 = vunpack.c.h.b16 %v433
      %v961 = vunpack.c.l.b16 %v434
      %v962 = vunpack.c.h.b16 %v434
      %v963 = vunpack.c.l.b16 %v435
      %v964 = vunpack.c.h.b16 %v435
      %v965 = vunpack.c.l.b16 %v436
      %v966 = vunpack.c.h.b16 %v436
      %v967 = vunpack.c.l.b16 %v437
      %v968 = vunpack.c.h.b16 %v437
      %v969 = vunpack.c.l.b16 %v438
      %v970 = vunpack.c.h.b16 %v438
      %v971 = vunpack.c.l.b16 %v439
      %v972 = vunpack.c.h.b16 %v439
      %v973 = vunpack.c.l.b16 %v440
      %v974 = vunpack.c.h.b16 %v440
      %v975 = vunpack.c.l.b16 %v441
      %v976 = vunpack.c.h.b16 %v441
      %v977 = vunpack.c.l.b16 %v442
      %v978 = vunpack.c.h.b16 %v442
      %v979 = vunpack.c.l.b16 %v443
      %v980 = vunpack.c.h.b16 %v443
      %v981 = vunpack.c.l.b16 %v444
      %v982 = vunpack.c.h.b16 %v444
      %v983 = vunpack.c.l.b16 %v445
      %v984 = vunpack.c.h.b16 %v445
      %v985 = vunpack.c.l.b16 %v446
      %v986 = vunpack.c.h.b16 %v446
      %v987 = vunpack.c.l.b16 %v447
      %v988 = vunpack.c.h.b16 %v447
      %v989 = vunpack.c.l.b16 %v448
      %v990 = vunpack.c.h.b16 %v448
      %v991 = vpack.c.b16 %v825, %v823
      %v992 = vpack.c.b16 %v826, %v824
      %v993 = vpack.c.b16 %v829, %v827
      %v994 = vpack.c.b16 %v830, %v828
      %v995 = vpack.c.b16 %v833, %v831
      %v996 = vpack.c.b16 %v834, %v832
      %v997 = vpack.c.b16 %v837, %v835
      %v998 = vpack.c.b16 %v838, %v836
      %v999 = vpack.c.b16 %v841, %v839
      %v1000 = vpack.c.b16 %v842, %v840
      %v1001 = vpack.c.b16 %v845, %v843
      %v1002 = vpack.c.b16 %v846, %v844
      %v1003 = vpack.c.b16 %v849, %v847
      %v1004 = vpack.c.b16 %v850, %v848
      %v1005 = vpack.c.b16 %v853, %v851
      %v1006 = vpack.c.b16 %v854, %v852
      %v1007 = vpack.c.b16 %v857, %v855
      %v1008 = vpack.c.b16 %v858, %v856
      %v1009 = vpack.c.b16 %v861, %v859
      %v1010 = vpack.c.b16 %v862, %v860
      %v1011 = vpack.c.b16 %v865, %v863
      %v1012 = vpack.c.b16 %v866, %v864
      %v1013 = vpack.c.b16 %v869, %v867
      %v1014 = vpack.c.b16 %v870, %v868
      %v1015 = vpack.c.b16 %v873, %v871
      %v1016 = vpack.c.b16 %v874, %v872
      %v1017 = vpack.c.b16 %v877, %v875
      %v1018 = vpack.c.b16 %v878, %v876
      %v1019 = vpack.c.b16 %v881, %v879
      %v1020 = vpack.c.b16 %v882, %v880
      %v1021 = vpack.c.b16 %v885, %v883
      %v1022 = vpack.c.b16 %v886, %v884
      %v1023 = vpack.c.b16 %v889, %v887
      %v1024 = vpack.c.b16 %v890, %v888
      %v1025 = vpack.c.b16 %v893, %v891
      %v1026 = vpack.c.b16 %v894, %v892
      %v1027 = vpack.c.b16 %v897, %v895
      %v1028 = vpack.c.b16 %v898, %v896
      %v1029 = vpack.c.b16 %v901, %v899
      %v1030 = vpack.c.b16 %v902, %v900
      %v1031 = vpack.c.b16 %v905, %v903
      %v1032 = vpack.c.b16 %v906, %v904
      %v1033 = vpack.c.b16 %v909, %v907
      %v1034 = vpack.c.b16 %v910, %v908
      %v1035 = vpack.c.b16 %v913, %v911
      %v1036 = vpack.c.b16 %v914, %v912
      %v1037 = vpack.c.b16 %v917, %v915
      %v1038 = vpack.c.b16 %v918, %v916
      %v1039 = vpack.c.b16 %v921, %v919
      %v1040 = vpack.c.b16 %v922, %v920
      %v1041 = vpack.c.b16 %v925, %v923
      %v1042 = vpack.c.b16 %v926, %v924
      %v1043 = vpack.c.b16 %v929, %v927
      %v1044 = vpack.c.b16 %v930, %v928
      %v1045 = vpack.c.b16 %v933, %v931
      %v1046 = vpack.c.b16 %v934, %v932
      %v1047 = vpack.c.b16 %v937, %v935
      %v1048 = vpack.c.b16 %v938, %v936
      %v1049 = vpack.c.b16 %v941, %v939
      %v1050 = vpack.c.b16 %v942, %v940
      %v1051 = vpack.c.b16 %v945, %v943
      %v1052 = vpack.c.b16 %v946, %v944
      %v1053 = vpack.c.b16 %v949, %v947
      %v1054 = vpack.c.b16 %v950, %v948
      %v1055 = vpack.c.b16 %v953, %v951
      %v1056 = vpack.c.b16 %v954, %v952
      %v1057 = vpack.c.b16 %v957, %v955
      %v1058 = vpack.c.b16 %v958, %v956
      %v1059 = vpack.c.b16 %v961, %v959
      %v1060 = vpack.c.b16 %v962, %v960
      %v1061 = vpack.c.b16 %v965, %v963
      %v1062 = vpack.c.b16 %v966, %v964
      %v1063 = vpack.c.b16 %v969, %v967
      %v1064 = vpack.c.b16 %v970, %v968
      %v1065 = vpack.c.b16 %v973, %v971
      %v1066 = vpack.c.b16 %v974, %v972
      %v1067 = vpack.c.b16 %v977, %v975
      %v1068 = vpack.c.b16 %v978, %v976
      %v1069 = vpack.c.b16 %v981, %v979
      %v1070 = vpack.c.b16 %v982, %v980
      %v1071 = vpack.c.b16 %v985, %v983
      %v1072 = vpack.c.b16 %v986, %v984
      %v1073 = vpack.c.b16 %v989, %v987
      %v1074 = vpack.c.b16 %v990, %v988
      %vm1159 = vcmask 261120
      %v1161 = vsel %vm1159, %v634, 0
      %v1164 = vsel %vm1159, %v640, 0
      %v1167 = vsel %vm1159, %v646, 0
      %v1170 = vsel %vm1159, %v652, 0
      %v1173 = vsel %vm1159, %v658, 0
      %v1176 = vsel %vm1159, %v664, 0
      %v1179 = vsel %vm1159, %v670, 0
      %v1182 = vsel %vm1159, %v676, 0
      %v1185 = vsel %vm1159, %v682, 0
      %v1188 = vsel %vm1159, %v688, 0
      %1190 = vmatprep.subr.bf16.mxu0 %v1006
      %1191 = vmatpush1.bf16.msra.mxu0 %v1005
      %1192 = vmatprep.subr.bf16.mxu0 %v1004
      %1193 = vmatpush1.bf16.msra.mxu0 %v1003
      %1194 = vmatprep.subr.bf16.mxu0 %v1002
      %1195 = vmatpush1.bf16.msra.mxu0 %v1001
      %1196 = vmatprep.subr.bf16.mxu0 %v1000
      %1197 = vmatpush1.bf16.msra.mxu0 %v999
      %1198 = vmatprep.subr.bf16.mxu0 %v998
      %1199 = vmatpush1.bf16.msra.mxu0 %v997
      %1200 = vmatprep.subr.bf16.mxu0 %v996
      %1201 = vmatpush1.bf16.msra.mxu0 %v995
      %1202 = vmatprep.subr.bf16.mxu0 %v994
      %1203 = vmatpush1.bf16.msra.mxu0 %v993
      %1204 = vmatprep.subr.bf16.mxu0 %v992
      %1205 = vmatpush1.bf16.msra.mxu0 %v991
      %1206 = vmatprep.subr.bf16.mxu0 %v1022
      %1207 = vmatpush2.bf16.msra.mxu0 %v1021
      %1208 = vmatprep.subr.bf16.mxu0 %v1020
      %1209 = vmatpush2.bf16.msra.mxu0 %v1019
      %1210 = vmatprep.subr.bf16.mxu0 %v1018
      %1211 = vmatpush2.bf16.msra.mxu0 %v1017
      %1212 = vmatprep.subr.bf16.mxu0 %v1016
      %1213 = vmatpush2.bf16.msra.mxu0 %v1015
      %1214 = vmatprep.subr.bf16.mxu0 %v1014
      %1215 = vmatpush2.bf16.msra.mxu0 %v1013
      %1216 = vmatprep.subr.bf16.mxu0 %v1012
      %1217 = vmatpush2.bf16.msra.mxu0 %v1011
      %1218 = vmatprep.subr.bf16.mxu0 %v1010
      %1219 = vmatpush2.bf16.msra.mxu0 %v1009
      %1220 = vmatprep.subr.bf16.mxu0 %v1008
      %1221 = vmatpush2.bf16.msra.mxu0 %v1007
      %1222 = vmatprep.mubr.bf16.mxu0 %v630
      %1223 = vmatmul.mubr.bf16.gmra.mxu0 %v629
      %v1224 = vpop.f32.mrf.mxu0
      %v1225 = vadd.f32 0.0, %v1224
      %v1226 = vpop.f32.mrf.mxu0
      %v1227 = vadd.f32 0.0, %v1226
      %v1228 = vpop.f32.mrf.mxu0
      %v1229 = vadd.f32 0.0, %v1228
      %v1230 = vpop.f32.mrf.mxu0
      %v1231 = vadd.f32 0.0, %v1230
      %1232 = vmatprep.mubr.bf16.mxu0 %v636
      %1233 = vmatmul.mubr.bf16.gmra.mxu0 %v635
      %v1234 = vpop.f32.mrf.mxu0
      %v1235 = vadd.f32 0.0, %v1234
      %v1236 = vpop.f32.mrf.mxu0
      %v1237 = vadd.f32 0.0, %v1236
      %v1238 = vpop.f32.mrf.mxu0
      %v1239 = vadd.f32 0.0, %v1238
      %v1240 = vpop.f32.mrf.mxu0
      %v1241 = vadd.f32 0.0, %v1240
      %1242 = vmatprep.mubr.bf16.mxu0 %v642
      %1243 = vmatmul.mubr.bf16.gmra.mxu0 %v641
      %v1244 = vpop.f32.mrf.mxu0
      %v1245 = vadd.f32 0.0, %v1244
      %v1246 = vpop.f32.mrf.mxu0
      %v1247 = vadd.f32 0.0, %v1246
      %v1248 = vpop.f32.mrf.mxu0
      %v1249 = vadd.f32 0.0, %v1248
      %v1250 = vpop.f32.mrf.mxu0
      %v1251 = vadd.f32 0.0, %v1250
      %1252 = vmatprep.mubr.bf16.mxu0 %v648
      %1253 = vmatmul.mubr.bf16.gmra.mxu0 %v647
      %v1254 = vpop.f32.mrf.mxu0
      %v1255 = vadd.f32 0.0, %v1254
      %v1256 = vpop.f32.mrf.mxu0
      %v1257 = vadd.f32 0.0, %v1256
      %v1258 = vpop.f32.mrf.mxu0
      %v1259 = vadd.f32 0.0, %v1258
      %v1260 = vpop.f32.mrf.mxu0
      %v1261 = vadd.f32 0.0, %v1260
      %1262 = vmatprep.mubr.bf16.mxu0 %v654
      %1263 = vmatmul.mubr.bf16.gmra.mxu0 %v653
      %v1264 = vpop.f32.mrf.mxu0
      %v1265 = vadd.f32 0.0, %v1264
      %v1266 = vpop.f32.mrf.mxu0
      %v1267 = vadd.f32 0.0, %v1266
      %v1268 = vpop.f32.mrf.mxu0
      %v1269 = vadd.f32 0.0, %v1268
      %v1270 = vpop.f32.mrf.mxu0
      %v1271 = vadd.f32 0.0, %v1270
      %1272 = vmatprep.mubr.bf16.mxu0 %v660
      %1273 = vmatmul.mubr.bf16.gmra.mxu0 %v659
      %v1274 = vpop.f32.mrf.mxu0
      %v1275 = vadd.f32 0.0, %v1274
      %v1276 = vpop.f32.mrf.mxu0
      %v1277 = vadd.f32 0.0, %v1276
      %v1278 = vpop.f32.mrf.mxu0
      %v1279 = vadd.f32 0.0, %v1278
      %v1280 = vpop.f32.mrf.mxu0
      %v1281 = vadd.f32 0.0, %v1280
      %1282 = vmatprep.mubr.bf16.mxu0 %v666
      %1283 = vmatmul.mubr.bf16.gmra.mxu0 %v665
      %v1284 = vpop.f32.mrf.mxu0
      %v1285 = vadd.f32 0.0, %v1284
      %v1286 = vpop.f32.mrf.mxu0
      %v1287 = vadd.f32 0.0, %v1286
      %v1288 = vpop.f32.mrf.mxu0
      %v1289 = vadd.f32 0.0, %v1288
      %v1290 = vpop.f32.mrf.mxu0
      %v1291 = vadd.f32 0.0, %v1290
      %1292 = vmatprep.mubr.bf16.mxu0 %v672
      %1293 = vmatmul.mubr.bf16.gmra.mxu0 %v671
      %v1294 = vpop.f32.mrf.mxu0
      %v1295 = vadd.f32 0.0, %v1294
      %v1296 = vpop.f32.mrf.mxu0
      %v1297 = vadd.f32 0.0, %v1296
      %v1298 = vpop.f32.mrf.mxu0
      %v1299 = vadd.f32 0.0, %v1298
      %v1300 = vpop.f32.mrf.mxu0
      %v1301 = vadd.f32 0.0, %v1300
      %1302 = vmatprep.mubr.bf16.mxu0 %v678
      %1303 = vmatmul.mubr.bf16.gmra.mxu0 %v677
      %v1304 = vpop.f32.mrf.mxu0
      %v1305 = vadd.f32 0.0, %v1304
      %v1306 = vpop.f32.mrf.mxu0
      %v1307 = vadd.f32 0.0, %v1306
      %v1308 = vpop.f32.mrf.mxu0
      %v1309 = vadd.f32 0.0, %v1308
      %v1310 = vpop.f32.mrf.mxu0
      %v1311 = vadd.f32 0.0, %v1310
      %1312 = vmatprep.mubr.bf16.mxu0 %v684
      %1313 = vmatmul.mubr.bf16.gmra.mxu0 %v683
      %v1314 = vpop.f32.mrf.mxu0
      %v1315 = vadd.f32 0.0, %v1314
      %v1316 = vpop.f32.mrf.mxu0
      %v1317 = vadd.f32 0.0, %v1316
      %v1318 = vpop.f32.mrf.mxu0
      %v1319 = vadd.f32 0.0, %v1318
      %v1320 = vpop.f32.mrf.mxu0
      %v1321 = vadd.f32 0.0, %v1320
      %1322 = vdwg.mxu0
      %1323 = vmatprep.subr.bf16.mxu0 %v1038
      %1324 = vmatpush1.bf16.msra.mxu0 %v1037
      %1325 = vmatprep.subr.bf16.mxu0 %v1036
      %1326 = vmatpush1.bf16.msra.mxu0 %v1035
      %1327 = vmatprep.subr.bf16.mxu0 %v1034
      %1328 = vmatpush1.bf16.msra.mxu0 %v1033
      %1329 = vmatprep.subr.bf16.mxu0 %v1032
      %1330 = vmatpush1.bf16.msra.mxu0 %v1031
      %1331 = vmatprep.subr.bf16.mxu0 %v1030
      %1332 = vmatpush1.bf16.msra.mxu0 %v1029
      %1333 = vmatprep.subr.bf16.mxu0 %v1028
      %1334 = vmatpush1.bf16.msra.mxu0 %v1027
      %1335 = vmatprep.subr.bf16.mxu0 %v1026
      %1336 = vmatpush1.bf16.msra.mxu0 %v1025
      %1337 = vmatprep.subr.bf16.mxu0 %v1024
      %1338 = vmatpush1.bf16.msra.mxu0 %v1023
      %1339 = vmatprep.subr.bf16.mxu0 %v1054
      %1340 = vmatpush2.bf16.msra.mxu0 %v1053
      %1341 = vmatprep.subr.bf16.mxu0 %v1052
      %1342 = vmatpush2.bf16.msra.mxu0 %v1051
      %1343 = vmatprep.subr.bf16.mxu0 %v1050
      %1344 = vmatpush2.bf16.msra.mxu0 %v1049
      %1345 = vmatprep.subr.bf16.mxu0 %v1048
      %1346 = vmatpush2.bf16.msra.mxu0 %v1047
      %1347 = vmatprep.subr.bf16.mxu0 %v1046
      %1348 = vmatpush2.bf16.msra.mxu0 %v1045
      %1349 = vmatprep.subr.bf16.mxu0 %v1044
      %1350 = vmatpush2.bf16.msra.mxu0 %v1043
      %1351 = vmatprep.subr.bf16.mxu0 %v1042
      %1352 = vmatpush2.bf16.msra.mxu0 %v1041
      %1353 = vmatprep.subr.bf16.mxu0 %v1040
      %1354 = vmatpush2.bf16.msra.mxu0 %v1039
      %1355 = vmatprep.mubr.bf16.mxu0 %v632
      %1356 = vmatmul.mubr.bf16.gmra.mxu0 %v631
      %v1357 = vpop.f32.mrf.mxu0
      %v1358 = vadd.f32 %v1225, %v1357
      %v1359 = vpop.f32.mrf.mxu0
      %v1360 = vadd.f32 %v1227, %v1359
      %v1361 = vpop.f32.mrf.mxu0
      %v1362 = vadd.f32 %v1229, %v1361
      %v1363 = vpop.f32.mrf.mxu0
      %v1364 = vadd.f32 %v1231, %v1363
      %1365 = vmatprep.mubr.bf16.mxu0 %v638
      %1366 = vmatmul.mubr.bf16.gmra.mxu0 %v637
      %v1367 = vpop.f32.mrf.mxu0
      %v1368 = vadd.f32 %v1235, %v1367
      %v1369 = vpop.f32.mrf.mxu0
      %v1370 = vadd.f32 %v1237, %v1369
      %v1371 = vpop.f32.mrf.mxu0
      %v1372 = vadd.f32 %v1239, %v1371
      %v1373 = vpop.f32.mrf.mxu0
      %v1374 = vadd.f32 %v1241, %v1373
      %1375 = vmatprep.mubr.bf16.mxu0 %v644
      %1376 = vmatmul.mubr.bf16.gmra.mxu0 %v643
      %v1377 = vpop.f32.mrf.mxu0
      %v1378 = vadd.f32 %v1245, %v1377
      %v1379 = vpop.f32.mrf.mxu0
      %v1380 = vadd.f32 %v1247, %v1379
      %v1381 = vpop.f32.mrf.mxu0
      %v1382 = vadd.f32 %v1249, %v1381
      %v1383 = vpop.f32.mrf.mxu0
      %v1384 = vadd.f32 %v1251, %v1383
      %1385 = vmatprep.mubr.bf16.mxu0 %v650
      %1386 = vmatmul.mubr.bf16.gmra.mxu0 %v649
      %v1387 = vpop.f32.mrf.mxu0
      %v1388 = vadd.f32 %v1255, %v1387
      %v1389 = vpop.f32.mrf.mxu0
      %v1390 = vadd.f32 %v1257, %v1389
      %v1391 = vpop.f32.mrf.mxu0
      %v1392 = vadd.f32 %v1259, %v1391
      %v1393 = vpop.f32.mrf.mxu0
      %v1394 = vadd.f32 %v1261, %v1393
      %1395 = vmatprep.mubr.bf16.mxu0 %v656
      %1396 = vmatmul.mubr.bf16.gmra.mxu0 %v655
      %v1397 = vpop.f32.mrf.mxu0
      %v1398 = vadd.f32 %v1265, %v1397
      %v1399 = vpop.f32.mrf.mxu0
      %v1400 = vadd.f32 %v1267, %v1399
      %v1401 = vpop.f32.mrf.mxu0
      %v1402 = vadd.f32 %v1269, %v1401
      %v1403 = vpop.f32.mrf.mxu0
      %v1404 = vadd.f32 %v1271, %v1403
      %1405 = vmatprep.mubr.bf16.mxu0 %v662
      %1406 = vmatmul.mubr.bf16.gmra.mxu0 %v661
      %v1407 = vpop.f32.mrf.mxu0
      %v1408 = vadd.f32 %v1275, %v1407
      %v1409 = vpop.f32.mrf.mxu0
      %v1410 = vadd.f32 %v1277, %v1409
      %v1411 = vpop.f32.mrf.mxu0
      %v1412 = vadd.f32 %v1279, %v1411
      %v1413 = vpop.f32.mrf.mxu0
      %v1414 = vadd.f32 %v1281, %v1413
      %1415 = vmatprep.mubr.bf16.mxu0 %v668
      %1416 = vmatmul.mubr.bf16.gmra.mxu0 %v667
      %v1417 = vpop.f32.mrf.mxu0
      %v1418 = vadd.f32 %v1285, %v1417
      %v1419 = vpop.f32.mrf.mxu0
      %v1420 = vadd.f32 %v1287, %v1419
      %v1421 = vpop.f32.mrf.mxu0
      %v1422 = vadd.f32 %v1289, %v1421
      %v1423 = vpop.f32.mrf.mxu0
      %v1424 = vadd.f32 %v1291, %v1423
      %1425 = vmatprep.mubr.bf16.mxu0 %v674
      %1426 = vmatmul.mubr.bf16.gmra.mxu0 %v673
      %v1427 = vpop.f32.mrf.mxu0
      %v1428 = vadd.f32 %v1295, %v1427
      %v1429 = vpop.f32.mrf.mxu0
      %v1430 = vadd.f32 %v1297, %v1429
      %v1431 = vpop.f32.mrf.mxu0
      %v1432 = vadd.f32 %v1299, %v1431
      %v1433 = vpop.f32.mrf.mxu0
      %v1434 = vadd.f32 %v1301, %v1433
      %1435 = vmatprep.mubr.bf16.mxu0 %v680
      %1436 = vmatmul.mubr.bf16.gmra.mxu0 %v679
      %v1437 = vpop.f32.mrf.mxu0
      %v1438 = vadd.f32 %v1305, %v1437
      %v1439 = vpop.f32.mrf.mxu0
      %v1440 = vadd.f32 %v1307, %v1439
      %v1441 = vpop.f32.mrf.mxu0
      %v1442 = vadd.f32 %v1309, %v1441
      %v1443 = vpop.f32.mrf.mxu0
      %v1444 = vadd.f32 %v1311, %v1443
      %1445 = vmatprep.mubr.bf16.mxu0 %v686
      %1446 = vmatmul.mubr.bf16.gmra.mxu0 %v685
      %v1447 = vpop.f32.mrf.mxu0
      %v1448 = vadd.f32 %v1315, %v1447
      %v1449 = vpop.f32.mrf.mxu0
      %v1450 = vadd.f32 %v1317, %v1449
      %v1451 = vpop.f32.mrf.mxu0
      %v1452 = vadd.f32 %v1319, %v1451
      %v1453 = vpop.f32.mrf.mxu0
      %v1454 = vadd.f32 %v1321, %v1453
      %1455 = vdwg.mxu0
      %1456 = vmatprep.subr.bf16.mxu0 %v1070
      %1457 = vmatpush1.bf16.msra.mxu0 %v1069
      %1458 = vmatprep.subr.bf16.mxu0 %v1068
      %1459 = vmatpush1.bf16.msra.mxu0 %v1067
      %1460 = vmatprep.subr.bf16.mxu0 %v1066
      %1461 = vmatpush1.bf16.msra.mxu0 %v1065
      %1462 = vmatprep.subr.bf16.mxu0 %v1064
      %1463 = vmatpush1.bf16.msra.mxu0 %v1063
      %1464 = vmatprep.subr.bf16.mxu0 %v1062
      %1465 = vmatpush1.bf16.msra.mxu0 %v1061
      %1466 = vmatprep.subr.bf16.mxu0 %v1060
      %1467 = vmatpush1.bf16.msra.mxu0 %v1059
      %1468 = vmatprep.subr.bf16.mxu0 %v1058
      %1469 = vmatpush1.bf16.msra.mxu0 %v1057
      %1470 = vmatprep.subr.bf16.mxu0 %v1056
      %1471 = vmatpush1.bf16.msra.mxu0 %v1055
      %1472 = vmatprep.subr.bf16.mxu0 0
      %1473 = vmatpush2.bf16.msra.mxu0 0
      %1474 = vmatprep.subr.bf16.mxu0 0
      %1475 = vmatpush2.bf16.msra.mxu0 0
      %1476 = vmatprep.subr.bf16.mxu0 0
      %1477 = vmatpush2.bf16.msra.mxu0 0
      %1478 = vmatprep.subr.bf16.mxu0 0
      %1479 = vmatpush2.bf16.msra.mxu0 0
      %1480 = vmatprep.subr.bf16.mxu0 0
      %1481 = vmatpush2.bf16.msra.mxu0 0
      %1482 = vmatprep.subr.bf16.mxu0 0
      %1483 = vmatpush2.bf16.msra.mxu0 0
      %1484 = vmatprep.subr.bf16.mxu0 %v1074
      %1485 = vmatpush2.bf16.msra.mxu0 %v1073
      %1486 = vmatprep.subr.bf16.mxu0 %v1072
      %1487 = vmatpush2.bf16.msra.mxu0 %v1071
      %1488 = vmatprep.mubr.bf16.mxu0 %v1161
      %1489 = vmatmul.mubr.bf16.gmra.mxu0 %v633
      %v1490 = vpop.f32.mrf.mxu0
      %v1491 = vadd.f32 %v1358, %v1490
      %v1492 = vpop.f32.mrf.mxu0
      %v1493 = vadd.f32 %v1360, %v1492
      %v1494 = vpop.f32.mrf.mxu0
      %v1495 = vadd.f32 %v1362, %v1494
      %v1496 = vpop.f32.mrf.mxu0
      %v1497 = vadd.f32 %v1364, %v1496
      %1498 = vmatprep.mubr.bf16.mxu0 %v1164
      %1499 = vmatmul.mubr.bf16.gmra.mxu0 %v639
      %v1500 = vpop.f32.mrf.mxu0
      %v1501 = vadd.f32 %v1368, %v1500
      %v1502 = vpop.f32.mrf.mxu0
      %v1503 = vadd.f32 %v1370, %v1502
      %v1504 = vpop.f32.mrf.mxu0
      %v1505 = vadd.f32 %v1372, %v1504
      %v1506 = vpop.f32.mrf.mxu0
      %v1507 = vadd.f32 %v1374, %v1506
      %1508 = vmatprep.mubr.bf16.mxu0 %v1167
      %1509 = vmatmul.mubr.bf16.gmra.mxu0 %v645
      %v1510 = vpop.f32.mrf.mxu0
      %v1511 = vadd.f32 %v1378, %v1510
      %v1512 = vpop.f32.mrf.mxu0
      %v1513 = vadd.f32 %v1380, %v1512
      %v1514 = vpop.f32.mrf.mxu0
      %v1515 = vadd.f32 %v1382, %v1514
      %v1516 = vpop.f32.mrf.mxu0
      %v1517 = vadd.f32 %v1384, %v1516
      %1518 = vmatprep.mubr.bf16.mxu0 %v1170
      %1519 = vmatmul.mubr.bf16.gmra.mxu0 %v651
      %v1520 = vpop.f32.mrf.mxu0
      %v1521 = vadd.f32 %v1388, %v1520
      %v1522 = vpop.f32.mrf.mxu0
      %v1523 = vadd.f32 %v1390, %v1522
      %v1524 = vpop.f32.mrf.mxu0
      %v1525 = vadd.f32 %v1392, %v1524
      %v1526 = vpop.f32.mrf.mxu0
      %v1527 = vadd.f32 %v1394, %v1526
      %1528 = vmatprep.mubr.bf16.mxu0 %v1173
      %1529 = vmatmul.mubr.bf16.gmra.mxu0 %v657
      %v1530 = vpop.f32.mrf.mxu0
      %v1531 = vadd.f32 %v1398, %v1530
      %v1532 = vpop.f32.mrf.mxu0
      %v1533 = vadd.f32 %v1400, %v1532
      %v1534 = vpop.f32.mrf.mxu0
      %v1535 = vadd.f32 %v1402, %v1534
      %v1536 = vpop.f32.mrf.mxu0
      %v1537 = vadd.f32 %v1404, %v1536
      %1538 = vmatprep.mubr.bf16.mxu0 %v1176
      %1539 = vmatmul.mubr.bf16.gmra.mxu0 %v663
      %v1540 = vpop.f32.mrf.mxu0
      %v1541 = vadd.f32 %v1408, %v1540
      %v1542 = vpop.f32.mrf.mxu0
      %v1543 = vadd.f32 %v1410, %v1542
      %v1544 = vpop.f32.mrf.mxu0
      %v1545 = vadd.f32 %v1412, %v1544
      %v1546 = vpop.f32.mrf.mxu0
      %v1547 = vadd.f32 %v1414, %v1546
      %1548 = vmatprep.mubr.bf16.mxu0 %v1179
      %1549 = vmatmul.mubr.bf16.gmra.mxu0 %v669
      %v1550 = vpop.f32.mrf.mxu0
      %v1551 = vadd.f32 %v1418, %v1550
      %v1552 = vpop.f32.mrf.mxu0
      %v1553 = vadd.f32 %v1420, %v1552
      %v1554 = vpop.f32.mrf.mxu0
      %v1555 = vadd.f32 %v1422, %v1554
      %v1556 = vpop.f32.mrf.mxu0
      %v1557 = vadd.f32 %v1424, %v1556
      %1558 = vmatprep.mubr.bf16.mxu0 %v1182
      %1559 = vmatmul.mubr.bf16.gmra.mxu0 %v675
      %v1560 = vpop.f32.mrf.mxu0
      %v1561 = vadd.f32 %v1428, %v1560
      %v1562 = vpop.f32.mrf.mxu0
      %v1563 = vadd.f32 %v1430, %v1562
      %v1564 = vpop.f32.mrf.mxu0
      %v1565 = vadd.f32 %v1432, %v1564
      %v1566 = vpop.f32.mrf.mxu0
      %v1567 = vadd.f32 %v1434, %v1566
      %1568 = vmatprep.mubr.bf16.mxu0 %v1185
      %1569 = vmatmul.mubr.bf16.gmra.mxu0 %v681
      %v1570 = vpop.f32.mrf.mxu0
      %v1571 = vadd.f32 %v1438, %v1570
      %v1572 = vpop.f32.mrf.mxu0
      %v1573 = vadd.f32 %v1440, %v1572
      %v1574 = vpop.f32.mrf.mxu0
      %v1575 = vadd.f32 %v1442, %v1574
      %v1576 = vpop.f32.mrf.mxu0
      %v1577 = vadd.f32 %v1444, %v1576
      %1578 = vmatprep.mubr.bf16.mxu0 %v1188
      %1579 = vmatmul.mubr.bf16.gmra.mxu0 %v687
      %v1580 = vpop.f32.mrf.mxu0
      %v1581 = vadd.f32 %v1448, %v1580
      %v1582 = vpop.f32.mrf.mxu0
      %v1583 = vadd.f32 %v1450, %v1582
      %v1584 = vpop.f32.mrf.mxu0
      %v1585 = vadd.f32 %v1452, %v1584
      %v1586 = vpop.f32.mrf.mxu0
      %v1587 = vadd.f32 %v1454, %v1586
      %1588 = vdwg.mxu0
      %vm1589 = vcmask 556032
      %v1590 = vsel %vm1589, %v1493, 0.0
      %v1591 = vadd.f32 %v1491, %v1590
      %1592 = vadd.xlane.f32.xlu0 %v1591
      %v1593 = vpop.xlane.xlu0 %1592
      %v1594 = vsel %vm1589, %v1497, 0.0
      %v1595 = vadd.f32 %v1495, %v1594
      %1596 = vadd.xlane.f32.xlu0 %v1595
      %v1597 = vpop.xlane.xlu0 %1596
      %v1598 = vsel %vm1589, %v1503, 0.0
      %v1599 = vadd.f32 %v1501, %v1598
      %1600 = vadd.xlane.f32.xlu0 %v1599
      %v1601 = vpop.xlane.xlu0 %1600
      %v1602 = vsel %vm1589, %v1507, 0.0
      %v1603 = vadd.f32 %v1505, %v1602
      %1604 = vadd.xlane.f32.xlu0 %v1603
      %v1605 = vpop.xlane.xlu0 %1604
      %v1606 = vsel %vm1589, %v1513, 0.0
      %v1607 = vadd.f32 %v1511, %v1606
      %1608 = vadd.xlane.f32.xlu0 %v1607
      %v1609 = vpop.xlane.xlu0 %1608
      %v1610 = vsel %vm1589, %v1517, 0.0
      %v1611 = vadd.f32 %v1515, %v1610
      %1612 = vadd.xlane.f32.xlu0 %v1611
      %v1613 = vpop.xlane.xlu0 %1612
      %v1614 = vsel %vm1589, %v1523, 0.0
      %v1615 = vadd.f32 %v1521, %v1614
      %1616 = vadd.xlane.f32.xlu0 %v1615
      %v1617 = vpop.xlane.xlu0 %1616
      %v1618 = vsel %vm1589, %v1527, 0.0
      %v1619 = vadd.f32 %v1525, %v1618
      %1620 = vadd.xlane.f32.xlu0 %v1619
      %v1621 = vpop.xlane.xlu0 %1620
      %v1622 = vsel %vm1589, %v1533, 0.0
      %v1623 = vadd.f32 %v1531, %v1622
      %1624 = vadd.xlane.f32.xlu0 %v1623
      %v1625 = vpop.xlane.xlu0 %1624
      %v1626 = vsel %vm1589, %v1537, 0.0
      %v1627 = vadd.f32 %v1535, %v1626
      %1628 = vadd.xlane.f32.xlu0 %v1627
      %v1629 = vpop.xlane.xlu0 %1628
      %v1630 = vsel %vm1589, %v1543, 0.0
      %v1631 = vadd.f32 %v1541, %v1630
      %1632 = vadd.xlane.f32.xlu0 %v1631
      %v1633 = vpop.xlane.xlu0 %1632
      %v1634 = vsel %vm1589, %v1547, 0.0
      %v1635 = vadd.f32 %v1545, %v1634
      %1636 = vadd.xlane.f32.xlu0 %v1635
      %v1637 = vpop.xlane.xlu0 %1636
      %v1638 = vsel %vm1589, %v1553, 0.0
      %v1639 = vadd.f32 %v1551, %v1638
      %1640 = vadd.xlane.f32.xlu0 %v1639
      %v1641 = vpop.xlane.xlu0 %1640
      %v1642 = vsel %vm1589, %v1557, 0.0
      %v1643 = vadd.f32 %v1555, %v1642
      %1644 = vadd.xlane.f32.xlu0 %v1643
      %v1645 = vpop.xlane.xlu0 %1644
      %v1646 = vsel %vm1589, %v1563, 0.0
      %v1647 = vadd.f32 %v1561, %v1646
      %1648 = vadd.xlane.f32.xlu0 %v1647
      %v1649 = vpop.xlane.xlu0 %1648
      %v1650 = vsel %vm1589, %v1567, 0.0
      %v1651 = vadd.f32 %v1565, %v1650
      %1652 = vadd.xlane.f32.xlu0 %v1651
      %v1653 = vpop.xlane.xlu0 %1652
      %v1654 = vsel %vm1589, %v1573, 0.0
      %v1655 = vadd.f32 %v1571, %v1654
      %1656 = vadd.xlane.f32.xlu0 %v1655
      %v1657 = vpop.xlane.xlu0 %1656
      %v1658 = vsel %vm1589, %v1577, 0.0
      %v1659 = vadd.f32 %v1575, %v1658
      %1660 = vadd.xlane.f32.xlu0 %v1659
      %v1661 = vpop.xlane.xlu0 %1660
      %v1662 = vsel %vm1589, %v1583, 0.0
      %v1663 = vadd.f32 %v1581, %v1662
      %1664 = vadd.xlane.f32.xlu0 %v1663
      %v1665 = vpop.xlane.xlu0 %1664
      %v1666 = vsel %vm1589, %v1587, 0.0
      %v1667 = vadd.f32 %v1585, %v1666
      %1668 = vadd.xlane.f32.xlu0 %v1667
      %v1669 = vpop.xlane.xlu0 %1668
      %v1670 = vmul.f32 %v1593, 0.0051020407
      %v1671 = vmul.f32 %v1597, 0.0051020407
      %v1672 = vmul.f32 %v1601, 0.0051020407
      %v1673 = vmul.f32 %v1605, 0.0051020407
      %v1674 = vmul.f32 %v1609, 0.0051020407
      %v1675 = vmul.f32 %v1613, 0.0051020407
      %v1676 = vmul.f32 %v1617, 0.0051020407
      %v1677 = vmul.f32 %v1621, 0.0051020407
      %v1678 = vmul.f32 %v1625, 0.0051020407
      %v1679 = vmul.f32 %v1629, 0.0051020407
      %v1680 = vmul.f32 %v1633, 0.0051020407
      %v1681 = vmul.f32 %v1637, 0.0051020407
      %v1682 = vmul.f32 %v1641, 0.0051020407
      %v1683 = vmul.f32 %v1645, 0.0051020407
      %v1684 = vmul.f32 %v1649, 0.0051020407
      %v1685 = vmul.f32 %v1653, 0.0051020407
      %v1686 = vmul.f32 %v1657, 0.0051020407
      %v1687 = vmul.f32 %v1661, 0.0051020407
      %v1688 = vmul.f32 %v1665, 0.0051020407
      %v1689 = vmul.f32 %v1669, 0.0051020407
      %v1690 = vmul.f32 %v1491, %v1491
      %v1691 = vmul.f32 %v1493, %v1493
      %v1692 = vmul.f32 %v1495, %v1495
      %v1693 = vmul.f32 %v1497, %v1497
      %v1694 = vmul.f32 %v1501, %v1501
      %v1695 = vmul.f32 %v1503, %v1503
      %v1696 = vmul.f32 %v1505, %v1505
      %v1697 = vmul.f32 %v1507, %v1507
      %v1698 = vmul.f32 %v1511, %v1511
      %v1699 = vmul.f32 %v1513, %v1513
      %v1700 = vmul.f32 %v1515, %v1515
      %v1701 = vmul.f32 %v1517, %v1517
      %v1702 = vmul.f32 %v1521, %v1521
      %v1703 = vmul.f32 %v1523, %v1523
      %v1704 = vmul.f32 %v1525, %v1525
      %v1705 = vmul.f32 %v1527, %v1527
      %v1706 = vmul.f32 %v1531, %v1531
      %v1707 = vmul.f32 %v1533, %v1533
      %v1708 = vmul.f32 %v1535, %v1535
      %v1709 = vmul.f32 %v1537, %v1537
      %v1710 = vmul.f32 %v1541, %v1541
      %v1711 = vmul.f32 %v1543, %v1543
      %v1712 = vmul.f32 %v1545, %v1545
      %v1713 = vmul.f32 %v1547, %v1547
      %v1714 = vmul.f32 %v1551, %v1551
      %v1715 = vmul.f32 %v1553, %v1553
      %v1716 = vmul.f32 %v1555, %v1555
      %v1717 = vmul.f32 %v1557, %v1557
      %v1718 = vmul.f32 %v1561, %v1561
      %v1719 = vmul.f32 %v1563, %v1563
      %v1720 = vmul.f32 %v1565, %v1565
      %v1721 = vmul.f32 %v1567, %v1567
      %v1722 = vmul.f32 %v1571, %v1571
      %v1723 = vmul.f32 %v1573, %v1573
      %v1724 = vmul.f32 %v1575, %v1575
      %v1725 = vmul.f32 %v1577, %v1577
      %v1726 = vmul.f32 %v1581, %v1581
      %v1727 = vmul.f32 %v1583, %v1583
      %v1728 = vmul.f32 %v1585, %v1585
      %v1729 = vmul.f32 %v1587, %v1587
      %v1730 = vsel %vm1589, %v1691, 0.0
      %v1731 = vadd.f32 %v1690, %v1730
      %1732 = vadd.xlane.f32.xlu0 %v1731
      %v1733 = vpop.xlane.xlu0 %1732
      %v1734 = vsel %vm1589, %v1693, 0.0
      %v1735 = vadd.f32 %v1692, %v1734
      %1736 = vadd.xlane.f32.xlu0 %v1735
      %v1737 = vpop.xlane.xlu0 %1736
      %v1738 = vsel %vm1589, %v1695, 0.0
      %v1739 = vadd.f32 %v1694, %v1738
      %1740 = vadd.xlane.f32.xlu0 %v1739
      %v1741 = vpop.xlane.xlu0 %1740
      %v1742 = vsel %vm1589, %v1697, 0.0
      %v1743 = vadd.f32 %v1696, %v1742
      %1744 = vadd.xlane.f32.xlu0 %v1743
      %v1745 = vpop.xlane.xlu0 %1744
      %v1746 = vsel %vm1589, %v1699, 0.0
      %v1747 = vadd.f32 %v1698, %v1746
      %1748 = vadd.xlane.f32.xlu0 %v1747
      %v1749 = vpop.xlane.xlu0 %1748
      %v1750 = vsel %vm1589, %v1701, 0.0
      %v1751 = vadd.f32 %v1700, %v1750
      %1752 = vadd.xlane.f32.xlu0 %v1751
      %v1753 = vpop.xlane.xlu0 %1752
      %v1754 = vsel %vm1589, %v1703, 0.0
      %v1755 = vadd.f32 %v1702, %v1754
      %1756 = vadd.xlane.f32.xlu0 %v1755
      %v1757 = vpop.xlane.xlu0 %1756
      %v1758 = vsel %vm1589, %v1705, 0.0
      %v1759 = vadd.f32 %v1704, %v1758
      %1760 = vadd.xlane.f32.xlu0 %v1759
      %v1761 = vpop.xlane.xlu0 %1760
      %v1762 = vsel %vm1589, %v1707, 0.0
      %v1763 = vadd.f32 %v1706, %v1762
      %1764 = vadd.xlane.f32.xlu0 %v1763
      %v1765 = vpop.xlane.xlu0 %1764
      %v1766 = vsel %vm1589, %v1709, 0.0
      %v1767 = vadd.f32 %v1708, %v1766
      %1768 = vadd.xlane.f32.xlu0 %v1767
      %v1769 = vpop.xlane.xlu0 %1768
      %v1770 = vsel %vm1589, %v1711, 0.0
      %v1771 = vadd.f32 %v1710, %v1770
      %1772 = vadd.xlane.f32.xlu0 %v1771
      %v1773 = vpop.xlane.xlu0 %1772
      %v1774 = vsel %vm1589, %v1713, 0.0
      %v1775 = vadd.f32 %v1712, %v1774
      %1776 = vadd.xlane.f32.xlu0 %v1775
      %v1777 = vpop.xlane.xlu0 %1776
      %v1778 = vsel %vm1589, %v1715, 0.0
      %v1779 = vadd.f32 %v1714, %v1778
      %1780 = vadd.xlane.f32.xlu0 %v1779
      %v1781 = vpop.xlane.xlu0 %1780
      %v1782 = vsel %vm1589, %v1717, 0.0
      %v1783 = vadd.f32 %v1716, %v1782
      %1784 = vadd.xlane.f32.xlu0 %v1783
      %v1785 = vpop.xlane.xlu0 %1784
      %v1786 = vsel %vm1589, %v1719, 0.0
      %v1787 = vadd.f32 %v1718, %v1786
      %1788 = vadd.xlane.f32.xlu0 %v1787
      %v1789 = vpop.xlane.xlu0 %1788
      %v1790 = vsel %vm1589, %v1721, 0.0
      %v1791 = vadd.f32 %v1720, %v1790
      %1792 = vadd.xlane.f32.xlu0 %v1791
      %v1793 = vpop.xlane.xlu0 %1792
      %v1794 = vsel %vm1589, %v1723, 0.0
      %v1795 = vadd.f32 %v1722, %v1794
      %1796 = vadd.xlane.f32.xlu0 %v1795
      %v1797 = vpop.xlane.xlu0 %1796
      %v1798 = vsel %vm1589, %v1725, 0.0
      %v1799 = vadd.f32 %v1724, %v1798
      %1800 = vadd.xlane.f32.xlu0 %v1799
      %v1801 = vpop.xlane.xlu0 %1800
      %v1802 = vsel %vm1589, %v1727, 0.0
      %v1803 = vadd.f32 %v1726, %v1802
      %1804 = vadd.xlane.f32.xlu0 %v1803
      %v1805 = vpop.xlane.xlu0 %1804
      %v1806 = vsel %vm1589, %v1729, 0.0
      %v1807 = vadd.f32 %v1728, %v1806
      %1808 = vadd.xlane.f32.xlu0 %v1807
      %v1809 = vpop.xlane.xlu0 %1808
      %v1810 = vmul.f32 %v1733, 0.0051020407
      %v1811 = vmul.f32 %v1737, 0.0051020407
      %v1812 = vmul.f32 %v1741, 0.0051020407
      %v1813 = vmul.f32 %v1745, 0.0051020407
      %v1814 = vmul.f32 %v1749, 0.0051020407
      %v1815 = vmul.f32 %v1753, 0.0051020407
      %v1816 = vmul.f32 %v1757, 0.0051020407
      %v1817 = vmul.f32 %v1761, 0.0051020407
      %v1818 = vmul.f32 %v1765, 0.0051020407
      %v1819 = vmul.f32 %v1769, 0.0051020407
      %v1820 = vmul.f32 %v1773, 0.0051020407
      %v1821 = vmul.f32 %v1777, 0.0051020407
      %v1822 = vmul.f32 %v1781, 0.0051020407
      %v1823 = vmul.f32 %v1785, 0.0051020407
      %v1824 = vmul.f32 %v1789, 0.0051020407
      %v1825 = vmul.f32 %v1793, 0.0051020407
      %v1826 = vmul.f32 %v1797, 0.0051020407
      %v1827 = vmul.f32 %v1801, 0.0051020407
      %v1828 = vmul.f32 %v1805, 0.0051020407
      %v1829 = vmul.f32 %v1809, 0.0051020407
      %v1830 = vmul.f32 %v1670, %v1670
      %v1831 = vmul.f32 %v1671, %v1671
      %v1832 = vmul.f32 %v1672, %v1672
      %v1833 = vmul.f32 %v1673, %v1673
      %v1834 = vmul.f32 %v1674, %v1674
      %v1835 = vmul.f32 %v1675, %v1675
      %v1836 = vmul.f32 %v1676, %v1676
      %v1837 = vmul.f32 %v1677, %v1677
      %v1838 = vmul.f32 %v1678, %v1678
      %v1839 = vmul.f32 %v1679, %v1679
      %v1840 = vmul.f32 %v1680, %v1680
      %v1841 = vmul.f32 %v1681, %v1681
      %v1842 = vmul.f32 %v1682, %v1682
      %v1843 = vmul.f32 %v1683, %v1683
      %v1844 = vmul.f32 %v1684, %v1684
      %v1845 = vmul.f32 %v1685, %v1685
      %v1846 = vmul.f32 %v1686, %v1686
      %v1847 = vmul.f32 %v1687, %v1687
      %v1848 = vmul.f32 %v1688, %v1688
      %v1849 = vmul.f32 %v1689, %v1689
      %v1850 = vsub.f32 %v1810, %v1830
      %v1851 = vsub.f32 %v1811, %v1831
      %v1852 = vsub.f32 %v1812, %v1832
      %v1853 = vsub.f32 %v1813, %v1833
      %v1854 = vsub.f32 %v1814, %v1834
      %v1855 = vsub.f32 %v1815, %v1835
      %v1856 = vsub.f32 %v1816, %v1836
      %v1857 = vsub.f32 %v1817, %v1837
      %v1858 = vsub.f32 %v1818, %v1838
      %v1859 = vsub.f32 %v1819, %v1839
      %v1860 = vsub.f32 %v1820, %v1840
      %v1861 = vsub.f32 %v1821, %v1841
      %v1862 = vsub.f32 %v1822, %v1842
      %v1863 = vsub.f32 %v1823, %v1843
      %v1864 = vsub.f32 %v1824, %v1844
      %v1865 = vsub.f32 %v1825, %v1845
      %v1866 = vsub.f32 %v1826, %v1846
      %v1867 = vsub.f32 %v1827, %v1847
      %v1868 = vsub.f32 %v1828, %v1848
      %v1869 = vsub.f32 %v1829, %v1849
      %v1870 = vld [vmem:[%s2] sm:$0xff]
      %v1871 = vld [vmem:[%s2 + $0x8] sm:$0xff]
      %v1872 = vld [vmem:[%s2 + $0x10] sm:$0xff]
      %v1873 = vld [vmem:[%s2 + $0x18] sm:$0xff]
      %v1874 = vld [vmem:[%s2 + $0x20] sm:$0xff]
      %v1875 = vld [vmem:[%s2 + $0x28] sm:$0xff]
      %v1876 = vld [vmem:[%s2 + $0x30] sm:$0xff]
      %v1877 = vld [vmem:[%s2 + $0x38] sm:$0xff]
      %v1878 = vld [vmem:[%s2 + $0x40] sm:$0xff]
      %v1879 = vld [vmem:[%s2 + $0x48] sm:$0xff]
      %v1880 = vld [vmem:[%s2 + $0x50] sm:$0xff]
      %v1881 = vld [vmem:[%s2 + $0x58] sm:$0xff]
      %v1882 = vld [vmem:[%s2 + $0x60] sm:$0xff]
      %v1883 = vld [vmem:[%s2 + $0x68] sm:$0xff]
      %v1884 = vld [vmem:[%s2 + $0x70] sm:$0xff]
      %v1885 = vld [vmem:[%s2 + $0x78] sm:$0xff]
      %v1886 = vld [vmem:[%s2 + $0x80] sm:$0xff]
      %v1887 = vld [vmem:[%s2 + $0x88] sm:$0xff]
      %v1888 = vld [vmem:[%s2 + $0x90] sm:$0xff]
      %v1889 = vld [vmem:[%s2 + $0x98] sm:$0xff]
      %v1890 = vmax.f32 %v1850, 0.0
      %v1891 = vmax.f32 %v1851, 0.0
      %v1892 = vmax.f32 %v1852, 0.0
      %v1893 = vmax.f32 %v1853, 0.0
      %v1894 = vmax.f32 %v1854, 0.0
      %v1895 = vmax.f32 %v1855, 0.0
      %v1896 = vmax.f32 %v1856, 0.0
      %v1897 = vmax.f32 %v1857, 0.0
      %v1898 = vmax.f32 %v1858, 0.0
      %v1899 = vmax.f32 %v1859, 0.0
      %v1900 = vmax.f32 %v1860, 0.0
      %v1901 = vmax.f32 %v1861, 0.0
      %v1902 = vmax.f32 %v1862, 0.0
      %v1903 = vmax.f32 %v1863, 0.0
      %v1904 = vmax.f32 %v1864, 0.0
      %v1905 = vmax.f32 %v1865, 0.0
      %v1906 = vmax.f32 %v1866, 0.0
      %v1907 = vmax.f32 %v1867, 0.0
      %v1908 = vmax.f32 %v1868, 0.0
      %v1909 = vmax.f32 %v1869, 0.0
      %v1910 = vadd.f32 %v1890, 0.001
      %v1911 = vadd.f32 %v1891, 0.001
      %v1912 = vadd.f32 %v1892, 0.001
      %v1913 = vadd.f32 %v1893, 0.001
      %v1914 = vadd.f32 %v1894, 0.001
      %v1915 = vadd.f32 %v1895, 0.001
      %v1916 = vadd.f32 %v1896, 0.001
      %v1917 = vadd.f32 %v1897, 0.001
      %v1918 = vadd.f32 %v1898, 0.001
      %v1919 = vadd.f32 %v1899, 0.001
      %v1920 = vadd.f32 %v1900, 0.001
      %v1921 = vadd.f32 %v1901, 0.001
      %v1922 = vadd.f32 %v1902, 0.001
      %v1923 = vadd.f32 %v1903, 0.001
      %v1924 = vadd.f32 %v1904, 0.001
      %v1925 = vadd.f32 %v1905, 0.001
      %v1926 = vadd.f32 %v1906, 0.001
      %v1927 = vadd.f32 %v1907, 0.001
      %v1928 = vadd.f32 %v1908, 0.001
      %v1929 = vadd.f32 %v1909, 0.001
      %v1930 = vrsqrt.pop %v1910
      %v1931 = vrsqrt.pop %v1911
      %v1932 = vrsqrt.pop %v1912
      %v1933 = vrsqrt.pop %v1913
      %v1934 = vrsqrt.pop %v1914
      %v1935 = vrsqrt.pop %v1915
      %v1936 = vrsqrt.pop %v1916
      %v1937 = vrsqrt.pop %v1917
      %v1938 = vrsqrt.pop %v1918
      %v1939 = vrsqrt.pop %v1919
      %v1940 = vrsqrt.pop %v1920
      %v1941 = vrsqrt.pop %v1921
      %v1942 = vrsqrt.pop %v1922
      %v1943 = vrsqrt.pop %v1923
      %v1944 = vrsqrt.pop %v1924
      %v1945 = vrsqrt.pop %v1925
      %v1946 = vrsqrt.pop %v1926
      %v1947 = vrsqrt.pop %v1927
      %v1948 = vrsqrt.pop %v1928
      %v1949 = vrsqrt.pop %v1929
      %v1950 = vmul.f32 %v1870, %v1930
      %v1951 = vmul.f32 %v1871, %v1931
      %v1952 = vmul.f32 %v1872, %v1932
      %v1953 = vmul.f32 %v1873, %v1933
      %v1954 = vmul.f32 %v1874, %v1934
      %v1955 = vmul.f32 %v1875, %v1935
      %v1956 = vmul.f32 %v1876, %v1936
      %v1957 = vmul.f32 %v1877, %v1937
      %v1958 = vmul.f32 %v1878, %v1938
      %v1959 = vmul.f32 %v1879, %v1939
      %v1960 = vmul.f32 %v1880, %v1940
      %v1961 = vmul.f32 %v1881, %v1941
      %v1962 = vmul.f32 %v1882, %v1942
      %v1963 = vmul.f32 %v1883, %v1943
      %v1964 = vmul.f32 %v1884, %v1944
      %v1965 = vmul.f32 %v1885, %v1945
      %v1966 = vmul.f32 %v1886, %v1946
      %v1967 = vmul.f32 %v1887, %v1947
      %v1968 = vmul.f32 %v1888, %v1948
      %v1969 = vmul.f32 %v1889, %v1949
      %v1970 = vsub.f32 %v1491, %v1670
      %v1971 = vsub.f32 %v1493, %v1670
      %v1972 = vsub.f32 %v1495, %v1671
      %v1973 = vsub.f32 %v1497, %v1671
      %v1974 = vsub.f32 %v1501, %v1672
      %v1975 = vsub.f32 %v1503, %v1672
      %v1976 = vsub.f32 %v1505, %v1673
      %v1977 = vsub.f32 %v1507, %v1673
      %v1978 = vsub.f32 %v1511, %v1674
      %v1979 = vsub.f32 %v1513, %v1674
      %v1980 = vsub.f32 %v1515, %v1675
      %v1981 = vsub.f32 %v1517, %v1675
      %v1982 = vsub.f32 %v1521, %v1676
      %v1983 = vsub.f32 %v1523, %v1676
      %v1984 = vsub.f32 %v1525, %v1677
      %v1985 = vsub.f32 %v1527, %v1677
      %v1986 = vsub.f32 %v1531, %v1678
      %v1987 = vsub.f32 %v1533, %v1678
      %v1988 = vsub.f32 %v1535, %v1679
      %v1989 = vsub.f32 %v1537, %v1679
      %v1990 = vsub.f32 %v1541, %v1680
      %v1991 = vsub.f32 %v1543, %v1680
      %v1992 = vsub.f32 %v1545, %v1681
      %v1993 = vsub.f32 %v1547, %v1681
      %v1994 = vsub.f32 %v1551, %v1682
      %v1995 = vsub.f32 %v1553, %v1682
      %v1996 = vsub.f32 %v1555, %v1683
      %v1997 = vsub.f32 %v1557, %v1683
      %v1998 = vsub.f32 %v1561, %v1684
      %v1999 = vsub.f32 %v1563, %v1684
      %v2000 = vsub.f32 %v1565, %v1685
      %v2001 = vsub.f32 %v1567, %v1685
      %v2002 = vsub.f32 %v1571, %v1686
      %v2003 = vsub.f32 %v1573, %v1686
      %v2004 = vsub.f32 %v1575, %v1687
      %v2005 = vsub.f32 %v1577, %v1687
      %v2006 = vsub.f32 %v1581, %v1688
      %v2007 = vsub.f32 %v1583, %v1688
      %v2008 = vsub.f32 %v1585, %v1689
      %v2009 = vsub.f32 %v1587, %v1689
      %2011 = vset.pattern.permute.xlu0 0
      %2012 = vperm.xlu0 %2011, %v1950
      %v2013 = vpop.permute.xlu0 %2012
      %2016 = vset.pattern.permute.xlu0 0
      %2017 = vperm.xlu0 %2016, %v1951
      %v2018 = vpop.permute.xlu0 %2017
      %2021 = vset.pattern.permute.xlu0 0
      %2022 = vperm.xlu0 %2021, %v1952
      %v2023 = vpop.permute.xlu0 %2022
      %2026 = vset.pattern.permute.xlu0 0
      %2027 = vperm.xlu0 %2026, %v1953
      %v2028 = vpop.permute.xlu0 %2027
      %2031 = vset.pattern.permute.xlu0 0
      %2032 = vperm.xlu0 %2031, %v1954
      %v2033 = vpop.permute.xlu0 %2032
      %2036 = vset.pattern.permute.xlu0 0
      %2037 = vperm.xlu0 %2036, %v1955
      %v2038 = vpop.permute.xlu0 %2037
      %2041 = vset.pattern.permute.xlu0 0
      %2042 = vperm.xlu0 %2041, %v1956
      %v2043 = vpop.permute.xlu0 %2042
      %2046 = vset.pattern.permute.xlu0 0
      %2047 = vperm.xlu0 %2046, %v1957
      %v2048 = vpop.permute.xlu0 %2047
      %2051 = vset.pattern.permute.xlu0 0
      %2052 = vperm.xlu0 %2051, %v1958
      %v2053 = vpop.permute.xlu0 %2052
      %2056 = vset.pattern.permute.xlu0 0
      %2057 = vperm.xlu0 %2056, %v1959
      %v2058 = vpop.permute.xlu0 %2057
      %2061 = vset.pattern.permute.xlu0 0
      %2062 = vperm.xlu0 %2061, %v1960
      %v2063 = vpop.permute.xlu0 %2062
      %2066 = vset.pattern.permute.xlu0 0
      %2067 = vperm.xlu0 %2066, %v1961
      %v2068 = vpop.permute.xlu0 %2067
      %2071 = vset.pattern.permute.xlu0 0
      %2072 = vperm.xlu0 %2071, %v1962
      %v2073 = vpop.permute.xlu0 %2072
      %2076 = vset.pattern.permute.xlu0 0
      %2077 = vperm.xlu0 %2076, %v1963
      %v2078 = vpop.permute.xlu0 %2077
      %2081 = vset.pattern.permute.xlu0 0
      %2082 = vperm.xlu0 %2081, %v1964
      %v2083 = vpop.permute.xlu0 %2082
      %2086 = vset.pattern.permute.xlu0 0
      %2087 = vperm.xlu0 %2086, %v1965
      %v2088 = vpop.permute.xlu0 %2087
      %2091 = vset.pattern.permute.xlu0 0
      %2092 = vperm.xlu0 %2091, %v1966
      %v2093 = vpop.permute.xlu0 %2092
      %2096 = vset.pattern.permute.xlu0 0
      %2097 = vperm.xlu0 %2096, %v1967
      %v2098 = vpop.permute.xlu0 %2097
      %2101 = vset.pattern.permute.xlu0 0
      %2102 = vperm.xlu0 %2101, %v1968
      %v2103 = vpop.permute.xlu0 %2102
      %2106 = vset.pattern.permute.xlu0 0
      %2107 = vperm.xlu0 %2106, %v1969
      %v2108 = vpop.permute.xlu0 %2107
      %v2110 = vmul.f32 %v1970, %v2013
      %v2111 = vmul.f32 %v1971, %v2013
      %v2112 = vmul.f32 %v1972, %v2018
      %v2113 = vmul.f32 %v1973, %v2018
      %v2114 = vmul.f32 %v1974, %v2023
      %v2115 = vmul.f32 %v1975, %v2023
      %v2116 = vmul.f32 %v1976, %v2028
      %v2117 = vmul.f32 %v1977, %v2028
      %v2118 = vmul.f32 %v1978, %v2033
      %v2119 = vmul.f32 %v1979, %v2033
      %v2120 = vmul.f32 %v1980, %v2038
      %v2121 = vmul.f32 %v1981, %v2038
      %v2122 = vmul.f32 %v1982, %v2043
      %v2123 = vmul.f32 %v1983, %v2043
      %v2124 = vmul.f32 %v1984, %v2048
      %v2125 = vmul.f32 %v1985, %v2048
      %v2126 = vmul.f32 %v1986, %v2053
      %v2127 = vmul.f32 %v1987, %v2053
      %v2128 = vmul.f32 %v1988, %v2058
      %v2129 = vmul.f32 %v1989, %v2058
      %v2130 = vmul.f32 %v1990, %v2063
      %v2131 = vmul.f32 %v1991, %v2063
      %v2132 = vmul.f32 %v1992, %v2068
      %v2133 = vmul.f32 %v1993, %v2068
      %v2134 = vmul.f32 %v1994, %v2073
      %v2135 = vmul.f32 %v1995, %v2073
      %v2136 = vmul.f32 %v1996, %v2078
      %v2137 = vmul.f32 %v1997, %v2078
      %v2138 = vmul.f32 %v1998, %v2083
      %v2139 = vmul.f32 %v1999, %v2083
      %v2140 = vmul.f32 %v2000, %v2088
      %v2141 = vmul.f32 %v2001, %v2088
      %v2142 = vmul.f32 %v2002, %v2093
      %v2143 = vmul.f32 %v2003, %v2093
      %v2144 = vmul.f32 %v2004, %v2098
      %v2145 = vmul.f32 %v2005, %v2098
      %v2146 = vmul.f32 %v2006, %v2103
      %v2147 = vmul.f32 %v2007, %v2103
      %v2148 = vmul.f32 %v2008, %v2108
      %v2149 = vmul.f32 %v2009, %v2108
      %v2150 = vpack.c.bf16 %v2112, %v2110
      %v2151 = vpack.c.bf16 %v2113, %v2111
      %v2152 = vpack.c.bf16 %v2116, %v2114
      %v2153 = vpack.c.bf16 %v2117, %v2115
      %v2154 = vpack.c.bf16 %v2120, %v2118
      %v2155 = vpack.c.bf16 %v2121, %v2119
      %v2156 = vpack.c.bf16 %v2124, %v2122
      %v2157 = vpack.c.bf16 %v2125, %v2123
      %v2158 = vpack.c.bf16 %v2128, %v2126
      %v2159 = vpack.c.bf16 %v2129, %v2127
      %v2160 = vpack.c.bf16 %v2132, %v2130
      %v2161 = vpack.c.bf16 %v2133, %v2131
      %v2162 = vpack.c.bf16 %v2136, %v2134
      %v2163 = vpack.c.bf16 %v2137, %v2135
      %v2164 = vpack.c.bf16 %v2140, %v2138
      %v2165 = vpack.c.bf16 %v2141, %v2139
      %v2166 = vpack.c.bf16 %v2144, %v2142
      %v2167 = vpack.c.bf16 %v2145, %v2143
      %v2168 = vpack.c.bf16 %v2148, %v2146
      %v2169 = vpack.c.bf16 %v2149, %v2147
      %v2170 = vld [vmem:[%s283] sm:$0xff]
      %v2171 = vld [vmem:[%s283 + $0x8] sm:$0xff]
      %v2172 = vld [vmem:[%s283 + $0x10] sm:$0xff]
      %v2173 = vld [vmem:[%s283 + $0x18] sm:$0xff]
      %v2174 = vld [vmem:[%s283 + $0x20] sm:$0xff]
      %v2175 = vld [vmem:[%s283 + $0x28] sm:$0xff]
      %v2176 = vld [vmem:[%s283 + $0x30] sm:$0xff]
      %v2177 = vld [vmem:[%s283 + $0x38] sm:$0xff]
      %v2178 = vld [vmem:[%s283 + $0x40] sm:$0xff]
      %v2179 = vld [vmem:[%s283 + $0x48] sm:$0xff]
      %v2180 = vld [vmem:[%s283 + $0x50] sm:$0xff]
      %v2181 = vld [vmem:[%s283 + $0x58] sm:$0xff]
      %v2182 = vld [vmem:[%s283 + $0x60] sm:$0xff]
      %v2183 = vld [vmem:[%s283 + $0x68] sm:$0xff]
      %v2184 = vld [vmem:[%s283 + $0x70] sm:$0xff]
      %v2185 = vld [vmem:[%s283 + $0x78] sm:$0xff]
      %v2186 = vld [vmem:[%s283 + $0x80] sm:$0xff]
      %v2187 = vld [vmem:[%s283 + $0x88] sm:$0xff]
      %v2188 = vld [vmem:[%s283 + $0x90] sm:$0xff]
      %v2189 = vld [vmem:[%s283 + $0x98] sm:$0xff]
      %v2190 = vld [vmem:[%s283 + $0xa0] sm:$0xff]
      %v2191 = vld [vmem:[%s283 + $0xa8] sm:$0xff]
      %v2192 = vld [vmem:[%s283 + $0xb0] sm:$0xff]
      %v2193 = vld [vmem:[%s283 + $0xb8] sm:$0xff]
      %v2194 = vld [vmem:[%s283 + $0xc0] sm:$0xff]
      %v2195 = vld [vmem:[%s283 + $0xc8] sm:$0xff]
      %v2196 = vld [vmem:[%s283 + $0xd0] sm:$0xff]
      %v2197 = vld [vmem:[%s283 + $0xd8] sm:$0xff]
      %v2198 = vld [vmem:[%s283 + $0xe0] sm:$0xff]
      %v2199 = vld [vmem:[%s283 + $0xe8] sm:$0xff]
      %v2200 = vld [vmem:[%s283 + $0xf0] sm:$0xff]
      %v2201 = vld [vmem:[%s283 + $0xf8] sm:$0xff]
      %v2202 = vld [vmem:[%s283 + $0x100] sm:$0xff]
      %v2203 = vld [vmem:[%s283 + $0x108] sm:$0xff]
      %v2204 = vld [vmem:[%s283 + $0x110] sm:$0xff]
      %v2205 = vld [vmem:[%s283 + $0x118] sm:$0xff]
      %v2206 = vld [vmem:[%s283 + $0x120] sm:$0xff]
      %v2207 = vld [vmem:[%s283 + $0x128] sm:$0xff]
      %v2208 = vld [vmem:[%s283 + $0x130] sm:$0xff]
      %v2209 = vld [vmem:[%s283 + $0x138] sm:$0xff]
      %v2210 = vld [vmem:[%s283 + $0x140] sm:$0xff]
      %v2211 = vld [vmem:[%s283 + $0x148] sm:$0xff]
      %v2212 = vld [vmem:[%s283 + $0x150] sm:$0xff]
      %v2213 = vld [vmem:[%s283 + $0x158] sm:$0xff]
      %v2214 = vld [vmem:[%s283 + $0x160] sm:$0xff]
      %v2215 = vld [vmem:[%s283 + $0x168] sm:$0xff]
      %v2216 = vld [vmem:[%s283 + $0x170] sm:$0xff]
      %v2217 = vld [vmem:[%s283 + $0x178] sm:$0xff]
      %v2218 = vld [vmem:[%s283 + $0x180] sm:$0xff]
      %v2219 = vld [vmem:[%s283 + $0x188] sm:$0xff]
      %v2220 = vld [vmem:[%s283 + $0x190] sm:$0xff]
      %v2221 = vld [vmem:[%s283 + $0x198] sm:$0xff]
      %v2222 = vld [vmem:[%s283 + $0x1a0] sm:$0xff]
      %v2223 = vld [vmem:[%s283 + $0x1a8] sm:$0xff]
      %v2224 = vld [vmem:[%s283 + $0x1b0] sm:$0xff]
      %v2225 = vld [vmem:[%s283 + $0x1b8] sm:$0xff]
      %v2226 = vld [vmem:[%s283 + $0x1c0] sm:$0xff]
      %v2227 = vld [vmem:[%s283 + $0x1c8] sm:$0xff]
      %v2228 = vld [vmem:[%s283 + $0x1d0] sm:$0xff]
      %v2229 = vld [vmem:[%s283 + $0x1d8] sm:$0xff]
      %v2290 = vunpack.c.l.b16 %v2170
      %v2291 = vunpack.c.h.b16 %v2170
      %v2292 = vunpack.c.l.b16 %v2171
      %v2293 = vunpack.c.h.b16 %v2171
      %v2294 = vunpack.c.l.b16 %v2172
      %v2295 = vunpack.c.h.b16 %v2172
      %v2296 = vunpack.c.l.b16 %v2173
      %v2297 = vunpack.c.h.b16 %v2173
      %v2298 = vunpack.c.l.b16 %v2174
      %v2299 = vunpack.c.h.b16 %v2174
      %v2300 = vunpack.c.l.b16 %v2175
      %v2301 = vunpack.c.h.b16 %v2175
      %v2302 = vunpack.c.l.b16 %v2176
      %v2303 = vunpack.c.h.b16 %v2176
      %v2304 = vunpack.c.l.b16 %v2177
      %v2305 = vunpack.c.h.b16 %v2177
      %v2306 = vunpack.c.l.b16 %v2178
      %v2307 = vunpack.c.h.b16 %v2178
      %v2308 = vunpack.c.l.b16 %v2179
      %v2309 = vunpack.c.h.b16 %v2179
      %v2310 = vunpack.c.l.b16 %v2180
      %v2311 = vunpack.c.h.b16 %v2180
      %v2312 = vunpack.c.l.b16 %v2181
      %v2313 = vunpack.c.h.b16 %v2181
      %v2314 = vunpack.c.l.b16 %v2182
      %v2315 = vunpack.c.h.b16 %v2182
      %v2316 = vunpack.c.l.b16 %v2183
      %v2317 = vunpack.c.h.b16 %v2183
      %v2318 = vunpack.c.l.b16 %v2184
      %v2319 = vunpack.c.h.b16 %v2184
      %v2320 = vunpack.c.l.b16 %v2185
      %v2321 = vunpack.c.h.b16 %v2185
      %v2322 = vunpack.c.l.b16 %v2186
      %v2323 = vunpack.c.h.b16 %v2186
      %v2324 = vunpack.c.l.b16 %v2187
      %v2325 = vunpack.c.h.b16 %v2187
      %v2326 = vunpack.c.l.b16 %v2188
      %v2327 = vunpack.c.h.b16 %v2188
      %v2328 = vunpack.c.l.b16 %v2189
      %v2329 = vunpack.c.h.b16 %v2189
      %v2330 = vunpack.c.l.b16 %v2190
      %v2331 = vunpack.c.h.b16 %v2190
      %v2332 = vunpack.c.l.b16 %v2191
      %v2333 = vunpack.c.h.b16 %v2191
      %v2334 = vunpack.c.l.b16 %v2192
      %v2335 = vunpack.c.h.b16 %v2192
      %v2336 = vunpack.c.l.b16 %v2193
      %v2337 = vunpack.c.h.b16 %v2193
      %v2338 = vunpack.c.l.b16 %v2194
      %v2339 = vunpack.c.h.b16 %v2194
      %v2340 = vunpack.c.l.b16 %v2195
      %v2341 = vunpack.c.h.b16 %v2195
      %v2342 = vunpack.c.l.b16 %v2196
      %v2343 = vunpack.c.h.b16 %v2196
      %v2344 = vunpack.c.l.b16 %v2197
      %v2345 = vunpack.c.h.b16 %v2197
      %v2346 = vunpack.c.l.b16 %v2198
      %v2347 = vunpack.c.h.b16 %v2198
      %v2348 = vunpack.c.l.b16 %v2199
      %v2349 = vunpack.c.h.b16 %v2199
      %v2350 = vunpack.c.l.b16 %v2200
      %v2351 = vunpack.c.h.b16 %v2200
      %v2352 = vunpack.c.l.b16 %v2201
      %v2353 = vunpack.c.h.b16 %v2201
      %v2354 = vunpack.c.l.b16 %v2202
      %v2355 = vunpack.c.h.b16 %v2202
      %v2356 = vunpack.c.l.b16 %v2203
      %v2357 = vunpack.c.h.b16 %v2203
      %v2358 = vunpack.c.l.b16 %v2204
      %v2359 = vunpack.c.h.b16 %v2204
      %v2360 = vunpack.c.l.b16 %v2205
      %v2361 = vunpack.c.h.b16 %v2205
      %v2362 = vunpack.c.l.b16 %v2206
      %v2363 = vunpack.c.h.b16 %v2206
      %v2364 = vunpack.c.l.b16 %v2207
      %v2365 = vunpack.c.h.b16 %v2207
      %v2366 = vunpack.c.l.b16 %v2208
      %v2367 = vunpack.c.h.b16 %v2208
      %v2368 = vunpack.c.l.b16 %v2209
      %v2369 = vunpack.c.h.b16 %v2209
      %v2370 = vunpack.c.l.b16 %v2210
      %v2371 = vunpack.c.h.b16 %v2210
      %v2372 = vunpack.c.l.b16 %v2211
      %v2373 = vunpack.c.h.b16 %v2211
      %v2374 = vunpack.c.l.b16 %v2212
      %v2375 = vunpack.c.h.b16 %v2212
      %v2376 = vunpack.c.l.b16 %v2213
      %v2377 = vunpack.c.h.b16 %v2213
      %v2378 = vunpack.c.l.b16 %v2214
      %v2379 = vunpack.c.h.b16 %v2214
      %v2380 = vunpack.c.l.b16 %v2215
      %v2381 = vunpack.c.h.b16 %v2215
      %v2382 = vunpack.c.l.b16 %v2216
      %v2383 = vunpack.c.h.b16 %v2216
      %v2384 = vunpack.c.l.b16 %v2217
      %v2385 = vunpack.c.h.b16 %v2217
      %v2386 = vunpack.c.l.b16 %v2218
      %v2387 = vunpack.c.h.b16 %v2218
      %v2388 = vunpack.c.l.b16 %v2219
      %v2389 = vunpack.c.h.b16 %v2219
      %v2390 = vunpack.c.l.b16 %v2220
      %v2391 = vunpack.c.h.b16 %v2220
      %v2392 = vunpack.c.l.b16 %v2221
      %v2393 = vunpack.c.h.b16 %v2221
      %v2394 = vunpack.c.l.b16 %v2222
      %v2395 = vunpack.c.h.b16 %v2222
      %v2396 = vunpack.c.l.b16 %v2223
      %v2397 = vunpack.c.h.b16 %v2223
      %v2398 = vunpack.c.l.b16 %v2224
      %v2399 = vunpack.c.h.b16 %v2224
      %v2400 = vunpack.c.l.b16 %v2225
      %v2401 = vunpack.c.h.b16 %v2225
      %v2402 = vunpack.c.l.b16 %v2226
      %v2403 = vunpack.c.h.b16 %v2226
      %v2404 = vunpack.c.l.b16 %v2227
      %v2405 = vunpack.c.h.b16 %v2227
      %v2406 = vunpack.c.l.b16 %v2228
      %v2407 = vunpack.c.h.b16 %v2228
      %v2408 = vunpack.c.l.b16 %v2229
      %v2409 = vunpack.c.h.b16 %v2229
      %v2410 = vpack.c.b16 %v2292, %v2290
      %v2411 = vpack.c.b16 %v2293, %v2291
      %v2412 = vpack.c.b16 %v2296, %v2294
      %v2413 = vpack.c.b16 %v2297, %v2295
      %v2414 = vpack.c.b16 %v2300, %v2298
      %v2415 = vpack.c.b16 %v2301, %v2299
      %v2416 = vpack.c.b16 %v2304, %v2302
      %v2417 = vpack.c.b16 %v2305, %v2303
      %v2418 = vpack.c.b16 %v2308, %v2306
      %v2419 = vpack.c.b16 %v2309, %v2307
      %v2420 = vpack.c.b16 %v2312, %v2310
      %v2421 = vpack.c.b16 %v2313, %v2311
      %v2422 = vpack.c.b16 %v2316, %v2314
      %v2423 = vpack.c.b16 %v2317, %v2315
      %v2424 = vpack.c.b16 %v2320, %v2318
      %v2425 = vpack.c.b16 %v2321, %v2319
      %v2426 = vpack.c.b16 %v2324, %v2322
      %v2427 = vpack.c.b16 %v2325, %v2323
      %v2428 = vpack.c.b16 %v2328, %v2326
      %v2429 = vpack.c.b16 %v2329, %v2327
      %v2430 = vpack.c.b16 %v2332, %v2330
      %v2431 = vpack.c.b16 %v2333, %v2331
      %v2432 = vpack.c.b16 %v2336, %v2334
      %v2433 = vpack.c.b16 %v2337, %v2335
      %v2434 = vpack.c.b16 %v2340, %v2338
      %v2435 = vpack.c.b16 %v2341, %v2339
      %v2436 = vpack.c.b16 %v2344, %v2342
      %v2437 = vpack.c.b16 %v2345, %v2343
      %v2438 = vpack.c.b16 %v2348, %v2346
      %v2439 = vpack.c.b16 %v2349, %v2347
      %v2440 = vpack.c.b16 %v2352, %v2350
      %v2441 = vpack.c.b16 %v2353, %v2351
      %v2442 = vpack.c.b16 %v2356, %v2354
      %v2443 = vpack.c.b16 %v2357, %v2355
      %v2444 = vpack.c.b16 %v2360, %v2358
      %v2445 = vpack.c.b16 %v2361, %v2359
      %v2446 = vpack.c.b16 %v2364, %v2362
      %v2447 = vpack.c.b16 %v2365, %v2363
      %v2448 = vpack.c.b16 %v2368, %v2366
      %v2449 = vpack.c.b16 %v2369, %v2367
      %v2450 = vpack.c.b16 %v2372, %v2370
      %v2451 = vpack.c.b16 %v2373, %v2371
      %v2452 = vpack.c.b16 %v2376, %v2374
      %v2453 = vpack.c.b16 %v2377, %v2375
      %v2454 = vpack.c.b16 %v2380, %v2378
      %v2455 = vpack.c.b16 %v2381, %v2379
      %v2456 = vpack.c.b16 %v2384, %v2382
      %v2457 = vpack.c.b16 %v2385, %v2383
      %v2458 = vpack.c.b16 %v2388, %v2386
      %v2459 = vpack.c.b16 %v2389, %v2387
      %v2460 = vpack.c.b16 %v2392, %v2390
      %v2461 = vpack.c.b16 %v2393, %v2391
      %v2462 = vpack.c.b16 %v2396, %v2394
      %v2463 = vpack.c.b16 %v2397, %v2395
      %v2464 = vpack.c.b16 %v2400, %v2398
      %v2465 = vpack.c.b16 %v2401, %v2399
      %v2466 = vpack.c.b16 %v2404, %v2402
      %v2467 = vpack.c.b16 %v2405, %v2403
      %v2468 = vpack.c.b16 %v2408, %v2406
      %v2469 = vpack.c.b16 %v2409, %v2407
      %v2501 = vsel %vm1159, %v2411, 0
      %v2504 = vsel %vm1159, %v2413, 0
      %v2507 = vsel %vm1159, %v2415, 0
      %v2510 = vsel %vm1159, %v2417, 0
      %v2513 = vsel %vm1159, %v2419, 0
      %v2516 = vsel %vm1159, %v2421, 0
      %v2519 = vsel %vm1159, %v2423, 0
      %v2522 = vsel %vm1159, %v2425, 0
      %v2525 = vsel %vm1159, %v2427, 0
      %v2528 = vsel %vm1159, %v2429, 0
      %v2531 = vsel %vm1159, %v2431, 0
      %v2534 = vsel %vm1159, %v2433, 0
      %v2537 = vsel %vm1159, %v2435, 0
      %v2540 = vsel %vm1159, %v2437, 0
      %v2543 = vsel %vm1159, %v2439, 0
      %v2546 = vsel %vm1159, %v2441, 0
      %v2549 = vsel %vm1159, %v2443, 0
      %v2552 = vsel %vm1159, %v2445, 0
      %v2555 = vsel %vm1159, %v2447, 0
      %v2558 = vsel %vm1159, %v2449, 0
      %v2561 = vsel %vm1159, %v2451, 0
      %v2564 = vsel %vm1159, %v2453, 0
      %v2567 = vsel %vm1159, %v2455, 0
      %v2570 = vsel %vm1159, %v2457, 0
      %v2573 = vsel %vm1159, %v2459, 0
      %v2576 = vsel %vm1159, %v2461, 0
      %v2579 = vsel %vm1159, %v2463, 0
      %v2582 = vsel %vm1159, %v2465, 0
      %v2585 = vsel %vm1159, %v2467, 0
      %v2588 = vsel %vm1159, %v2469, 0
      %2590 = vmatprep.subr.bf16.mxu0 %v2165
      %2591 = vmatpush1.bf16.msra.mxu0 %v2164
      %2592 = vmatprep.subr.bf16.mxu0 %v2163
      %2593 = vmatpush1.bf16.msra.mxu0 %v2162
      %2594 = vmatprep.subr.bf16.mxu0 %v2161
      %2595 = vmatpush1.bf16.msra.mxu0 %v2160
      %2596 = vmatprep.subr.bf16.mxu0 %v2159
      %2597 = vmatpush1.bf16.msra.mxu0 %v2158
      %2598 = vmatprep.subr.bf16.mxu0 %v2157
      %2599 = vmatpush1.bf16.msra.mxu0 %v2156
      %2600 = vmatprep.subr.bf16.mxu0 %v2155
      %2601 = vmatpush1.bf16.msra.mxu0 %v2154
      %2602 = vmatprep.subr.bf16.mxu0 %v2153
      %2603 = vmatpush1.bf16.msra.mxu0 %v2152
      %2604 = vmatprep.subr.bf16.mxu0 %v2151
      %2605 = vmatpush1.bf16.msra.mxu0 %v2150
      %2606 = vmatprep.subr.bf16.mxu0 0
      %2607 = vmatpush2.bf16.msra.mxu0 0
      %2608 = vmatprep.subr.bf16.mxu0 0
      %2609 = vmatpush2.bf16.msra.mxu0 0
      %2610 = vmatprep.subr.bf16.mxu0 0
      %2611 = vmatpush2.bf16.msra.mxu0 0
      %2612 = vmatprep.subr.bf16.mxu0 0
      %2613 = vmatpush2.bf16.msra.mxu0 0
      %2614 = vmatprep.subr.bf16.mxu0 0
      %2615 = vmatpush2.bf16.msra.mxu0 0
      %2616 = vmatprep.subr.bf16.mxu0 0
      %2617 = vmatpush2.bf16.msra.mxu0 0
      %2618 = vmatprep.subr.bf16.mxu0 %v2169
      %2619 = vmatpush2.bf16.msra.mxu0 %v2168
      %2620 = vmatprep.subr.bf16.mxu0 %v2167
      %2621 = vmatpush2.bf16.msra.mxu0 %v2166
      %2622 = vmatprep.mubr.bf16.mxu0 %v2501
      %2623 = vmatmul.mubr.bf16.gmra.mxu0 %v2410
      %v2624 = vpop.f32.mrf.mxu0
      %v2625 = vadd.f32 0.0, %v2624
      %v2626 = vpop.f32.mrf.mxu0
      %v2627 = vadd.f32 0.0, %v2626
      %v2628 = vpop.f32.mrf.mxu0
      %v2629 = vadd.f32 0.0, %v2628
      %v2630 = vpop.f32.mrf.mxu0
      %v2631 = vadd.f32 0.0, %v2630
      %2632 = vmatprep.mubr.bf16.mxu0 %v2504
      %2633 = vmatmul.mubr.bf16.gmra.mxu0 %v2412
      %v2634 = vpop.f32.mrf.mxu0
      %v2635 = vadd.f32 0.0, %v2634
      %v2636 = vpop.f32.mrf.mxu0
      %v2637 = vadd.f32 0.0, %v2636
      %v2638 = vpop.f32.mrf.mxu0
      %v2639 = vadd.f32 0.0, %v2638
      %v2640 = vpop.f32.mrf.mxu0
      %v2641 = vadd.f32 0.0, %v2640
      %2642 = vmatprep.mubr.bf16.mxu0 %v2507
      %2643 = vmatmul.mubr.bf16.gmra.mxu0 %v2414
      %v2644 = vpop.f32.mrf.mxu0
      %v2645 = vadd.f32 0.0, %v2644
      %v2646 = vpop.f32.mrf.mxu0
      %v2647 = vadd.f32 0.0, %v2646
      %v2648 = vpop.f32.mrf.mxu0
      %v2649 = vadd.f32 0.0, %v2648
      %v2650 = vpop.f32.mrf.mxu0
      %v2651 = vadd.f32 0.0, %v2650
      %2652 = vmatprep.mubr.bf16.mxu0 %v2510
      %2653 = vmatmul.mubr.bf16.gmra.mxu0 %v2416
      %v2654 = vpop.f32.mrf.mxu0
      %v2655 = vadd.f32 0.0, %v2654
      %v2656 = vpop.f32.mrf.mxu0
      %v2657 = vadd.f32 0.0, %v2656
      %v2658 = vpop.f32.mrf.mxu0
      %v2659 = vadd.f32 0.0, %v2658
      %v2660 = vpop.f32.mrf.mxu0
      %v2661 = vadd.f32 0.0, %v2660
      %2662 = vmatprep.mubr.bf16.mxu0 %v2513
      %2663 = vmatmul.mubr.bf16.gmra.mxu0 %v2418
      %v2664 = vpop.f32.mrf.mxu0
      %v2665 = vadd.f32 0.0, %v2664
      %v2666 = vpop.f32.mrf.mxu0
      %v2667 = vadd.f32 0.0, %v2666
      %v2668 = vpop.f32.mrf.mxu0
      %v2669 = vadd.f32 0.0, %v2668
      %v2670 = vpop.f32.mrf.mxu0
      %v2671 = vadd.f32 0.0, %v2670
      %2672 = vmatprep.mubr.bf16.mxu0 %v2516
      %2673 = vmatmul.mubr.bf16.gmra.mxu0 %v2420
      %v2674 = vpop.f32.mrf.mxu0
      %v2675 = vadd.f32 0.0, %v2674
      %v2676 = vpop.f32.mrf.mxu0
      %v2677 = vadd.f32 0.0, %v2676
      %v2678 = vpop.f32.mrf.mxu0
      %v2679 = vadd.f32 0.0, %v2678
      %v2680 = vpop.f32.mrf.mxu0
      %v2681 = vadd.f32 0.0, %v2680
      %2682 = vmatprep.mubr.bf16.mxu0 %v2519
      %2683 = vmatmul.mubr.bf16.gmra.mxu0 %v2422
      %v2684 = vpop.f32.mrf.mxu0
      %v2685 = vadd.f32 0.0, %v2684
      %v2686 = vpop.f32.mrf.mxu0
      %v2687 = vadd.f32 0.0, %v2686
      %v2688 = vpop.f32.mrf.mxu0
      %v2689 = vadd.f32 0.0, %v2688
      %v2690 = vpop.f32.mrf.mxu0
      %v2691 = vadd.f32 0.0, %v2690
      %2692 = vmatprep.mubr.bf16.mxu0 %v2522
      %2693 = vmatmul.mubr.bf16.gmra.mxu0 %v2424
      %v2694 = vpop.f32.mrf.mxu0
      %v2695 = vadd.f32 0.0, %v2694
      %v2696 = vpop.f32.mrf.mxu0
      %v2697 = vadd.f32 0.0, %v2696
      %v2698 = vpop.f32.mrf.mxu0
      %v2699 = vadd.f32 0.0, %v2698
      %v2700 = vpop.f32.mrf.mxu0
      %v2701 = vadd.f32 0.0, %v2700
      %2702 = vmatprep.mubr.bf16.mxu0 %v2525
      %2703 = vmatmul.mubr.bf16.gmra.mxu0 %v2426
      %v2704 = vpop.f32.mrf.mxu0
      %v2705 = vadd.f32 0.0, %v2704
      %v2706 = vpop.f32.mrf.mxu0
      %v2707 = vadd.f32 0.0, %v2706
      %v2708 = vpop.f32.mrf.mxu0
      %v2709 = vadd.f32 0.0, %v2708
      %v2710 = vpop.f32.mrf.mxu0
      %v2711 = vadd.f32 0.0, %v2710
      %2712 = vmatprep.mubr.bf16.mxu0 %v2528
      %2713 = vmatmul.mubr.bf16.gmra.mxu0 %v2428
      %v2714 = vpop.f32.mrf.mxu0
      %v2715 = vadd.f32 0.0, %v2714
      %v2716 = vpop.f32.mrf.mxu0
      %v2717 = vadd.f32 0.0, %v2716
      %v2718 = vpop.f32.mrf.mxu0
      %v2719 = vadd.f32 0.0, %v2718
      %v2720 = vpop.f32.mrf.mxu0
      %v2721 = vadd.f32 0.0, %v2720
      %2722 = vmatprep.mubr.bf16.mxu0 %v2531
      %2723 = vmatmul.mubr.bf16.gmra.mxu0 %v2430
      %v2724 = vpop.f32.mrf.mxu0
      %v2725 = vadd.f32 0.0, %v2724
      %v2726 = vpop.f32.mrf.mxu0
      %v2727 = vadd.f32 0.0, %v2726
      %v2728 = vpop.f32.mrf.mxu0
      %v2729 = vadd.f32 0.0, %v2728
      %v2730 = vpop.f32.mrf.mxu0
      %v2731 = vadd.f32 0.0, %v2730
      %2732 = vmatprep.mubr.bf16.mxu0 %v2534
      %2733 = vmatmul.mubr.bf16.gmra.mxu0 %v2432
      %v2734 = vpop.f32.mrf.mxu0
      %v2735 = vadd.f32 0.0, %v2734
      %v2736 = vpop.f32.mrf.mxu0
      %v2737 = vadd.f32 0.0, %v2736
      %v2738 = vpop.f32.mrf.mxu0
      %v2739 = vadd.f32 0.0, %v2738
      %v2740 = vpop.f32.mrf.mxu0
      %v2741 = vadd.f32 0.0, %v2740
      %2742 = vmatprep.mubr.bf16.mxu0 %v2537
      %2743 = vmatmul.mubr.bf16.gmra.mxu0 %v2434
      %v2744 = vpop.f32.mrf.mxu0
      %v2745 = vadd.f32 0.0, %v2744
      %v2746 = vpop.f32.mrf.mxu0
      %v2747 = vadd.f32 0.0, %v2746
      %v2748 = vpop.f32.mrf.mxu0
      %v2749 = vadd.f32 0.0, %v2748
      %v2750 = vpop.f32.mrf.mxu0
      %v2751 = vadd.f32 0.0, %v2750
      %2752 = vmatprep.mubr.bf16.mxu0 %v2540
      %2753 = vmatmul.mubr.bf16.gmra.mxu0 %v2436
      %v2754 = vpop.f32.mrf.mxu0
      %v2755 = vadd.f32 0.0, %v2754
      %v2756 = vpop.f32.mrf.mxu0
      %v2757 = vadd.f32 0.0, %v2756
      %v2758 = vpop.f32.mrf.mxu0
      %v2759 = vadd.f32 0.0, %v2758
      %v2760 = vpop.f32.mrf.mxu0
      %v2761 = vadd.f32 0.0, %v2760
      %2762 = vmatprep.mubr.bf16.mxu0 %v2543
      %2763 = vmatmul.mubr.bf16.gmra.mxu0 %v2438
      %v2764 = vpop.f32.mrf.mxu0
      %v2765 = vadd.f32 0.0, %v2764
      %v2766 = vpop.f32.mrf.mxu0
      %v2767 = vadd.f32 0.0, %v2766
      %v2768 = vpop.f32.mrf.mxu0
      %v2769 = vadd.f32 0.0, %v2768
      %v2770 = vpop.f32.mrf.mxu0
      %v2771 = vadd.f32 0.0, %v2770
      %2772 = vmatprep.mubr.bf16.mxu0 %v2546
      %2773 = vmatmul.mubr.bf16.gmra.mxu0 %v2440
      %v2774 = vpop.f32.mrf.mxu0
      %v2775 = vadd.f32 0.0, %v2774
      %v2776 = vpop.f32.mrf.mxu0
      %v2777 = vadd.f32 0.0, %v2776
      %v2778 = vpop.f32.mrf.mxu0
      %v2779 = vadd.f32 0.0, %v2778
      %v2780 = vpop.f32.mrf.mxu0
      %v2781 = vadd.f32 0.0, %v2780
      %2782 = vmatprep.mubr.bf16.mxu0 %v2549
      %2783 = vmatmul.mubr.bf16.gmra.mxu0 %v2442
      %v2784 = vpop.f32.mrf.mxu0
      %v2785 = vadd.f32 0.0, %v2784
      %v2786 = vpop.f32.mrf.mxu0
      %v2787 = vadd.f32 0.0, %v2786
      %v2788 = vpop.f32.mrf.mxu0
      %v2789 = vadd.f32 0.0, %v2788
      %v2790 = vpop.f32.mrf.mxu0
      %v2791 = vadd.f32 0.0, %v2790
      %2792 = vmatprep.mubr.bf16.mxu0 %v2552
      %2793 = vmatmul.mubr.bf16.gmra.mxu0 %v2444
      %v2794 = vpop.f32.mrf.mxu0
      %v2795 = vadd.f32 0.0, %v2794
      %v2796 = vpop.f32.mrf.mxu0
      %v2797 = vadd.f32 0.0, %v2796
      %v2798 = vpop.f32.mrf.mxu0
      %v2799 = vadd.f32 0.0, %v2798
      %v2800 = vpop.f32.mrf.mxu0
      %v2801 = vadd.f32 0.0, %v2800
      %2802 = vmatprep.mubr.bf16.mxu0 %v2555
      %2803 = vmatmul.mubr.bf16.gmra.mxu0 %v2446
      %v2804 = vpop.f32.mrf.mxu0
      %v2805 = vadd.f32 0.0, %v2804
      %v2806 = vpop.f32.mrf.mxu0
      %v2807 = vadd.f32 0.0, %v2806
      %v2808 = vpop.f32.mrf.mxu0
      %v2809 = vadd.f32 0.0, %v2808
      %v2810 = vpop.f32.mrf.mxu0
      %v2811 = vadd.f32 0.0, %v2810
      %2812 = vmatprep.mubr.bf16.mxu0 %v2558
      %2813 = vmatmul.mubr.bf16.gmra.mxu0 %v2448
      %v2814 = vpop.f32.mrf.mxu0
      %v2815 = vadd.f32 0.0, %v2814
      %v2816 = vpop.f32.mrf.mxu0
      %v2817 = vadd.f32 0.0, %v2816
      %v2818 = vpop.f32.mrf.mxu0
      %v2819 = vadd.f32 0.0, %v2818
      %v2820 = vpop.f32.mrf.mxu0
      %v2821 = vadd.f32 0.0, %v2820
      %2822 = vmatprep.mubr.bf16.mxu0 %v2561
      %2823 = vmatmul.mubr.bf16.gmra.mxu0 %v2450
      %v2824 = vpop.f32.mrf.mxu0
      %v2825 = vadd.f32 0.0, %v2824
      %v2826 = vpop.f32.mrf.mxu0
      %v2827 = vadd.f32 0.0, %v2826
      %v2828 = vpop.f32.mrf.mxu0
      %v2829 = vadd.f32 0.0, %v2828
      %v2830 = vpop.f32.mrf.mxu0
      %v2831 = vadd.f32 0.0, %v2830
      %2832 = vmatprep.mubr.bf16.mxu0 %v2564
      %2833 = vmatmul.mubr.bf16.gmra.mxu0 %v2452
      %v2834 = vpop.f32.mrf.mxu0
      %v2835 = vadd.f32 0.0, %v2834
      %v2836 = vpop.f32.mrf.mxu0
      %v2837 = vadd.f32 0.0, %v2836
      %v2838 = vpop.f32.mrf.mxu0
      %v2839 = vadd.f32 0.0, %v2838
      %v2840 = vpop.f32.mrf.mxu0
      %v2841 = vadd.f32 0.0, %v2840
      %2842 = vmatprep.mubr.bf16.mxu0 %v2567
      %2843 = vmatmul.mubr.bf16.gmra.mxu0 %v2454
      %v2844 = vpop.f32.mrf.mxu0
      %v2845 = vadd.f32 0.0, %v2844
      %v2846 = vpop.f32.mrf.mxu0
      %v2847 = vadd.f32 0.0, %v2846
      %v2848 = vpop.f32.mrf.mxu0
      %v2849 = vadd.f32 0.0, %v2848
      %v2850 = vpop.f32.mrf.mxu0
      %v2851 = vadd.f32 0.0, %v2850
      %2852 = vmatprep.mubr.bf16.mxu0 %v2570
      %2853 = vmatmul.mubr.bf16.gmra.mxu0 %v2456
      %v2854 = vpop.f32.mrf.mxu0
      %v2855 = vadd.f32 0.0, %v2854
      %v2856 = vpop.f32.mrf.mxu0
      %v2857 = vadd.f32 0.0, %v2856
      %v2858 = vpop.f32.mrf.mxu0
      %v2859 = vadd.f32 0.0, %v2858
      %v2860 = vpop.f32.mrf.mxu0
      %v2861 = vadd.f32 0.0, %v2860
      %2862 = vmatprep.mubr.bf16.mxu0 %v2573
      %2863 = vmatmul.mubr.bf16.gmra.mxu0 %v2458
      %v2864 = vpop.f32.mrf.mxu0
      %v2865 = vadd.f32 0.0, %v2864
      %v2866 = vpop.f32.mrf.mxu0
      %v2867 = vadd.f32 0.0, %v2866
      %v2868 = vpop.f32.mrf.mxu0
      %v2869 = vadd.f32 0.0, %v2868
      %v2870 = vpop.f32.mrf.mxu0
      %v2871 = vadd.f32 0.0, %v2870
      %2872 = vmatprep.mubr.bf16.mxu0 %v2576
      %2873 = vmatmul.mubr.bf16.gmra.mxu0 %v2460
      %v2874 = vpop.f32.mrf.mxu0
      %v2875 = vadd.f32 0.0, %v2874
      %v2876 = vpop.f32.mrf.mxu0
      %v2877 = vadd.f32 0.0, %v2876
      %v2878 = vpop.f32.mrf.mxu0
      %v2879 = vadd.f32 0.0, %v2878
      %v2880 = vpop.f32.mrf.mxu0
      %v2881 = vadd.f32 0.0, %v2880
      %2882 = vmatprep.mubr.bf16.mxu0 %v2579
      %2883 = vmatmul.mubr.bf16.gmra.mxu0 %v2462
      %v2884 = vpop.f32.mrf.mxu0
      %v2885 = vadd.f32 0.0, %v2884
      %v2886 = vpop.f32.mrf.mxu0
      %v2887 = vadd.f32 0.0, %v2886
      %v2888 = vpop.f32.mrf.mxu0
      %v2889 = vadd.f32 0.0, %v2888
      %v2890 = vpop.f32.mrf.mxu0
      %v2891 = vadd.f32 0.0, %v2890
      %2892 = vmatprep.mubr.bf16.mxu0 %v2582
      %2893 = vmatmul.mubr.bf16.gmra.mxu0 %v2464
      %v2894 = vpop.f32.mrf.mxu0
      %v2895 = vadd.f32 0.0, %v2894
      %v2896 = vpop.f32.mrf.mxu0
      %v2897 = vadd.f32 0.0, %v2896
      %v2898 = vpop.f32.mrf.mxu0
      %v2899 = vadd.f32 0.0, %v2898
      %v2900 = vpop.f32.mrf.mxu0
      %v2901 = vadd.f32 0.0, %v2900
      %2902 = vmatprep.mubr.bf16.mxu0 %v2585
      %2903 = vmatmul.mubr.bf16.gmra.mxu0 %v2466
      %v2904 = vpop.f32.mrf.mxu0
      %v2905 = vadd.f32 0.0, %v2904
      %v2906 = vpop.f32.mrf.mxu0
      %v2907 = vadd.f32 0.0, %v2906
      %v2908 = vpop.f32.mrf.mxu0
      %v2909 = vadd.f32 0.0, %v2908
      %v2910 = vpop.f32.mrf.mxu0
      %v2911 = vadd.f32 0.0, %v2910
      %2912 = vmatprep.mubr.bf16.mxu0 %v2588
      %2913 = vmatmul.mubr.bf16.gmra.mxu0 %v2468
      %v2914 = vpop.f32.mrf.mxu0
      %v2915 = vadd.f32 0.0, %v2914
      %v2916 = vpop.f32.mrf.mxu0
      %v2917 = vadd.f32 0.0, %v2916
      %v2918 = vpop.f32.mrf.mxu0
      %v2919 = vadd.f32 0.0, %v2918
      %v2920 = vpop.f32.mrf.mxu0
      %v2921 = vadd.f32 0.0, %v2920
      %2922 = vdwg.mxu0
      %v2923 = vmul.f32 %v2625, %v2625
      %v2924 = vmul.f32 %v2627, %v2627
      %v2925 = vmul.f32 %v2629, %v2629
      %v2926 = vmul.f32 %v2631, %v2631
      %v2927 = vmul.f32 %v2635, %v2635
      %v2928 = vmul.f32 %v2637, %v2637
      %v2929 = vmul.f32 %v2639, %v2639
      %v2930 = vmul.f32 %v2641, %v2641
      %v2931 = vmul.f32 %v2645, %v2645
      %v2932 = vmul.f32 %v2647, %v2647
      %v2933 = vmul.f32 %v2649, %v2649
      %v2934 = vmul.f32 %v2651, %v2651
      %v2935 = vmul.f32 %v2655, %v2655
      %v2936 = vmul.f32 %v2657, %v2657
      %v2937 = vmul.f32 %v2659, %v2659
      %v2938 = vmul.f32 %v2661, %v2661
      %v2939 = vmul.f32 %v2665, %v2665
      %v2940 = vmul.f32 %v2667, %v2667
      %v2941 = vmul.f32 %v2669, %v2669
      %v2942 = vmul.f32 %v2671, %v2671
      %v2943 = vmul.f32 %v2675, %v2675
      %v2944 = vmul.f32 %v2677, %v2677
      %v2945 = vmul.f32 %v2679, %v2679
      %v2946 = vmul.f32 %v2681, %v2681
      %v2947 = vmul.f32 %v2685, %v2685
      %v2948 = vmul.f32 %v2687, %v2687
      %v2949 = vmul.f32 %v2689, %v2689
      %v2950 = vmul.f32 %v2691, %v2691
      %v2951 = vmul.f32 %v2695, %v2695
      %v2952 = vmul.f32 %v2697, %v2697
      %v2953 = vmul.f32 %v2699, %v2699
      %v2954 = vmul.f32 %v2701, %v2701
      %v2955 = vmul.f32 %v2705, %v2705
      %v2956 = vmul.f32 %v2707, %v2707
      %v2957 = vmul.f32 %v2709, %v2709
      %v2958 = vmul.f32 %v2711, %v2711
      %v2959 = vmul.f32 %v2715, %v2715
      %v2960 = vmul.f32 %v2717, %v2717
      %v2961 = vmul.f32 %v2719, %v2719
      %v2962 = vmul.f32 %v2721, %v2721
      %v2963 = vmul.f32 %v2725, %v2725
      %v2964 = vmul.f32 %v2727, %v2727
      %v2965 = vmul.f32 %v2729, %v2729
      %v2966 = vmul.f32 %v2731, %v2731
      %v2967 = vmul.f32 %v2735, %v2735
      %v2968 = vmul.f32 %v2737, %v2737
      %v2969 = vmul.f32 %v2739, %v2739
      %v2970 = vmul.f32 %v2741, %v2741
      %v2971 = vmul.f32 %v2745, %v2745
      %v2972 = vmul.f32 %v2747, %v2747
      %v2973 = vmul.f32 %v2749, %v2749
      %v2974 = vmul.f32 %v2751, %v2751
      %v2975 = vmul.f32 %v2755, %v2755
      %v2976 = vmul.f32 %v2757, %v2757
      %v2977 = vmul.f32 %v2759, %v2759
      %v2978 = vmul.f32 %v2761, %v2761
      %v2979 = vmul.f32 %v2765, %v2765
      %v2980 = vmul.f32 %v2767, %v2767
      %v2981 = vmul.f32 %v2769, %v2769
      %v2982 = vmul.f32 %v2771, %v2771
      %v2983 = vmul.f32 %v2775, %v2775
      %v2984 = vmul.f32 %v2777, %v2777
      %v2985 = vmul.f32 %v2779, %v2779
      %v2986 = vmul.f32 %v2781, %v2781
      %v2987 = vmul.f32 %v2785, %v2785
      %v2988 = vmul.f32 %v2787, %v2787
      %v2989 = vmul.f32 %v2789, %v2789
      %v2990 = vmul.f32 %v2791, %v2791
      %v2991 = vmul.f32 %v2795, %v2795
      %v2992 = vmul.f32 %v2797, %v2797
      %v2993 = vmul.f32 %v2799, %v2799
      %v2994 = vmul.f32 %v2801, %v2801
      %v2995 = vmul.f32 %v2805, %v2805
      %v2996 = vmul.f32 %v2807, %v2807
      %v2997 = vmul.f32 %v2809, %v2809
      %v2998 = vmul.f32 %v2811, %v2811
      %v2999 = vmul.f32 %v2815, %v2815
      %v3000 = vmul.f32 %v2817, %v2817
      %v3001 = vmul.f32 %v2819, %v2819
      %v3002 = vmul.f32 %v2821, %v2821
      %v3003 = vmul.f32 %v2825, %v2825
      %v3004 = vmul.f32 %v2827, %v2827
      %v3005 = vmul.f32 %v2829, %v2829
      %v3006 = vmul.f32 %v2831, %v2831
      %v3007 = vmul.f32 %v2835, %v2835
      %v3008 = vmul.f32 %v2837, %v2837
      %v3009 = vmul.f32 %v2839, %v2839
      %v3010 = vmul.f32 %v2841, %v2841
      %v3011 = vmul.f32 %v2845, %v2845
      %v3012 = vmul.f32 %v2847, %v2847
      %v3013 = vmul.f32 %v2849, %v2849
      %v3014 = vmul.f32 %v2851, %v2851
      %v3015 = vmul.f32 %v2855, %v2855
      %v3016 = vmul.f32 %v2857, %v2857
      %v3017 = vmul.f32 %v2859, %v2859
      %v3018 = vmul.f32 %v2861, %v2861
      %v3019 = vmul.f32 %v2865, %v2865
      %v3020 = vmul.f32 %v2867, %v2867
      %v3021 = vmul.f32 %v2869, %v2869
      %v3022 = vmul.f32 %v2871, %v2871
      %v3023 = vmul.f32 %v2875, %v2875
      %v3024 = vmul.f32 %v2877, %v2877
      %v3025 = vmul.f32 %v2879, %v2879
      %v3026 = vmul.f32 %v2881, %v2881
      %v3027 = vmul.f32 %v2885, %v2885
      %v3028 = vmul.f32 %v2887, %v2887
      %v3029 = vmul.f32 %v2889, %v2889
      %v3030 = vmul.f32 %v2891, %v2891
      %v3031 = vmul.f32 %v2895, %v2895
      %v3032 = vmul.f32 %v2897, %v2897
      %v3033 = vmul.f32 %v2899, %v2899
      %v3034 = vmul.f32 %v2901, %v2901
      %v3035 = vmul.f32 %v2905, %v2905
      %v3036 = vmul.f32 %v2907, %v2907
      %v3037 = vmul.f32 %v2909, %v2909
      %v3038 = vmul.f32 %v2911, %v2911
      %v3039 = vmul.f32 %v2915, %v2915
      %v3040 = vmul.f32 %v2917, %v2917
      %v3041 = vmul.f32 %v2919, %v2919
      %v3042 = vmul.f32 %v2921, %v2921
      %v3043 = vsel %vm1589, %v2924, 0.0
      %v3044 = vadd.f32 %v2923, %v3043
      %3045 = vadd.xlane.f32.xlu0 %v3044
      %v3046 = vpop.xlane.xlu0 %3045
      %v3047 = vsel %vm1589, %v2926, 0.0
      %v3048 = vadd.f32 %v2925, %v3047
      %3049 = vadd.xlane.f32.xlu0 %v3048
      %v3050 = vpop.xlane.xlu0 %3049
      %v3051 = vsel %vm1589, %v2928, 0.0
      %v3052 = vadd.f32 %v2927, %v3051
      %3053 = vadd.xlane.f32.xlu0 %v3052
      %v3054 = vpop.xlane.xlu0 %3053
      %v3055 = vsel %vm1589, %v2930, 0.0
      %v3056 = vadd.f32 %v2929, %v3055
      %3057 = vadd.xlane.f32.xlu0 %v3056
      %v3058 = vpop.xlane.xlu0 %3057
      %v3059 = vsel %vm1589, %v2932, 0.0
      %v3060 = vadd.f32 %v2931, %v3059
      %3061 = vadd.xlane.f32.xlu0 %v3060
      %v3062 = vpop.xlane.xlu0 %3061
      %v3063 = vsel %vm1589, %v2934, 0.0
      %v3064 = vadd.f32 %v2933, %v3063
      %3065 = vadd.xlane.f32.xlu0 %v3064
      %v3066 = vpop.xlane.xlu0 %3065
      %v3067 = vsel %vm1589, %v2936, 0.0
      %v3068 = vadd.f32 %v2935, %v3067
      %3069 = vadd.xlane.f32.xlu0 %v3068
      %v3070 = vpop.xlane.xlu0 %3069
      %v3071 = vsel %vm1589, %v2938, 0.0
      %v3072 = vadd.f32 %v2937, %v3071
      %3073 = vadd.xlane.f32.xlu0 %v3072
      %v3074 = vpop.xlane.xlu0 %3073
      %v3075 = vsel %vm1589, %v2940, 0.0
      %v3076 = vadd.f32 %v2939, %v3075
      %3077 = vadd.xlane.f32.xlu0 %v3076
      %v3078 = vpop.xlane.xlu0 %3077
      %v3079 = vsel %vm1589, %v2942, 0.0
      %v3080 = vadd.f32 %v2941, %v3079
      %3081 = vadd.xlane.f32.xlu0 %v3080
      %v3082 = vpop.xlane.xlu0 %3081
      %v3083 = vsel %vm1589, %v2944, 0.0
      %v3084 = vadd.f32 %v2943, %v3083
      %3085 = vadd.xlane.f32.xlu0 %v3084
      %v3086 = vpop.xlane.xlu0 %3085
      %v3087 = vsel %vm1589, %v2946, 0.0
      %v3088 = vadd.f32 %v2945, %v3087
      %3089 = vadd.xlane.f32.xlu0 %v3088
      %v3090 = vpop.xlane.xlu0 %3089
      %v3091 = vsel %vm1589, %v2948, 0.0
      %v3092 = vadd.f32 %v2947, %v3091
      %3093 = vadd.xlane.f32.xlu0 %v3092
      %v3094 = vpop.xlane.xlu0 %3093
      %v3095 = vsel %vm1589, %v2950, 0.0
      %v3096 = vadd.f32 %v2949, %v3095
      %3097 = vadd.xlane.f32.xlu0 %v3096
      %v3098 = vpop.xlane.xlu0 %3097
      %v3099 = vsel %vm1589, %v2952, 0.0
      %v3100 = vadd.f32 %v2951, %v3099
      %3101 = vadd.xlane.f32.xlu0 %v3100
      %v3102 = vpop.xlane.xlu0 %3101
      %v3103 = vsel %vm1589, %v2954, 0.0
      %v3104 = vadd.f32 %v2953, %v3103
      %3105 = vadd.xlane.f32.xlu0 %v3104
      %v3106 = vpop.xlane.xlu0 %3105
      %v3107 = vsel %vm1589, %v2956, 0.0
      %v3108 = vadd.f32 %v2955, %v3107
      %3109 = vadd.xlane.f32.xlu0 %v3108
      %v3110 = vpop.xlane.xlu0 %3109
      %v3111 = vsel %vm1589, %v2958, 0.0
      %v3112 = vadd.f32 %v2957, %v3111
      %3113 = vadd.xlane.f32.xlu0 %v3112
      %v3114 = vpop.xlane.xlu0 %3113
      %v3115 = vsel %vm1589, %v2960, 0.0
      %v3116 = vadd.f32 %v2959, %v3115
      %3117 = vadd.xlane.f32.xlu0 %v3116
      %v3118 = vpop.xlane.xlu0 %3117
      %v3119 = vsel %vm1589, %v2962, 0.0
      %v3120 = vadd.f32 %v2961, %v3119
      %3121 = vadd.xlane.f32.xlu0 %v3120
      %v3122 = vpop.xlane.xlu0 %3121
      %v3123 = vsel %vm1589, %v2964, 0.0
      %v3124 = vadd.f32 %v2963, %v3123
      %3125 = vadd.xlane.f32.xlu0 %v3124
      %v3126 = vpop.xlane.xlu0 %3125
      %v3127 = vsel %vm1589, %v2966, 0.0
      %v3128 = vadd.f32 %v2965, %v3127
      %3129 = vadd.xlane.f32.xlu0 %v3128
      %v3130 = vpop.xlane.xlu0 %3129
      %v3131 = vsel %vm1589, %v2968, 0.0
      %v3132 = vadd.f32 %v2967, %v3131
      %3133 = vadd.xlane.f32.xlu0 %v3132
      %v3134 = vpop.xlane.xlu0 %3133
      %v3135 = vsel %vm1589, %v2970, 0.0
      %v3136 = vadd.f32 %v2969, %v3135
      %3137 = vadd.xlane.f32.xlu0 %v3136
      %v3138 = vpop.xlane.xlu0 %3137
      %v3139 = vsel %vm1589, %v2972, 0.0
      %v3140 = vadd.f32 %v2971, %v3139
      %3141 = vadd.xlane.f32.xlu0 %v3140
      %v3142 = vpop.xlane.xlu0 %3141
      %v3143 = vsel %vm1589, %v2974, 0.0
      %v3144 = vadd.f32 %v2973, %v3143
      %3145 = vadd.xlane.f32.xlu0 %v3144
      %v3146 = vpop.xlane.xlu0 %3145
      %v3147 = vsel %vm1589, %v2976, 0.0
      %v3148 = vadd.f32 %v2975, %v3147
      %3149 = vadd.xlane.f32.xlu0 %v3148
      %v3150 = vpop.xlane.xlu0 %3149
      %v3151 = vsel %vm1589, %v2978, 0.0
      %v3152 = vadd.f32 %v2977, %v3151
      %3153 = vadd.xlane.f32.xlu0 %v3152
      %v3154 = vpop.xlane.xlu0 %3153
      %v3155 = vsel %vm1589, %v2980, 0.0
      %v3156 = vadd.f32 %v2979, %v3155
      %3157 = vadd.xlane.f32.xlu0 %v3156
      %v3158 = vpop.xlane.xlu0 %3157
      %v3159 = vsel %vm1589, %v2982, 0.0
      %v3160 = vadd.f32 %v2981, %v3159
      %3161 = vadd.xlane.f32.xlu0 %v3160
      %v3162 = vpop.xlane.xlu0 %3161
      %v3163 = vsel %vm1589, %v2984, 0.0
      %v3164 = vadd.f32 %v2983, %v3163
      %3165 = vadd.xlane.f32.xlu0 %v3164
      %v3166 = vpop.xlane.xlu0 %3165
      %v3167 = vsel %vm1589, %v2986, 0.0
      %v3168 = vadd.f32 %v2985, %v3167
      %3169 = vadd.xlane.f32.xlu0 %v3168
      %v3170 = vpop.xlane.xlu0 %3169
      %v3171 = vsel %vm1589, %v2988, 0.0
      %v3172 = vadd.f32 %v2987, %v3171
      %3173 = vadd.xlane.f32.xlu0 %v3172
      %v3174 = vpop.xlane.xlu0 %3173
      %v3175 = vsel %vm1589, %v2990, 0.0
      %v3176 = vadd.f32 %v2989, %v3175
      %3177 = vadd.xlane.f32.xlu0 %v3176
      %v3178 = vpop.xlane.xlu0 %3177
      %v3179 = vsel %vm1589, %v2992, 0.0
      %v3180 = vadd.f32 %v2991, %v3179
      %3181 = vadd.xlane.f32.xlu0 %v3180
      %v3182 = vpop.xlane.xlu0 %3181
      %v3183 = vsel %vm1589, %v2994, 0.0
      %v3184 = vadd.f32 %v2993, %v3183
      %3185 = vadd.xlane.f32.xlu0 %v3184
      %v3186 = vpop.xlane.xlu0 %3185
      %v3187 = vsel %vm1589, %v2996, 0.0
      %v3188 = vadd.f32 %v2995, %v3187
      %3189 = vadd.xlane.f32.xlu0 %v3188
      %v3190 = vpop.xlane.xlu0 %3189
      %v3191 = vsel %vm1589, %v2998, 0.0
      %v3192 = vadd.f32 %v2997, %v3191
      %3193 = vadd.xlane.f32.xlu0 %v3192
      %v3194 = vpop.xlane.xlu0 %3193
      %v3195 = vsel %vm1589, %v3000, 0.0
      %v3196 = vadd.f32 %v2999, %v3195
      %3197 = vadd.xlane.f32.xlu0 %v3196
      %v3198 = vpop.xlane.xlu0 %3197
      %v3199 = vsel %vm1589, %v3002, 0.0
      %v3200 = vadd.f32 %v3001, %v3199
      %3201 = vadd.xlane.f32.xlu0 %v3200
      %v3202 = vpop.xlane.xlu0 %3201
      %v3203 = vsel %vm1589, %v3004, 0.0
      %v3204 = vadd.f32 %v3003, %v3203
      %3205 = vadd.xlane.f32.xlu0 %v3204
      %v3206 = vpop.xlane.xlu0 %3205
      %v3207 = vsel %vm1589, %v3006, 0.0
      %v3208 = vadd.f32 %v3005, %v3207
      %3209 = vadd.xlane.f32.xlu0 %v3208
      %v3210 = vpop.xlane.xlu0 %3209
      %v3211 = vsel %vm1589, %v3008, 0.0
      %v3212 = vadd.f32 %v3007, %v3211
      %3213 = vadd.xlane.f32.xlu0 %v3212
      %v3214 = vpop.xlane.xlu0 %3213
      %v3215 = vsel %vm1589, %v3010, 0.0
      %v3216 = vadd.f32 %v3009, %v3215
      %3217 = vadd.xlane.f32.xlu0 %v3216
      %v3218 = vpop.xlane.xlu0 %3217
      %v3219 = vsel %vm1589, %v3012, 0.0
      %v3220 = vadd.f32 %v3011, %v3219
      %3221 = vadd.xlane.f32.xlu0 %v3220
      %v3222 = vpop.xlane.xlu0 %3221
      %v3223 = vsel %vm1589, %v3014, 0.0
      %v3224 = vadd.f32 %v3013, %v3223
      %3225 = vadd.xlane.f32.xlu0 %v3224
      %v3226 = vpop.xlane.xlu0 %3225
      %v3227 = vsel %vm1589, %v3016, 0.0
      %v3228 = vadd.f32 %v3015, %v3227
      %3229 = vadd.xlane.f32.xlu0 %v3228
      %v3230 = vpop.xlane.xlu0 %3229
      %v3231 = vsel %vm1589, %v3018, 0.0
      %v3232 = vadd.f32 %v3017, %v3231
      %3233 = vadd.xlane.f32.xlu0 %v3232
      %v3234 = vpop.xlane.xlu0 %3233
      %v3235 = vsel %vm1589, %v3020, 0.0
      %v3236 = vadd.f32 %v3019, %v3235
      %3237 = vadd.xlane.f32.xlu0 %v3236
      %v3238 = vpop.xlane.xlu0 %3237
      %v3239 = vsel %vm1589, %v3022, 0.0
      %v3240 = vadd.f32 %v3021, %v3239
      %3241 = vadd.xlane.f32.xlu0 %v3240
      %v3242 = vpop.xlane.xlu0 %3241
      %v3243 = vsel %vm1589, %v3024, 0.0
      %v3244 = vadd.f32 %v3023, %v3243
      %3245 = vadd.xlane.f32.xlu0 %v3244
      %v3246 = vpop.xlane.xlu0 %3245
      %v3247 = vsel %vm1589, %v3026, 0.0
      %v3248 = vadd.f32 %v3025, %v3247
      %3249 = vadd.xlane.f32.xlu0 %v3248
      %v3250 = vpop.xlane.xlu0 %3249
      %v3251 = vsel %vm1589, %v3028, 0.0
      %v3252 = vadd.f32 %v3027, %v3251
      %3253 = vadd.xlane.f32.xlu0 %v3252
      %v3254 = vpop.xlane.xlu0 %3253
      %v3255 = vsel %vm1589, %v3030, 0.0
      %v3256 = vadd.f32 %v3029, %v3255
      %3257 = vadd.xlane.f32.xlu0 %v3256
      %v3258 = vpop.xlane.xlu0 %3257
      %v3259 = vsel %vm1589, %v3032, 0.0
      %v3260 = vadd.f32 %v3031, %v3259
      %3261 = vadd.xlane.f32.xlu0 %v3260
      %v3262 = vpop.xlane.xlu0 %3261
      %v3263 = vsel %vm1589, %v3034, 0.0
      %v3264 = vadd.f32 %v3033, %v3263
      %3265 = vadd.xlane.f32.xlu0 %v3264
      %v3266 = vpop.xlane.xlu0 %3265
      %v3267 = vsel %vm1589, %v3036, 0.0
      %v3268 = vadd.f32 %v3035, %v3267
      %3269 = vadd.xlane.f32.xlu0 %v3268
      %v3270 = vpop.xlane.xlu0 %3269
      %v3271 = vsel %vm1589, %v3038, 0.0
      %v3272 = vadd.f32 %v3037, %v3271
      %3273 = vadd.xlane.f32.xlu0 %v3272
      %v3274 = vpop.xlane.xlu0 %3273
      %v3275 = vsel %vm1589, %v3040, 0.0
      %v3276 = vadd.f32 %v3039, %v3275
      %3277 = vadd.xlane.f32.xlu0 %v3276
      %v3278 = vpop.xlane.xlu0 %3277
      %v3279 = vsel %vm1589, %v3042, 0.0
      %v3280 = vadd.f32 %v3041, %v3279
      %3281 = vadd.xlane.f32.xlu0 %v3280
      %v3282 = vpop.xlane.xlu0 %3281
      %v3283 = vmul.f32 %v3046, 0.0051020407
      %v3284 = vmul.f32 %v3050, 0.0051020407
      %v3285 = vmul.f32 %v3054, 0.0051020407
      %v3286 = vmul.f32 %v3058, 0.0051020407
      %v3287 = vmul.f32 %v3062, 0.0051020407
      %v3288 = vmul.f32 %v3066, 0.0051020407
      %v3289 = vmul.f32 %v3070, 0.0051020407
      %v3290 = vmul.f32 %v3074, 0.0051020407
      %v3291 = vmul.f32 %v3078, 0.0051020407
      %v3292 = vmul.f32 %v3082, 0.0051020407
      %v3293 = vmul.f32 %v3086, 0.0051020407
      %v3294 = vmul.f32 %v3090, 0.0051020407
      %v3295 = vmul.f32 %v3094, 0.0051020407
      %v3296 = vmul.f32 %v3098, 0.0051020407
      %v3297 = vmul.f32 %v3102, 0.0051020407
      %v3298 = vmul.f32 %v3106, 0.0051020407
      %v3299 = vmul.f32 %v3110, 0.0051020407
      %v3300 = vmul.f32 %v3114, 0.0051020407
      %v3301 = vmul.f32 %v3118, 0.0051020407
      %v3302 = vmul.f32 %v3122, 0.0051020407
      %v3303 = vmul.f32 %v3126, 0.0051020407
      %v3304 = vmul.f32 %v3130, 0.0051020407
      %v3305 = vmul.f32 %v3134, 0.0051020407
      %v3306 = vmul.f32 %v3138, 0.0051020407
      %v3307 = vmul.f32 %v3142, 0.0051020407
      %v3308 = vmul.f32 %v3146, 0.0051020407
      %v3309 = vmul.f32 %v3150, 0.0051020407
      %v3310 = vmul.f32 %v3154, 0.0051020407
      %v3311 = vmul.f32 %v3158, 0.0051020407
      %v3312 = vmul.f32 %v3162, 0.0051020407
      %v3313 = vmul.f32 %v3166, 0.0051020407
      %v3314 = vmul.f32 %v3170, 0.0051020407
      %v3315 = vmul.f32 %v3174, 0.0051020407
      %v3316 = vmul.f32 %v3178, 0.0051020407
      %v3317 = vmul.f32 %v3182, 0.0051020407
      %v3318 = vmul.f32 %v3186, 0.0051020407
      %v3319 = vmul.f32 %v3190, 0.0051020407
      %v3320 = vmul.f32 %v3194, 0.0051020407
      %v3321 = vmul.f32 %v3198, 0.0051020407
      %v3322 = vmul.f32 %v3202, 0.0051020407
      %v3323 = vmul.f32 %v3206, 0.0051020407
      %v3324 = vmul.f32 %v3210, 0.0051020407
      %v3325 = vmul.f32 %v3214, 0.0051020407
      %v3326 = vmul.f32 %v3218, 0.0051020407
      %v3327 = vmul.f32 %v3222, 0.0051020407
      %v3328 = vmul.f32 %v3226, 0.0051020407
      %v3329 = vmul.f32 %v3230, 0.0051020407
      %v3330 = vmul.f32 %v3234, 0.0051020407
      %v3331 = vmul.f32 %v3238, 0.0051020407
      %v3332 = vmul.f32 %v3242, 0.0051020407
      %v3333 = vmul.f32 %v3246, 0.0051020407
      %v3334 = vmul.f32 %v3250, 0.0051020407
      %v3335 = vmul.f32 %v3254, 0.0051020407
      %v3336 = vmul.f32 %v3258, 0.0051020407
      %v3337 = vmul.f32 %v3262, 0.0051020407
      %v3338 = vmul.f32 %v3266, 0.0051020407
      %v3339 = vmul.f32 %v3270, 0.0051020407
      %v3340 = vmul.f32 %v3274, 0.0051020407
      %v3341 = vmul.f32 %v3278, 0.0051020407
      %v3342 = vmul.f32 %v3282, 0.0051020407
      %v3343 = vld [vmem:[%s289] sm:$0xff]
      %v3344 = vld [vmem:[%s289 + $0x8] sm:$0xff]
      %v3345 = vld [vmem:[%s289 + $0x10] sm:$0xff]
      %v3346 = vld [vmem:[%s289 + $0x18] sm:$0xff]
      %v3347 = vld [vmem:[%s289 + $0x20] sm:$0xff]
      %v3348 = vld [vmem:[%s289 + $0x28] sm:$0xff]
      %v3349 = vld [vmem:[%s289 + $0x30] sm:$0xff]
      %v3350 = vld [vmem:[%s289 + $0x38] sm:$0xff]
      %v3351 = vld [vmem:[%s289 + $0x40] sm:$0xff]
      %v3352 = vld [vmem:[%s289 + $0x48] sm:$0xff]
      %v3353 = vld [vmem:[%s289 + $0x50] sm:$0xff]
      %v3354 = vld [vmem:[%s289 + $0x58] sm:$0xff]
      %v3355 = vld [vmem:[%s289 + $0x60] sm:$0xff]
      %v3356 = vld [vmem:[%s289 + $0x68] sm:$0xff]
      %v3357 = vld [vmem:[%s289 + $0x70] sm:$0xff]
      %v3358 = vld [vmem:[%s289 + $0x78] sm:$0xff]
      %v3359 = vld [vmem:[%s289 + $0x80] sm:$0xff]
      %v3360 = vld [vmem:[%s289 + $0x88] sm:$0xff]
      %v3361 = vld [vmem:[%s289 + $0x90] sm:$0xff]
      %v3362 = vld [vmem:[%s289 + $0x98] sm:$0xff]
      %v3363 = vld [vmem:[%s289 + $0xa0] sm:$0xff]
      %v3364 = vld [vmem:[%s289 + $0xa8] sm:$0xff]
      %v3365 = vld [vmem:[%s289 + $0xb0] sm:$0xff]
      %v3366 = vld [vmem:[%s289 + $0xb8] sm:$0xff]
      %v3367 = vld [vmem:[%s289 + $0xc0] sm:$0xff]
      %v3368 = vld [vmem:[%s289 + $0xc8] sm:$0xff]
      %v3369 = vld [vmem:[%s289 + $0xd0] sm:$0xff]
      %v3370 = vld [vmem:[%s289 + $0xd8] sm:$0xff]
      %v3371 = vld [vmem:[%s289 + $0xe0] sm:$0xff]
      %v3372 = vld [vmem:[%s289 + $0xe8] sm:$0xff]
      %v3373 = vld [vmem:[%s289 + $0xf0] sm:$0xff]
      %v3374 = vld [vmem:[%s289 + $0xf8] sm:$0xff]
      %v3375 = vld [vmem:[%s289 + $0x100] sm:$0xff]
      %v3376 = vld [vmem:[%s289 + $0x108] sm:$0xff]
      %v3377 = vld [vmem:[%s289 + $0x110] sm:$0xff]
      %v3378 = vld [vmem:[%s289 + $0x118] sm:$0xff]
      %v3379 = vld [vmem:[%s289 + $0x120] sm:$0xff]
      %v3380 = vld [vmem:[%s289 + $0x128] sm:$0xff]
      %v3381 = vld [vmem:[%s289 + $0x130] sm:$0xff]
      %v3382 = vld [vmem:[%s289 + $0x138] sm:$0xff]
      %v3383 = vld [vmem:[%s289 + $0x140] sm:$0xff]
      %v3384 = vld [vmem:[%s289 + $0x148] sm:$0xff]
      %v3385 = vld [vmem:[%s289 + $0x150] sm:$0xff]
      %v3386 = vld [vmem:[%s289 + $0x158] sm:$0xff]
      %v3387 = vld [vmem:[%s289 + $0x160] sm:$0xff]
      %v3388 = vld [vmem:[%s289 + $0x168] sm:$0xff]
      %v3389 = vld [vmem:[%s289 + $0x170] sm:$0xff]
      %v3390 = vld [vmem:[%s289 + $0x178] sm:$0xff]
      %v3391 = vld [vmem:[%s289 + $0x180] sm:$0xff]
      %v3392 = vld [vmem:[%s289 + $0x188] sm:$0xff]
      %v3393 = vld [vmem:[%s289 + $0x190] sm:$0xff]
      %v3394 = vld [vmem:[%s289 + $0x198] sm:$0xff]
      %v3395 = vld [vmem:[%s289 + $0x1a0] sm:$0xff]
      %v3396 = vld [vmem:[%s289 + $0x1a8] sm:$0xff]
      %v3397 = vld [vmem:[%s289 + $0x1b0] sm:$0xff]
      %v3398 = vld [vmem:[%s289 + $0x1b8] sm:$0xff]
      %v3399 = vld [vmem:[%s289 + $0x1c0] sm:$0xff]
      %v3400 = vld [vmem:[%s289 + $0x1c8] sm:$0xff]
      %v3401 = vld [vmem:[%s289 + $0x1d0] sm:$0xff]
      %v3402 = vld [vmem:[%s289 + $0x1d8] sm:$0xff]
      %v3403 = vmax.f32 %v3283, 0.0
      %v3404 = vmax.f32 %v3284, 0.0
      %v3405 = vmax.f32 %v3285, 0.0
      %v3406 = vmax.f32 %v3286, 0.0
      %v3407 = vmax.f32 %v3287, 0.0
      %v3408 = vmax.f32 %v3288, 0.0
      %v3409 = vmax.f32 %v3289, 0.0
      %v3410 = vmax.f32 %v3290, 0.0
      %v3411 = vmax.f32 %v3291, 0.0
      %v3412 = vmax.f32 %v3292, 0.0
      %v3413 = vmax.f32 %v3293, 0.0
      %v3414 = vmax.f32 %v3294, 0.0
      %v3415 = vmax.f32 %v3295, 0.0
      %v3416 = vmax.f32 %v3296, 0.0
      %v3417 = vmax.f32 %v3297, 0.0
      %v3418 = vmax.f32 %v3298, 0.0
      %v3419 = vmax.f32 %v3299, 0.0
      %v3420 = vmax.f32 %v3300, 0.0
      %v3421 = vmax.f32 %v3301, 0.0
      %v3422 = vmax.f32 %v3302, 0.0
      %v3423 = vmax.f32 %v3303, 0.0
      %v3424 = vmax.f32 %v3304, 0.0
      %v3425 = vmax.f32 %v3305, 0.0
      %v3426 = vmax.f32 %v3306, 0.0
      %v3427 = vmax.f32 %v3307, 0.0
      %v3428 = vmax.f32 %v3308, 0.0
      %v3429 = vmax.f32 %v3309, 0.0
      %v3430 = vmax.f32 %v3310, 0.0
      %v3431 = vmax.f32 %v3311, 0.0
      %v3432 = vmax.f32 %v3312, 0.0
      %v3433 = vmax.f32 %v3313, 0.0
      %v3434 = vmax.f32 %v3314, 0.0
      %v3435 = vmax.f32 %v3315, 0.0
      %v3436 = vmax.f32 %v3316, 0.0
      %v3437 = vmax.f32 %v3317, 0.0
      %v3438 = vmax.f32 %v3318, 0.0
      %v3439 = vmax.f32 %v3319, 0.0
      %v3440 = vmax.f32 %v3320, 0.0
      %v3441 = vmax.f32 %v3321, 0.0
      %v3442 = vmax.f32 %v3322, 0.0
      %v3443 = vmax.f32 %v3323, 0.0
      %v3444 = vmax.f32 %v3324, 0.0
      %v3445 = vmax.f32 %v3325, 0.0
      %v3446 = vmax.f32 %v3326, 0.0
      %v3447 = vmax.f32 %v3327, 0.0
      %v3448 = vmax.f32 %v3328, 0.0
      %v3449 = vmax.f32 %v3329, 0.0
      %v3450 = vmax.f32 %v3330, 0.0
      %v3451 = vmax.f32 %v3331, 0.0
      %v3452 = vmax.f32 %v3332, 0.0
      %v3453 = vmax.f32 %v3333, 0.0
      %v3454 = vmax.f32 %v3334, 0.0
      %v3455 = vmax.f32 %v3335, 0.0
      %v3456 = vmax.f32 %v3336, 0.0
      %v3457 = vmax.f32 %v3337, 0.0
      %v3458 = vmax.f32 %v3338, 0.0
      %v3459 = vmax.f32 %v3339, 0.0
      %v3460 = vmax.f32 %v3340, 0.0
      %v3461 = vmax.f32 %v3341, 0.0
      %v3462 = vmax.f32 %v3342, 0.0
      %v3463 = vadd.f32 %v3403, 0.001
      %v3464 = vadd.f32 %v3404, 0.001
      %v3465 = vadd.f32 %v3405, 0.001
      %v3466 = vadd.f32 %v3406, 0.001
      %v3467 = vadd.f32 %v3407, 0.001
      %v3468 = vadd.f32 %v3408, 0.001
      %v3469 = vadd.f32 %v3409, 0.001
      %v3470 = vadd.f32 %v3410, 0.001
      %v3471 = vadd.f32 %v3411, 0.001
      %v3472 = vadd.f32 %v3412, 0.001
      %v3473 = vadd.f32 %v3413, 0.001
      %v3474 = vadd.f32 %v3414, 0.001
      %v3475 = vadd.f32 %v3415, 0.001
      %v3476 = vadd.f32 %v3416, 0.001
      %v3477 = vadd.f32 %v3417, 0.001
      %v3478 = vadd.f32 %v3418, 0.001
      %v3479 = vadd.f32 %v3419, 0.001
      %v3480 = vadd.f32 %v3420, 0.001
      %v3481 = vadd.f32 %v3421, 0.001
      %v3482 = vadd.f32 %v3422, 0.001
      %v3483 = vadd.f32 %v3423, 0.001
      %v3484 = vadd.f32 %v3424, 0.001
      %v3485 = vadd.f32 %v3425, 0.001
      %v3486 = vadd.f32 %v3426, 0.001
      %v3487 = vadd.f32 %v3427, 0.001
      %v3488 = vadd.f32 %v3428, 0.001
      %v3489 = vadd.f32 %v3429, 0.001
      %v3490 = vadd.f32 %v3430, 0.001
      %v3491 = vadd.f32 %v3431, 0.001
      %v3492 = vadd.f32 %v3432, 0.001
      %v3493 = vadd.f32 %v3433, 0.001
      %v3494 = vadd.f32 %v3434, 0.001
      %v3495 = vadd.f32 %v3435, 0.001
      %v3496 = vadd.f32 %v3436, 0.001
      %v3497 = vadd.f32 %v3437, 0.001
      %v3498 = vadd.f32 %v3438, 0.001
      %v3499 = vadd.f32 %v3439, 0.001
      %v3500 = vadd.f32 %v3440, 0.001
      %v3501 = vadd.f32 %v3441, 0.001
      %v3502 = vadd.f32 %v3442, 0.001
      %v3503 = vadd.f32 %v3443, 0.001
      %v3504 = vadd.f32 %v3444, 0.001
      %v3505 = vadd.f32 %v3445, 0.001
      %v3506 = vadd.f32 %v3446, 0.001
      %v3507 = vadd.f32 %v3447, 0.001
      %v3508 = vadd.f32 %v3448, 0.001
      %v3509 = vadd.f32 %v3449, 0.001
      %v3510 = vadd.f32 %v3450, 0.001
      %v3511 = vadd.f32 %v3451, 0.001
      %v3512 = vadd.f32 %v3452, 0.001
      %v3513 = vadd.f32 %v3453, 0.001
      %v3514 = vadd.f32 %v3454, 0.001
      %v3515 = vadd.f32 %v3455, 0.001
      %v3516 = vadd.f32 %v3456, 0.001
      %v3517 = vadd.f32 %v3457, 0.001
      %v3518 = vadd.f32 %v3458, 0.001
      %v3519 = vadd.f32 %v3459, 0.001
      %v3520 = vadd.f32 %v3460, 0.001
      %v3521 = vadd.f32 %v3461, 0.001
      %v3522 = vadd.f32 %v3462, 0.001
      %v3523 = vrsqrt.pop %v3463
      %v3524 = vrsqrt.pop %v3464
      %v3525 = vrsqrt.pop %v3465
      %v3526 = vrsqrt.pop %v3466
      %v3527 = vrsqrt.pop %v3467
      %v3528 = vrsqrt.pop %v3468
      %v3529 = vrsqrt.pop %v3469
      %v3530 = vrsqrt.pop %v3470
      %v3531 = vrsqrt.pop %v3471
      %v3532 = vrsqrt.pop %v3472
      %v3533 = vrsqrt.pop %v3473
      %v3534 = vrsqrt.pop %v3474
      %v3535 = vrsqrt.pop %v3475
      %v3536 = vrsqrt.pop %v3476
      %v3537 = vrsqrt.pop %v3477
      %v3538 = vrsqrt.pop %v3478
      %v3539 = vrsqrt.pop %v3479
      %v3540 = vrsqrt.pop %v3480
      %v3541 = vrsqrt.pop %v3481
      %v3542 = vrsqrt.pop %v3482
      %v3543 = vrsqrt.pop %v3483
      %v3544 = vrsqrt.pop %v3484
      %v3545 = vrsqrt.pop %v3485
      %v3546 = vrsqrt.pop %v3486
      %v3547 = vrsqrt.pop %v3487
      %v3548 = vrsqrt.pop %v3488
      %v3549 = vrsqrt.pop %v3489
      %v3550 = vrsqrt.pop %v3490
      %v3551 = vrsqrt.pop %v3491
      %v3552 = vrsqrt.pop %v3492
      %v3553 = vrsqrt.pop %v3493
      %v3554 = vrsqrt.pop %v3494
      %v3555 = vrsqrt.pop %v3495
      %v3556 = vrsqrt.pop %v3496
      %v3557 = vrsqrt.pop %v3497
      %v3558 = vrsqrt.pop %v3498
      %v3559 = vrsqrt.pop %v3499
      %v3560 = vrsqrt.pop %v3500
      %v3561 = vrsqrt.pop %v3501
      %v3562 = vrsqrt.pop %v3502
      %v3563 = vrsqrt.pop %v3503
      %v3564 = vrsqrt.pop %v3504
      %v3565 = vrsqrt.pop %v3505
      %v3566 = vrsqrt.pop %v3506
      %v3567 = vrsqrt.pop %v3507
      %v3568 = vrsqrt.pop %v3508
      %v3569 = vrsqrt.pop %v3509
      %v3570 = vrsqrt.pop %v3510
      %v3571 = vrsqrt.pop %v3511
      %v3572 = vrsqrt.pop %v3512
      %v3573 = vrsqrt.pop %v3513
      %v3574 = vrsqrt.pop %v3514
      %v3575 = vrsqrt.pop %v3515
      %v3576 = vrsqrt.pop %v3516
      %v3577 = vrsqrt.pop %v3517
      %v3578 = vrsqrt.pop %v3518
      %v3579 = vrsqrt.pop %v3519
      %v3580 = vrsqrt.pop %v3520
      %v3581 = vrsqrt.pop %v3521
      %v3582 = vrsqrt.pop %v3522
      %v3583 = vmul.f32 %v3343, %v3523
      %v3584 = vmul.f32 %v3344, %v3524
      %v3585 = vmul.f32 %v3345, %v3525
      %v3586 = vmul.f32 %v3346, %v3526
      %v3587 = vmul.f32 %v3347, %v3527
      %v3588 = vmul.f32 %v3348, %v3528
      %v3589 = vmul.f32 %v3349, %v3529
      %v3590 = vmul.f32 %v3350, %v3530
      %v3591 = vmul.f32 %v3351, %v3531
      %v3592 = vmul.f32 %v3352, %v3532
      %v3593 = vmul.f32 %v3353, %v3533
      %v3594 = vmul.f32 %v3354, %v3534
      %v3595 = vmul.f32 %v3355, %v3535
      %v3596 = vmul.f32 %v3356, %v3536
      %v3597 = vmul.f32 %v3357, %v3537
      %v3598 = vmul.f32 %v3358, %v3538
      %v3599 = vmul.f32 %v3359, %v3539
      %v3600 = vmul.f32 %v3360, %v3540
      %v3601 = vmul.f32 %v3361, %v3541
      %v3602 = vmul.f32 %v3362, %v3542
      %v3603 = vmul.f32 %v3363, %v3543
      %v3604 = vmul.f32 %v3364, %v3544
      %v3605 = vmul.f32 %v3365, %v3545
      %v3606 = vmul.f32 %v3366, %v3546
      %v3607 = vmul.f32 %v3367, %v3547
      %v3608 = vmul.f32 %v3368, %v3548
      %v3609 = vmul.f32 %v3369, %v3549
      %v3610 = vmul.f32 %v3370, %v3550
      %v3611 = vmul.f32 %v3371, %v3551
      %v3612 = vmul.f32 %v3372, %v3552
      %v3613 = vmul.f32 %v3373, %v3553
      %v3614 = vmul.f32 %v3374, %v3554
      %v3615 = vmul.f32 %v3375, %v3555
      %v3616 = vmul.f32 %v3376, %v3556
      %v3617 = vmul.f32 %v3377, %v3557
      %v3618 = vmul.f32 %v3378, %v3558
      %v3619 = vmul.f32 %v3379, %v3559
      %v3620 = vmul.f32 %v3380, %v3560
      %v3621 = vmul.f32 %v3381, %v3561
      %v3622 = vmul.f32 %v3382, %v3562
      %v3623 = vmul.f32 %v3383, %v3563
      %v3624 = vmul.f32 %v3384, %v3564
      %v3625 = vmul.f32 %v3385, %v3565
      %v3626 = vmul.f32 %v3386, %v3566
      %v3627 = vmul.f32 %v3387, %v3567
      %v3628 = vmul.f32 %v3388, %v3568
      %v3629 = vmul.f32 %v3389, %v3569
      %v3630 = vmul.f32 %v3390, %v3570
      %v3631 = vmul.f32 %v3391, %v3571
      %v3632 = vmul.f32 %v3392, %v3572
      %v3633 = vmul.f32 %v3393, %v3573
      %v3634 = vmul.f32 %v3394, %v3574
      %v3635 = vmul.f32 %v3395, %v3575
      %v3636 = vmul.f32 %v3396, %v3576
      %v3637 = vmul.f32 %v3397, %v3577
      %v3638 = vmul.f32 %v3398, %v3578
      %v3639 = vmul.f32 %v3399, %v3579
      %v3640 = vmul.f32 %v3400, %v3580
      %v3641 = vmul.f32 %v3401, %v3581
      %v3642 = vmul.f32 %v3402, %v3582
      %3644 = vset.pattern.permute.xlu0 0
      %3645 = vperm.xlu0 %3644, %v3583
      %v3646 = vpop.permute.xlu0 %3645
      %3649 = vset.pattern.permute.xlu0 0
      %3650 = vperm.xlu0 %3649, %v3584
      %v3651 = vpop.permute.xlu0 %3650
      %3654 = vset.pattern.permute.xlu0 0
      %3655 = vperm.xlu0 %3654, %v3585
      %v3656 = vpop.permute.xlu0 %3655
      %3659 = vset.pattern.permute.xlu0 0
      %3660 = vperm.xlu0 %3659, %v3586
      %v3661 = vpop.permute.xlu0 %3660
      %3664 = vset.pattern.permute.xlu0 0
      %3665 = vperm.xlu0 %3664, %v3587
      %v3666 = vpop.permute.xlu0 %3665
      %3669 = vset.pattern.permute.xlu0 0
      %3670 = vperm.xlu0 %3669, %v3588
      %v3671 = vpop.permute.xlu0 %3670
      %3674 = vset.pattern.permute.xlu0 0
      %3675 = vperm.xlu0 %3674, %v3589
      %v3676 = vpop.permute.xlu0 %3675
      %3679 = vset.pattern.permute.xlu0 0
      %3680 = vperm.xlu0 %3679, %v3590
      %v3681 = vpop.permute.xlu0 %3680
      %3684 = vset.pattern.permute.xlu0 0
      %3685 = vperm.xlu0 %3684, %v3591
      %v3686 = vpop.permute.xlu0 %3685
      %3689 = vset.pattern.permute.xlu0 0
      %3690 = vperm.xlu0 %3689, %v3592
      %v3691 = vpop.permute.xlu0 %3690
      %3694 = vset.pattern.permute.xlu0 0
      %3695 = vperm.xlu0 %3694, %v3593
      %v3696 = vpop.permute.xlu0 %3695
      %3699 = vset.pattern.permute.xlu0 0
      %3700 = vperm.xlu0 %3699, %v3594
      %v3701 = vpop.permute.xlu0 %3700
      %3704 = vset.pattern.permute.xlu0 0
      %3705 = vperm.xlu0 %3704, %v3595
      %v3706 = vpop.permute.xlu0 %3705
      %3709 = vset.pattern.permute.xlu0 0
      %3710 = vperm.xlu0 %3709, %v3596
      %v3711 = vpop.permute.xlu0 %3710
      %3714 = vset.pattern.permute.xlu0 0
      %3715 = vperm.xlu0 %3714, %v3597
      %v3716 = vpop.permute.xlu0 %3715
      %3719 = vset.pattern.permute.xlu0 0
      %3720 = vperm.xlu0 %3719, %v3598
      %v3721 = vpop.permute.xlu0 %3720
      %3724 = vset.pattern.permute.xlu0 0
      %3725 = vperm.xlu0 %3724, %v3599
      %v3726 = vpop.permute.xlu0 %3725
      %3729 = vset.pattern.permute.xlu0 0
      %3730 = vperm.xlu0 %3729, %v3600
      %v3731 = vpop.permute.xlu0 %3730
      %3734 = vset.pattern.permute.xlu0 0
      %3735 = vperm.xlu0 %3734, %v3601
      %v3736 = vpop.permute.xlu0 %3735
      %3739 = vset.pattern.permute.xlu0 0
      %3740 = vperm.xlu0 %3739, %v3602
      %v3741 = vpop.permute.xlu0 %3740
      %3744 = vset.pattern.permute.xlu0 0
      %3745 = vperm.xlu0 %3744, %v3603
      %v3746 = vpop.permute.xlu0 %3745
      %3749 = vset.pattern.permute.xlu0 0
      %3750 = vperm.xlu0 %3749, %v3604
      %v3751 = vpop.permute.xlu0 %3750
      %3754 = vset.pattern.permute.xlu0 0
      %3755 = vperm.xlu0 %3754, %v3605
      %v3756 = vpop.permute.xlu0 %3755
      %3759 = vset.pattern.permute.xlu0 0
      %3760 = vperm.xlu0 %3759, %v3606
      %v3761 = vpop.permute.xlu0 %3760
      %3764 = vset.pattern.permute.xlu0 0
      %3765 = vperm.xlu0 %3764, %v3607
      %v3766 = vpop.permute.xlu0 %3765
      %3769 = vset.pattern.permute.xlu0 0
      %3770 = vperm.xlu0 %3769, %v3608
      %v3771 = vpop.permute.xlu0 %3770
      %3774 = vset.pattern.permute.xlu0 0
      %3775 = vperm.xlu0 %3774, %v3609
      %v3776 = vpop.permute.xlu0 %3775
      %3779 = vset.pattern.permute.xlu0 0
      %3780 = vperm.xlu0 %3779, %v3610
      %v3781 = vpop.permute.xlu0 %3780
      %3784 = vset.pattern.permute.xlu0 0
      %3785 = vperm.xlu0 %3784, %v3611
      %v3786 = vpop.permute.xlu0 %3785
      %3789 = vset.pattern.permute.xlu0 0
      %3790 = vperm.xlu0 %3789, %v3612
      %v3791 = vpop.permute.xlu0 %3790
      %3794 = vset.pattern.permute.xlu0 0
      %3795 = vperm.xlu0 %3794, %v3613
      %v3796 = vpop.permute.xlu0 %3795
      %3799 = vset.pattern.permute.xlu0 0
      %3800 = vperm.xlu0 %3799, %v3614
      %v3801 = vpop.permute.xlu0 %3800
      %3804 = vset.pattern.permute.xlu0 0
      %3805 = vperm.xlu0 %3804, %v3615
      %v3806 = vpop.permute.xlu0 %3805
      %3809 = vset.pattern.permute.xlu0 0
      %3810 = vperm.xlu0 %3809, %v3616
      %v3811 = vpop.permute.xlu0 %3810
      %3814 = vset.pattern.permute.xlu0 0
      %3815 = vperm.xlu0 %3814, %v3617
      %v3816 = vpop.permute.xlu0 %3815
      %3819 = vset.pattern.permute.xlu0 0
      %3820 = vperm.xlu0 %3819, %v3618
      %v3821 = vpop.permute.xlu0 %3820
      %3824 = vset.pattern.permute.xlu0 0
      %3825 = vperm.xlu0 %3824, %v3619
      %v3826 = vpop.permute.xlu0 %3825
      %3829 = vset.pattern.permute.xlu0 0
      %3830 = vperm.xlu0 %3829, %v3620
      %v3831 = vpop.permute.xlu0 %3830
      %3834 = vset.pattern.permute.xlu0 0
      %3835 = vperm.xlu0 %3834, %v3621
      %v3836 = vpop.permute.xlu0 %3835
      %3839 = vset.pattern.permute.xlu0 0
      %3840 = vperm.xlu0 %3839, %v3622
      %v3841 = vpop.permute.xlu0 %3840
      %3844 = vset.pattern.permute.xlu0 0
      %3845 = vperm.xlu0 %3844, %v3623
      %v3846 = vpop.permute.xlu0 %3845
      %3849 = vset.pattern.permute.xlu0 0
      %3850 = vperm.xlu0 %3849, %v3624
      %v3851 = vpop.permute.xlu0 %3850
      %3854 = vset.pattern.permute.xlu0 0
      %3855 = vperm.xlu0 %3854, %v3625
      %v3856 = vpop.permute.xlu0 %3855
      %3859 = vset.pattern.permute.xlu0 0
      %3860 = vperm.xlu0 %3859, %v3626
      %v3861 = vpop.permute.xlu0 %3860
      %3864 = vset.pattern.permute.xlu0 0
      %3865 = vperm.xlu0 %3864, %v3627
      %v3866 = vpop.permute.xlu0 %3865
      %3869 = vset.pattern.permute.xlu0 0
      %3870 = vperm.xlu0 %3869, %v3628
      %v3871 = vpop.permute.xlu0 %3870
      %3874 = vset.pattern.permute.xlu0 0
      %3875 = vperm.xlu0 %3874, %v3629
      %v3876 = vpop.permute.xlu0 %3875
      %3879 = vset.pattern.permute.xlu0 0
      %3880 = vperm.xlu0 %3879, %v3630
      %v3881 = vpop.permute.xlu0 %3880
      %3884 = vset.pattern.permute.xlu0 0
      %3885 = vperm.xlu0 %3884, %v3631
      %v3886 = vpop.permute.xlu0 %3885
      %3889 = vset.pattern.permute.xlu0 0
      %3890 = vperm.xlu0 %3889, %v3632
      %v3891 = vpop.permute.xlu0 %3890
      %3894 = vset.pattern.permute.xlu0 0
      %3895 = vperm.xlu0 %3894, %v3633
      %v3896 = vpop.permute.xlu0 %3895
      %3899 = vset.pattern.permute.xlu0 0
      %3900 = vperm.xlu0 %3899, %v3634
      %v3901 = vpop.permute.xlu0 %3900
      %3904 = vset.pattern.permute.xlu0 0
      %3905 = vperm.xlu0 %3904, %v3635
      %v3906 = vpop.permute.xlu0 %3905
      %3909 = vset.pattern.permute.xlu0 0
      %3910 = vperm.xlu0 %3909, %v3636
      %v3911 = vpop.permute.xlu0 %3910
      %3914 = vset.pattern.permute.xlu0 0
      %3915 = vperm.xlu0 %3914, %v3637
      %v3916 = vpop.permute.xlu0 %3915
      %3919 = vset.pattern.permute.xlu0 0
      %3920 = vperm.xlu0 %3919, %v3638
      %v3921 = vpop.permute.xlu0 %3920
      %3924 = vset.pattern.permute.xlu0 0
      %3925 = vperm.xlu0 %3924, %v3639
      %v3926 = vpop.permute.xlu0 %3925
      %3929 = vset.pattern.permute.xlu0 0
      %3930 = vperm.xlu0 %3929, %v3640
      %v3931 = vpop.permute.xlu0 %3930
      %3934 = vset.pattern.permute.xlu0 0
      %3935 = vperm.xlu0 %3934, %v3641
      %v3936 = vpop.permute.xlu0 %3935
      %3939 = vset.pattern.permute.xlu0 0
      %3940 = vperm.xlu0 %3939, %v3642
      %v3941 = vpop.permute.xlu0 %3940
      %v3943 = vmul.f32 %v2625, %v3646
      %v3944 = vmul.f32 %v2627, %v3646
      %v3945 = vmul.f32 %v2629, %v3651
      %v3946 = vmul.f32 %v2631, %v3651
      %v3947 = vmul.f32 %v2635, %v3656
      %v3948 = vmul.f32 %v2637, %v3656
      %v3949 = vmul.f32 %v2639, %v3661
      %v3950 = vmul.f32 %v2641, %v3661
      %v3951 = vmul.f32 %v2645, %v3666
      %v3952 = vmul.f32 %v2647, %v3666
      %v3953 = vmul.f32 %v2649, %v3671
      %v3954 = vmul.f32 %v2651, %v3671
      %v3955 = vmul.f32 %v2655, %v3676
      %v3956 = vmul.f32 %v2657, %v3676
      %v3957 = vmul.f32 %v2659, %v3681
      %v3958 = vmul.f32 %v2661, %v3681
      %v3959 = vmul.f32 %v2665, %v3686
      %v3960 = vmul.f32 %v2667, %v3686
      %v3961 = vmul.f32 %v2669, %v3691
      %v3962 = vmul.f32 %v2671, %v3691
      %v3963 = vmul.f32 %v2675, %v3696
      %v3964 = vmul.f32 %v2677, %v3696
      %v3965 = vmul.f32 %v2679, %v3701
      %v3966 = vmul.f32 %v2681, %v3701
      %v3967 = vmul.f32 %v2685, %v3706
      %v3968 = vmul.f32 %v2687, %v3706
      %v3969 = vmul.f32 %v2689, %v3711
      %v3970 = vmul.f32 %v2691, %v3711
      %v3971 = vmul.f32 %v2695, %v3716
      %v3972 = vmul.f32 %v2697, %v3716
      %v3973 = vmul.f32 %v2699, %v3721
      %v3974 = vmul.f32 %v2701, %v3721
      %v3975 = vmul.f32 %v2705, %v3726
      %v3976 = vmul.f32 %v2707, %v3726
      %v3977 = vmul.f32 %v2709, %v3731
      %v3978 = vmul.f32 %v2711, %v3731
      %v3979 = vmul.f32 %v2715, %v3736
      %v3980 = vmul.f32 %v2717, %v3736
      %v3981 = vmul.f32 %v2719, %v3741
      %v3982 = vmul.f32 %v2721, %v3741
      %v3983 = vmul.f32 %v2725, %v3746
      %v3984 = vmul.f32 %v2727, %v3746
      %v3985 = vmul.f32 %v2729, %v3751
      %v3986 = vmul.f32 %v2731, %v3751
      %v3987 = vmul.f32 %v2735, %v3756
      %v3988 = vmul.f32 %v2737, %v3756
      %v3989 = vmul.f32 %v2739, %v3761
      %v3990 = vmul.f32 %v2741, %v3761
      %v3991 = vmul.f32 %v2745, %v3766
      %v3992 = vmul.f32 %v2747, %v3766
      %v3993 = vmul.f32 %v2749, %v3771
      %v3994 = vmul.f32 %v2751, %v3771
      %v3995 = vmul.f32 %v2755, %v3776
      %v3996 = vmul.f32 %v2757, %v3776
      %v3997 = vmul.f32 %v2759, %v3781
      %v3998 = vmul.f32 %v2761, %v3781
      %v3999 = vmul.f32 %v2765, %v3786
      %v4000 = vmul.f32 %v2767, %v3786
      %v4001 = vmul.f32 %v2769, %v3791
      %v4002 = vmul.f32 %v2771, %v3791
      %v4003 = vmul.f32 %v2775, %v3796
      %v4004 = vmul.f32 %v2777, %v3796
      %v4005 = vmul.f32 %v2779, %v3801
      %v4006 = vmul.f32 %v2781, %v3801
      %v4007 = vmul.f32 %v2785, %v3806
      %v4008 = vmul.f32 %v2787, %v3806
      %v4009 = vmul.f32 %v2789, %v3811
      %v4010 = vmul.f32 %v2791, %v3811
      %v4011 = vmul.f32 %v2795, %v3816
      %v4012 = vmul.f32 %v2797, %v3816
      %v4013 = vmul.f32 %v2799, %v3821
      %v4014 = vmul.f32 %v2801, %v3821
      %v4015 = vmul.f32 %v2805, %v3826
      %v4016 = vmul.f32 %v2807, %v3826
      %v4017 = vmul.f32 %v2809, %v3831
      %v4018 = vmul.f32 %v2811, %v3831
      %v4019 = vmul.f32 %v2815, %v3836
      %v4020 = vmul.f32 %v2817, %v3836
      %v4021 = vmul.f32 %v2819, %v3841
      %v4022 = vmul.f32 %v2821, %v3841
      %v4023 = vmul.f32 %v2825, %v3846
      %v4024 = vmul.f32 %v2827, %v3846
      %v4025 = vmul.f32 %v2829, %v3851
      %v4026 = vmul.f32 %v2831, %v3851
      %v4027 = vmul.f32 %v2835, %v3856
      %v4028 = vmul.f32 %v2837, %v3856
      %v4029 = vmul.f32 %v2839, %v3861
      %v4030 = vmul.f32 %v2841, %v3861
      %v4031 = vmul.f32 %v2845, %v3866
      %v4032 = vmul.f32 %v2847, %v3866
      %v4033 = vmul.f32 %v2849, %v3871
      %v4034 = vmul.f32 %v2851, %v3871
      %v4035 = vmul.f32 %v2855, %v3876
      %v4036 = vmul.f32 %v2857, %v3876
      %v4037 = vmul.f32 %v2859, %v3881
      %v4038 = vmul.f32 %v2861, %v3881
      %v4039 = vmul.f32 %v2865, %v3886
      %v4040 = vmul.f32 %v2867, %v3886
      %v4041 = vmul.f32 %v2869, %v3891
      %v4042 = vmul.f32 %v2871, %v3891
      %v4043 = vmul.f32 %v2875, %v3896
      %v4044 = vmul.f32 %v2877, %v3896
      %v4045 = vmul.f32 %v2879, %v3901
      %v4046 = vmul.f32 %v2881, %v3901
      %v4047 = vmul.f32 %v2885, %v3906
      %v4048 = vmul.f32 %v2887, %v3906
      %v4049 = vmul.f32 %v2889, %v3911
      %v4050 = vmul.f32 %v2891, %v3911
      %v4051 = vmul.f32 %v2895, %v3916
      %v4052 = vmul.f32 %v2897, %v3916
      %v4053 = vmul.f32 %v2899, %v3921
      %v4054 = vmul.f32 %v2901, %v3921
      %v4055 = vmul.f32 %v2905, %v3926
      %v4056 = vmul.f32 %v2907, %v3926
      %v4057 = vmul.f32 %v2909, %v3931
      %v4058 = vmul.f32 %v2911, %v3931
      %v4059 = vmul.f32 %v2915, %v3936
      %v4060 = vmul.f32 %v2917, %v3936
      %v4061 = vmul.f32 %v2919, %v3941
      %v4062 = vmul.f32 %v2921, %v3941
      %v4063 = vld [vmem:[%s295] sm:$0xff]
      %v4064 = vld [vmem:[%s295 + $0x8] sm:$0xff]
      %v4065 = vld [vmem:[%s295 + $0x10] sm:$0xff]
      %v4066 = vld [vmem:[%s295 + $0x18] sm:$0xff]
      %v4067 = vld [vmem:[%s295 + $0x20] sm:$0xff]
      %v4068 = vld [vmem:[%s295 + $0x28] sm:$0xff]
      %v4069 = vld [vmem:[%s295 + $0x30] sm:$0xff]
      %v4070 = vld [vmem:[%s295 + $0x38] sm:$0xff]
      %v4071 = vld [vmem:[%s295 + $0x40] sm:$0xff]
      %v4072 = vld [vmem:[%s295 + $0x48] sm:$0xff]
      %v4073 = vld [vmem:[%s295 + $0x50] sm:$0xff]
      %v4074 = vld [vmem:[%s295 + $0x58] sm:$0xff]
      %v4075 = vld [vmem:[%s295 + $0x60] sm:$0xff]
      %v4076 = vld [vmem:[%s295 + $0x68] sm:$0xff]
      %v4077 = vld [vmem:[%s295 + $0x70] sm:$0xff]
      %v4078 = vld [vmem:[%s295 + $0x78] sm:$0xff]
      %v4079 = vld [vmem:[%s295 + $0x80] sm:$0xff]
      %v4080 = vld [vmem:[%s295 + $0x88] sm:$0xff]
      %v4081 = vld [vmem:[%s295 + $0x90] sm:$0xff]
      %v4082 = vld [vmem:[%s295 + $0x98] sm:$0xff]
      %v4083 = vld [vmem:[%s295 + $0xa0] sm:$0xff]
      %v4084 = vld [vmem:[%s295 + $0xa8] sm:$0xff]
      %v4085 = vld [vmem:[%s295 + $0xb0] sm:$0xff]
      %v4086 = vld [vmem:[%s295 + $0xb8] sm:$0xff]
      %v4087 = vld [vmem:[%s295 + $0xc0] sm:$0xff]
      %v4088 = vld [vmem:[%s295 + $0xc8] sm:$0xff]
      %v4089 = vld [vmem:[%s295 + $0xd0] sm:$0xff]
      %v4090 = vld [vmem:[%s295 + $0xd8] sm:$0xff]
      %v4091 = vld [vmem:[%s295 + $0xe0] sm:$0xff]
      %v4092 = vld [vmem:[%s295 + $0xe8] sm:$0xff]
      %v4093 = vld [vmem:[%s295 + $0xf0] sm:$0xff]
      %v4094 = vld [vmem:[%s295 + $0xf8] sm:$0xff]
      %v4095 = vld [vmem:[%s295 + $0x100] sm:$0xff]
      %v4096 = vld [vmem:[%s295 + $0x108] sm:$0xff]
      %v4097 = vld [vmem:[%s295 + $0x110] sm:$0xff]
      %v4098 = vld [vmem:[%s295 + $0x118] sm:$0xff]
      %v4099 = vld [vmem:[%s295 + $0x120] sm:$0xff]
      %v4100 = vld [vmem:[%s295 + $0x128] sm:$0xff]
      %v4101 = vld [vmem:[%s295 + $0x130] sm:$0xff]
      %v4102 = vld [vmem:[%s295 + $0x138] sm:$0xff]
      %v4103 = vld [vmem:[%s295 + $0x140] sm:$0xff]
      %v4104 = vld [vmem:[%s295 + $0x148] sm:$0xff]
      %v4105 = vld [vmem:[%s295 + $0x150] sm:$0xff]
      %v4106 = vld [vmem:[%s295 + $0x158] sm:$0xff]
      %v4107 = vld [vmem:[%s295 + $0x160] sm:$0xff]
      %v4108 = vld [vmem:[%s295 + $0x168] sm:$0xff]
      %v4109 = vld [vmem:[%s295 + $0x170] sm:$0xff]
      %v4110 = vld [vmem:[%s295 + $0x178] sm:$0xff]
      %v4111 = vld [vmem:[%s295 + $0x180] sm:$0xff]
      %v4112 = vld [vmem:[%s295 + $0x188] sm:$0xff]
      %v4113 = vld [vmem:[%s295 + $0x190] sm:$0xff]
      %v4114 = vld [vmem:[%s295 + $0x198] sm:$0xff]
      %v4115 = vld [vmem:[%s295 + $0x1a0] sm:$0xff]
      %v4116 = vld [vmem:[%s295 + $0x1a8] sm:$0xff]
      %v4117 = vld [vmem:[%s295 + $0x1b0] sm:$0xff]
      %v4118 = vld [vmem:[%s295 + $0x1b8] sm:$0xff]
      %v4119 = vld [vmem:[%s295 + $0x1c0] sm:$0xff]
      %v4120 = vld [vmem:[%s295 + $0x1c8] sm:$0xff]
      %v4121 = vld [vmem:[%s295 + $0x1d0] sm:$0xff]
      %v4122 = vld [vmem:[%s295 + $0x1d8] sm:$0xff]
      %4124 = vset.pattern.permute.xlu0 0
      %4125 = vperm.xlu0 %4124, %v4063
      %v4126 = vpop.permute.xlu0 %4125
      %4129 = vset.pattern.permute.xlu0 0
      %4130 = vperm.xlu0 %4129, %v4064
      %v4131 = vpop.permute.xlu0 %4130
      %4134 = vset.pattern.permute.xlu0 0
      %4135 = vperm.xlu0 %4134, %v4065
      %v4136 = vpop.permute.xlu0 %4135
      %4139 = vset.pattern.permute.xlu0 0
      %4140 = vperm.xlu0 %4139, %v4066
      %v4141 = vpop.permute.xlu0 %4140
      %4144 = vset.pattern.permute.xlu0 0
      %4145 = vperm.xlu0 %4144, %v4067
      %v4146 = vpop.permute.xlu0 %4145
      %4149 = vset.pattern.permute.xlu0 0
      %4150 = vperm.xlu0 %4149, %v4068
      %v4151 = vpop.permute.xlu0 %4150
      %4154 = vset.pattern.permute.xlu0 0
      %4155 = vperm.xlu0 %4154, %v4069
      %v4156 = vpop.permute.xlu0 %4155
      %4159 = vset.pattern.permute.xlu0 0
      %4160 = vperm.xlu0 %4159, %v4070
      %v4161 = vpop.permute.xlu0 %4160
      %4164 = vset.pattern.permute.xlu0 0
      %4165 = vperm.xlu0 %4164, %v4071
      %v4166 = vpop.permute.xlu0 %4165
      %4169 = vset.pattern.permute.xlu0 0
      %4170 = vperm.xlu0 %4169, %v4072
      %v4171 = vpop.permute.xlu0 %4170
      %4174 = vset.pattern.permute.xlu0 0
      %4175 = vperm.xlu0 %4174, %v4073
      %v4176 = vpop.permute.xlu0 %4175
      %4179 = vset.pattern.permute.xlu0 0
      %4180 = vperm.xlu0 %4179, %v4074
      %v4181 = vpop.permute.xlu0 %4180
      %4184 = vset.pattern.permute.xlu0 0
      %4185 = vperm.xlu0 %4184, %v4075
      %v4186 = vpop.permute.xlu0 %4185
      %4189 = vset.pattern.permute.xlu0 0
      %4190 = vperm.xlu0 %4189, %v4076
      %v4191 = vpop.permute.xlu0 %4190
      %4194 = vset.pattern.permute.xlu0 0
      %4195 = vperm.xlu0 %4194, %v4077
      %v4196 = vpop.permute.xlu0 %4195
      %4199 = vset.pattern.permute.xlu0 0
      %4200 = vperm.xlu0 %4199, %v4078
      %v4201 = vpop.permute.xlu0 %4200
      %4204 = vset.pattern.permute.xlu0 0
      %4205 = vperm.xlu0 %4204, %v4079
      %v4206 = vpop.permute.xlu0 %4205
      %4209 = vset.pattern.permute.xlu0 0
      %4210 = vperm.xlu0 %4209, %v4080
      %v4211 = vpop.permute.xlu0 %4210
      %4214 = vset.pattern.permute.xlu0 0
      %4215 = vperm.xlu0 %4214, %v4081
      %v4216 = vpop.permute.xlu0 %4215
      %4219 = vset.pattern.permute.xlu0 0
      %4220 = vperm.xlu0 %4219, %v4082
      %v4221 = vpop.permute.xlu0 %4220
      %4224 = vset.pattern.permute.xlu0 0
      %4225 = vperm.xlu0 %4224, %v4083
      %v4226 = vpop.permute.xlu0 %4225
      %4229 = vset.pattern.permute.xlu0 0
      %4230 = vperm.xlu0 %4229, %v4084
      %v4231 = vpop.permute.xlu0 %4230
      %4234 = vset.pattern.permute.xlu0 0
      %4235 = vperm.xlu0 %4234, %v4085
      %v4236 = vpop.permute.xlu0 %4235
      %4239 = vset.pattern.permute.xlu0 0
      %4240 = vperm.xlu0 %4239, %v4086
      %v4241 = vpop.permute.xlu0 %4240
      %4244 = vset.pattern.permute.xlu0 0
      %4245 = vperm.xlu0 %4244, %v4087
      %v4246 = vpop.permute.xlu0 %4245
      %4249 = vset.pattern.permute.xlu0 0
      %4250 = vperm.xlu0 %4249, %v4088
      %v4251 = vpop.permute.xlu0 %4250
      %4254 = vset.pattern.permute.xlu0 0
      %4255 = vperm.xlu0 %4254, %v4089
      %v4256 = vpop.permute.xlu0 %4255
      %4259 = vset.pattern.permute.xlu0 0
      %4260 = vperm.xlu0 %4259, %v4090
      %v4261 = vpop.permute.xlu0 %4260
      %4264 = vset.pattern.permute.xlu0 0
      %4265 = vperm.xlu0 %4264, %v4091
      %v4266 = vpop.permute.xlu0 %4265
      %4269 = vset.pattern.permute.xlu0 0
      %4270 = vperm.xlu0 %4269, %v4092
      %v4271 = vpop.permute.xlu0 %4270
      %4274 = vset.pattern.permute.xlu0 0
      %4275 = vperm.xlu0 %4274, %v4093
      %v4276 = vpop.permute.xlu0 %4275
      %4279 = vset.pattern.permute.xlu0 0
      %4280 = vperm.xlu0 %4279, %v4094
      %v4281 = vpop.permute.xlu0 %4280
      %4284 = vset.pattern.permute.xlu0 0
      %4285 = vperm.xlu0 %4284, %v4095
      %v4286 = vpop.permute.xlu0 %4285
      %4289 = vset.pattern.permute.xlu0 0
      %4290 = vperm.xlu0 %4289, %v4096
      %v4291 = vpop.permute.xlu0 %4290
      %4294 = vset.pattern.permute.xlu0 0
      %4295 = vperm.xlu0 %4294, %v4097
      %v4296 = vpop.permute.xlu0 %4295
      %4299 = vset.pattern.permute.xlu0 0
      %4300 = vperm.xlu0 %4299, %v4098
      %v4301 = vpop.permute.xlu0 %4300
      %4304 = vset.pattern.permute.xlu0 0
      %4305 = vperm.xlu0 %4304, %v4099
      %v4306 = vpop.permute.xlu0 %4305
      %4309 = vset.pattern.permute.xlu0 0
      %4310 = vperm.xlu0 %4309, %v4100
      %v4311 = vpop.permute.xlu0 %4310
      %4314 = vset.pattern.permute.xlu0 0
      %4315 = vperm.xlu0 %4314, %v4101
      %v4316 = vpop.permute.xlu0 %4315
      %4319 = vset.pattern.permute.xlu0 0
      %4320 = vperm.xlu0 %4319, %v4102
      %v4321 = vpop.permute.xlu0 %4320
      %4324 = vset.pattern.permute.xlu0 0
      %4325 = vperm.xlu0 %4324, %v4103
      %v4326 = vpop.permute.xlu0 %4325
      %4329 = vset.pattern.permute.xlu0 0
      %4330 = vperm.xlu0 %4329, %v4104
      %v4331 = vpop.permute.xlu0 %4330
      %4334 = vset.pattern.permute.xlu0 0
      %4335 = vperm.xlu0 %4334, %v4105
      %v4336 = vpop.permute.xlu0 %4335
      %4339 = vset.pattern.permute.xlu0 0
      %4340 = vperm.xlu0 %4339, %v4106
      %v4341 = vpop.permute.xlu0 %4340
      %4344 = vset.pattern.permute.xlu0 0
      %4345 = vperm.xlu0 %4344, %v4107
      %v4346 = vpop.permute.xlu0 %4345
      %4349 = vset.pattern.permute.xlu0 0
      %4350 = vperm.xlu0 %4349, %v4108
      %v4351 = vpop.permute.xlu0 %4350
      %4354 = vset.pattern.permute.xlu0 0
      %4355 = vperm.xlu0 %4354, %v4109
      %v4356 = vpop.permute.xlu0 %4355
      %4359 = vset.pattern.permute.xlu0 0
      %4360 = vperm.xlu0 %4359, %v4110
      %v4361 = vpop.permute.xlu0 %4360
      %4364 = vset.pattern.permute.xlu0 0
      %4365 = vperm.xlu0 %4364, %v4111
      %v4366 = vpop.permute.xlu0 %4365
      %4369 = vset.pattern.permute.xlu0 0
      %4370 = vperm.xlu0 %4369, %v4112
      %v4371 = vpop.permute.xlu0 %4370
      %4374 = vset.pattern.permute.xlu0 0
      %4375 = vperm.xlu0 %4374, %v4113
      %v4376 = vpop.permute.xlu0 %4375
      %4379 = vset.pattern.permute.xlu0 0
      %4380 = vperm.xlu0 %4379, %v4114
      %v4381 = vpop.permute.xlu0 %4380
      %4384 = vset.pattern.permute.xlu0 0
      %4385 = vperm.xlu0 %4384, %v4115
      %v4386 = vpop.permute.xlu0 %4385
      %4389 = vset.pattern.permute.xlu0 0
      %4390 = vperm.xlu0 %4389, %v4116
      %v4391 = vpop.permute.xlu0 %4390
      %4394 = vset.pattern.permute.xlu0 0
      %4395 = vperm.xlu0 %4394, %v4117
      %v4396 = vpop.permute.xlu0 %4395
      %4399 = vset.pattern.permute.xlu0 0
      %4400 = vperm.xlu0 %4399, %v4118
      %v4401 = vpop.permute.xlu0 %4400
      %4404 = vset.pattern.permute.xlu0 0
      %4405 = vperm.xlu0 %4404, %v4119
      %v4406 = vpop.permute.xlu0 %4405
      %4409 = vset.pattern.permute.xlu0 0
      %4410 = vperm.xlu0 %4409, %v4120
      %v4411 = vpop.permute.xlu0 %4410
      %4414 = vset.pattern.permute.xlu0 0
      %4415 = vperm.xlu0 %4414, %v4121
      %v4416 = vpop.permute.xlu0 %4415
      %4419 = vset.pattern.permute.xlu0 0
      %4420 = vperm.xlu0 %4419, %v4122
      %v4421 = vpop.permute.xlu0 %4420
      %v4423 = vadd.f32 %v3943, %v4126
      %v4424 = vadd.f32 %v3944, %v4126
      %v4425 = vadd.f32 %v3945, %v4131
      %v4426 = vadd.f32 %v3946, %v4131
      %v4427 = vadd.f32 %v3947, %v4136
      %v4428 = vadd.f32 %v3948, %v4136
      %v4429 = vadd.f32 %v3949, %v4141
      %v4430 = vadd.f32 %v3950, %v4141
      %v4431 = vadd.f32 %v3951, %v4146
      %v4432 = vadd.f32 %v3952, %v4146
      %v4433 = vadd.f32 %v3953, %v4151
      %v4434 = vadd.f32 %v3954, %v4151
      %v4435 = vadd.f32 %v3955, %v4156
      %v4436 = vadd.f32 %v3956, %v4156
      %v4437 = vadd.f32 %v3957, %v4161
      %v4438 = vadd.f32 %v3958, %v4161
      %v4439 = vadd.f32 %v3959, %v4166
      %v4440 = vadd.f32 %v3960, %v4166
      %v4441 = vadd.f32 %v3961, %v4171
      %v4442 = vadd.f32 %v3962, %v4171
      %v4443 = vadd.f32 %v3963, %v4176
      %v4444 = vadd.f32 %v3964, %v4176
      %v4445 = vadd.f32 %v3965, %v4181
      %v4446 = vadd.f32 %v3966, %v4181
      %v4447 = vadd.f32 %v3967, %v4186
      %v4448 = vadd.f32 %v3968, %v4186
      %v4449 = vadd.f32 %v3969, %v4191
      %v4450 = vadd.f32 %v3970, %v4191
      %v4451 = vadd.f32 %v3971, %v4196
      %v4452 = vadd.f32 %v3972, %v4196
      %v4453 = vadd.f32 %v3973, %v4201
      %v4454 = vadd.f32 %v3974, %v4201
      %v4455 = vadd.f32 %v3975, %v4206
      %v4456 = vadd.f32 %v3976, %v4206
      %v4457 = vadd.f32 %v3977, %v4211
      %v4458 = vadd.f32 %v3978, %v4211
      %v4459 = vadd.f32 %v3979, %v4216
      %v4460 = vadd.f32 %v3980, %v4216
      %v4461 = vadd.f32 %v3981, %v4221
      %v4462 = vadd.f32 %v3982, %v4221
      %v4463 = vadd.f32 %v3983, %v4226
      %v4464 = vadd.f32 %v3984, %v4226
      %v4465 = vadd.f32 %v3985, %v4231
      %v4466 = vadd.f32 %v3986, %v4231
      %v4467 = vadd.f32 %v3987, %v4236
      %v4468 = vadd.f32 %v3988, %v4236
      %v4469 = vadd.f32 %v3989, %v4241
      %v4470 = vadd.f32 %v3990, %v4241
      %v4471 = vadd.f32 %v3991, %v4246
      %v4472 = vadd.f32 %v3992, %v4246
      %v4473 = vadd.f32 %v3993, %v4251
      %v4474 = vadd.f32 %v3994, %v4251
      %v4475 = vadd.f32 %v3995, %v4256
      %v4476 = vadd.f32 %v3996, %v4256
      %v4477 = vadd.f32 %v3997, %v4261
      %v4478 = vadd.f32 %v3998, %v4261
      %v4479 = vadd.f32 %v3999, %v4266
      %v4480 = vadd.f32 %v4000, %v4266
      %v4481 = vadd.f32 %v4001, %v4271
      %v4482 = vadd.f32 %v4002, %v4271
      %v4483 = vadd.f32 %v4003, %v4276
      %v4484 = vadd.f32 %v4004, %v4276
      %v4485 = vadd.f32 %v4005, %v4281
      %v4486 = vadd.f32 %v4006, %v4281
      %v4487 = vadd.f32 %v4007, %v4286
      %v4488 = vadd.f32 %v4008, %v4286
      %v4489 = vadd.f32 %v4009, %v4291
      %v4490 = vadd.f32 %v4010, %v4291
      %v4491 = vadd.f32 %v4011, %v4296
      %v4492 = vadd.f32 %v4012, %v4296
      %v4493 = vadd.f32 %v4013, %v4301
      %v4494 = vadd.f32 %v4014, %v4301
      %v4495 = vadd.f32 %v4015, %v4306
      %v4496 = vadd.f32 %v4016, %v4306
      %v4497 = vadd.f32 %v4017, %v4311
      %v4498 = vadd.f32 %v4018, %v4311
      %v4499 = vadd.f32 %v4019, %v4316
      %v4500 = vadd.f32 %v4020, %v4316
      %v4501 = vadd.f32 %v4021, %v4321
      %v4502 = vadd.f32 %v4022, %v4321
      %v4503 = vadd.f32 %v4023, %v4326
      %v4504 = vadd.f32 %v4024, %v4326
      %v4505 = vadd.f32 %v4025, %v4331
      %v4506 = vadd.f32 %v4026, %v4331
      %v4507 = vadd.f32 %v4027, %v4336
      %v4508 = vadd.f32 %v4028, %v4336
      %v4509 = vadd.f32 %v4029, %v4341
      %v4510 = vadd.f32 %v4030, %v4341
      %v4511 = vadd.f32 %v4031, %v4346
      %v4512 = vadd.f32 %v4032, %v4346
      %v4513 = vadd.f32 %v4033, %v4351
      %v4514 = vadd.f32 %v4034, %v4351
      %v4515 = vadd.f32 %v4035, %v4356
      %v4516 = vadd.f32 %v4036, %v4356
      %v4517 = vadd.f32 %v4037, %v4361
      %v4518 = vadd.f32 %v4038, %v4361
      %v4519 = vadd.f32 %v4039, %v4366
      %v4520 = vadd.f32 %v4040, %v4366
      %v4521 = vadd.f32 %v4041, %v4371
      %v4522 = vadd.f32 %v4042, %v4371
      %v4523 = vadd.f32 %v4043, %v4376
      %v4524 = vadd.f32 %v4044, %v4376
      %v4525 = vadd.f32 %v4045, %v4381
      %v4526 = vadd.f32 %v4046, %v4381
      %v4527 = vadd.f32 %v4047, %v4386
      %v4528 = vadd.f32 %v4048, %v4386
      %v4529 = vadd.f32 %v4049, %v4391
      %v4530 = vadd.f32 %v4050, %v4391
      %v4531 = vadd.f32 %v4051, %v4396
      %v4532 = vadd.f32 %v4052, %v4396
      %v4533 = vadd.f32 %v4053, %v4401
      %v4534 = vadd.f32 %v4054, %v4401
      %v4535 = vadd.f32 %v4055, %v4406
      %v4536 = vadd.f32 %v4056, %v4406
      %v4537 = vadd.f32 %v4057, %v4411
      %v4538 = vadd.f32 %v4058, %v4411
      %v4539 = vadd.f32 %v4059, %v4416
      %v4540 = vadd.f32 %v4060, %v4416
      %v4541 = vadd.f32 %v4061, %v4421
      %v4542 = vadd.f32 %v4062, %v4421
      %4543 = vst [vmem:[%s302] sm:$0xff] %v4423
      %4544 = vst.msk [vmem:[%s302 + $0x8] sm:$0xff] %vm1589, %v4424
      %4545 = vst [vmem:[%s302 + $0x10] sm:$0xff] %v4425
      %4546 = vst.msk [vmem:[%s302 + $0x18] sm:$0xff] %vm1589, %v4426
      %4547 = vst [vmem:[%s302 + $0x20] sm:$0xff] %v4427
      %4548 = vst.msk [vmem:[%s302 + $0x28] sm:$0xff] %vm1589, %v4428
      %4549 = vst [vmem:[%s302 + $0x30] sm:$0xff] %v4429
      %4550 = vst.msk [vmem:[%s302 + $0x38] sm:$0xff] %vm1589, %v4430
      %4551 = vst [vmem:[%s302 + $0x40] sm:$0xff] %v4431
      %4552 = vst.msk [vmem:[%s302 + $0x48] sm:$0xff] %vm1589, %v4432
      %4553 = vst [vmem:[%s302 + $0x50] sm:$0xff] %v4433
      %4554 = vst.msk [vmem:[%s302 + $0x58] sm:$0xff] %vm1589, %v4434
      %4555 = vst [vmem:[%s302 + $0x60] sm:$0xff] %v4435
      %4556 = vst.msk [vmem:[%s302 + $0x68] sm:$0xff] %vm1589, %v4436
      %4557 = vst [vmem:[%s302 + $0x70] sm:$0xff] %v4437
      %4558 = vst.msk [vmem:[%s302 + $0x78] sm:$0xff] %vm1589, %v4438
      %4559 = vst [vmem:[%s302 + $0x80] sm:$0xff] %v4439
      %4560 = vst.msk [vmem:[%s302 + $0x88] sm:$0xff] %vm1589, %v4440
      %4561 = vst [vmem:[%s302 + $0x90] sm:$0xff] %v4441
      %4562 = vst.msk [vmem:[%s302 + $0x98] sm:$0xff] %vm1589, %v4442
      %4563 = vst [vmem:[%s302 + $0xa0] sm:$0xff] %v4443
      %4564 = vst.msk [vmem:[%s302 + $0xa8] sm:$0xff] %vm1589, %v4444
      %4565 = vst [vmem:[%s302 + $0xb0] sm:$0xff] %v4445
      %4566 = vst.msk [vmem:[%s302 + $0xb8] sm:$0xff] %vm1589, %v4446
      %4567 = vst [vmem:[%s302 + $0xc0] sm:$0xff] %v4447
      %4568 = vst.msk [vmem:[%s302 + $0xc8] sm:$0xff] %vm1589, %v4448
      %4569 = vst [vmem:[%s302 + $0xd0] sm:$0xff] %v4449
      %4570 = vst.msk [vmem:[%s302 + $0xd8] sm:$0xff] %vm1589, %v4450
      %4571 = vst [vmem:[%s302 + $0xe0] sm:$0xff] %v4451
      %4572 = vst.msk [vmem:[%s302 + $0xe8] sm:$0xff] %vm1589, %v4452
      %4573 = vst [vmem:[%s302 + $0xf0] sm:$0xff] %v4453
      %4574 = vst.msk [vmem:[%s302 + $0xf8] sm:$0xff] %vm1589, %v4454
      %4575 = vst [vmem:[%s302 + $0x100] sm:$0xff] %v4455
      %4576 = vst.msk [vmem:[%s302 + $0x108] sm:$0xff] %vm1589, %v4456
      %4577 = vst [vmem:[%s302 + $0x110] sm:$0xff] %v4457
      %4578 = vst.msk [vmem:[%s302 + $0x118] sm:$0xff] %vm1589, %v4458
      %4579 = vst [vmem:[%s302 + $0x120] sm:$0xff] %v4459
      %4580 = vst.msk [vmem:[%s302 + $0x128] sm:$0xff] %vm1589, %v4460
      %4581 = vst [vmem:[%s302 + $0x130] sm:$0xff] %v4461
      %4582 = vst.msk [vmem:[%s302 + $0x138] sm:$0xff] %vm1589, %v4462
      %4583 = vst [vmem:[%s302 + $0x140] sm:$0xff] %v4463
      %4584 = vst.msk [vmem:[%s302 + $0x148] sm:$0xff] %vm1589, %v4464
      %4585 = vst [vmem:[%s302 + $0x150] sm:$0xff] %v4465
      %4586 = vst.msk [vmem:[%s302 + $0x158] sm:$0xff] %vm1589, %v4466
      %4587 = vst [vmem:[%s302 + $0x160] sm:$0xff] %v4467
      %4588 = vst.msk [vmem:[%s302 + $0x168] sm:$0xff] %vm1589, %v4468
      %4589 = vst [vmem:[%s302 + $0x170] sm:$0xff] %v4469
      %4590 = vst.msk [vmem:[%s302 + $0x178] sm:$0xff] %vm1589, %v4470
      %4591 = vst [vmem:[%s302 + $0x180] sm:$0xff] %v4471
      %4592 = vst.msk [vmem:[%s302 + $0x188] sm:$0xff] %vm1589, %v4472
      %4593 = vst [vmem:[%s302 + $0x190] sm:$0xff] %v4473
      %4594 = vst.msk [vmem:[%s302 + $0x198] sm:$0xff] %vm1589, %v4474
      %4595 = vst [vmem:[%s302 + $0x1a0] sm:$0xff] %v4475
      %4596 = vst.msk [vmem:[%s302 + $0x1a8] sm:$0xff] %vm1589, %v4476
      %4597 = vst [vmem:[%s302 + $0x1b0] sm:$0xff] %v4477
      %4598 = vst.msk [vmem:[%s302 + $0x1b8] sm:$0xff] %vm1589, %v4478
      %4599 = vst [vmem:[%s302 + $0x1c0] sm:$0xff] %v4479
      %4600 = vst.msk [vmem:[%s302 + $0x1c8] sm:$0xff] %vm1589, %v4480
      %4601 = vst [vmem:[%s302 + $0x1d0] sm:$0xff] %v4481
      %4602 = vst.msk [vmem:[%s302 + $0x1d8] sm:$0xff] %vm1589, %v4482
      %4603 = vst [vmem:[%s302 + $0x1e0] sm:$0xff] %v4483
      %4604 = vst.msk [vmem:[%s302 + $0x1e8] sm:$0xff] %vm1589, %v4484
      %4605 = vst [vmem:[%s302 + $0x1f0] sm:$0xff] %v4485
      %4606 = vst.msk [vmem:[%s302 + $0x1f8] sm:$0xff] %vm1589, %v4486
      %4607 = vst [vmem:[%s302 + $0x200] sm:$0xff] %v4487
      %4608 = vst.msk [vmem:[%s302 + $0x208] sm:$0xff] %vm1589, %v4488
      %4609 = vst [vmem:[%s302 + $0x210] sm:$0xff] %v4489
      %4610 = vst.msk [vmem:[%s302 + $0x218] sm:$0xff] %vm1589, %v4490
      %4611 = vst [vmem:[%s302 + $0x220] sm:$0xff] %v4491
      %4612 = vst.msk [vmem:[%s302 + $0x228] sm:$0xff] %vm1589, %v4492
      %4613 = vst [vmem:[%s302 + $0x230] sm:$0xff] %v4493
      %4614 = vst.msk [vmem:[%s302 + $0x238] sm:$0xff] %vm1589, %v4494
      %4615 = vst [vmem:[%s302 + $0x240] sm:$0xff] %v4495
      %4616 = vst.msk [vmem:[%s302 + $0x248] sm:$0xff] %vm1589, %v4496
      %4617 = vst [vmem:[%s302 + $0x250] sm:$0xff] %v4497
      %4618 = vst.msk [vmem:[%s302 + $0x258] sm:$0xff] %vm1589, %v4498
      %4619 = vst [vmem:[%s302 + $0x260] sm:$0xff] %v4499
      %4620 = vst.msk [vmem:[%s302 + $0x268] sm:$0xff] %vm1589, %v4500
      %4621 = vst [vmem:[%s302 + $0x270] sm:$0xff] %v4501
      %4622 = vst.msk [vmem:[%s302 + $0x278] sm:$0xff] %vm1589, %v4502
      %4623 = vst [vmem:[%s302 + $0x280] sm:$0xff] %v4503
      %4624 = vst.msk [vmem:[%s302 + $0x288] sm:$0xff] %vm1589, %v4504
      %4625 = vst [vmem:[%s302 + $0x290] sm:$0xff] %v4505
      %4626 = vst.msk [vmem:[%s302 + $0x298] sm:$0xff] %vm1589, %v4506
      %4627 = vst [vmem:[%s302 + $0x2a0] sm:$0xff] %v4507
      %4628 = vst.msk [vmem:[%s302 + $0x2a8] sm:$0xff] %vm1589, %v4508
      %4629 = vst [vmem:[%s302 + $0x2b0] sm:$0xff] %v4509
      %4630 = vst.msk [vmem:[%s302 + $0x2b8] sm:$0xff] %vm1589, %v4510
      %4631 = vst [vmem:[%s302 + $0x2c0] sm:$0xff] %v4511
      %4632 = vst.msk [vmem:[%s302 + $0x2c8] sm:$0xff] %vm1589, %v4512
      %4633 = vst [vmem:[%s302 + $0x2d0] sm:$0xff] %v4513
      %4634 = vst.msk [vmem:[%s302 + $0x2d8] sm:$0xff] %vm1589, %v4514
      %4635 = vst [vmem:[%s302 + $0x2e0] sm:$0xff] %v4515
      %4636 = vst.msk [vmem:[%s302 + $0x2e8] sm:$0xff] %vm1589, %v4516
      %4637 = vst [vmem:[%s302 + $0x2f0] sm:$0xff] %v4517
      %4638 = vst.msk [vmem:[%s302 + $0x2f8] sm:$0xff] %vm1589, %v4518
      %4639 = vst [vmem:[%s302 + $0x300] sm:$0xff] %v4519
      %4640 = vst.msk [vmem:[%s302 + $0x308] sm:$0xff] %vm1589, %v4520
      %4641 = vst [vmem:[%s302 + $0x310] sm:$0xff] %v4521
      %4642 = vst.msk [vmem:[%s302 + $0x318] sm:$0xff] %vm1589, %v4522
      %4643 = vst [vmem:[%s302 + $0x320] sm:$0xff] %v4523
      %4644 = vst.msk [vmem:[%s302 + $0x328] sm:$0xff] %vm1589, %v4524
      %4645 = vst [vmem:[%s302 + $0x330] sm:$0xff] %v4525
      %4646 = vst.msk [vmem:[%s302 + $0x338] sm:$0xff] %vm1589, %v4526
      %4647 = vst [vmem:[%s302 + $0x340] sm:$0xff] %v4527
      %4648 = vst.msk [vmem:[%s302 + $0x348] sm:$0xff] %vm1589, %v4528
      %4649 = vst [vmem:[%s302 + $0x350] sm:$0xff] %v4529
      %4650 = vst.msk [vmem:[%s302 + $0x358] sm:$0xff] %vm1589, %v4530
      %4651 = vst [vmem:[%s302 + $0x360] sm:$0xff] %v4531
      %4652 = vst.msk [vmem:[%s302 + $0x368] sm:$0xff] %vm1589, %v4532
      %4653 = vst [vmem:[%s302 + $0x370] sm:$0xff] %v4533
      %4654 = vst.msk [vmem:[%s302 + $0x378] sm:$0xff] %vm1589, %v4534
      %4655 = vst [vmem:[%s302 + $0x380] sm:$0xff] %v4535
      %4656 = vst.msk [vmem:[%s302 + $0x388] sm:$0xff] %vm1589, %v4536
      %4657 = vst [vmem:[%s302 + $0x390] sm:$0xff] %v4537
      %4658 = vst.msk [vmem:[%s302 + $0x398] sm:$0xff] %vm1589, %v4538
      %4659 = vst [vmem:[%s302 + $0x3a0] sm:$0xff] %v4539
      %4660 = vst.msk [vmem:[%s302 + $0x3a8] sm:$0xff] %vm1589, %v4540
      %4661 = vst [vmem:[%s302 + $0x3b0] sm:$0xff] %v4541
      %4662 = vst.msk [vmem:[%s302 + $0x3b8] sm:$0xff] %vm1589, %v4542
      %s4663 = smul.u32 60, %s17
      %p4664 = scmp.lt.s32.totalorder %s4663, 119
      %s4665 = scalar_select %p4664, %s4663, 119
      %s4666 = smul.addr %s4665, 2
      %s4667 = smul.addr %s4666, 8
      %s4668 = scalar_lea.vmem %s6, %s4667
      // Predicated region
      $region45: #{fused_forward.1} parent=43 // pred_check
        %p4669 = pneg %p176
      $region46: #{fused_forward.1} parent=43 // pred_check_branch
        %4671 = sbr.rel (%p4669) target = $region48
      $region47: #{fused_forward.1} parent=43 // pred_region
        %s4672 = smul.u32 60, %s17
      $region48: #{fused_forward.1} parent=43 // pred_fallthru
        _
    $region44: #{fused_forward.1} parent=5 // pred_fallthru
      _
    %p4673 = scmp.le.s32.totalorder 2, %s12
    // Predicated region
    $region49: #{fused_forward.1} parent=5 // pred_check
      %p4674 = pneg %p4673
    $region50: #{fused_forward.1} parent=5 // pred_check_branch
      %4676 = sbr.rel (%p4674) target = $region52
    $region51: #{fused_forward.1} parent=5 // pred_region
      %s4677 = ssub.s32 %s12, 2
      // Predicated region
      $region53: #{fused_forward.1} parent=51 // pred_check
        %p4678 = pneg %p182
      $region54: #{fused_forward.1} parent=51 // pred_check_branch
        %4680 = sbr.rel (%p4678) target = $region56
      $region55: #{fused_forward.1} parent=51 // pred_region
        %s4681 = smul.u32 60, %s18
        %p4682 = scmp.lt.s32.totalorder %s4681, 119
        %s4683 = scalar_select %p4682, %s4681, 119
        %s4684 = smul.addr %s4683, 2
        %s4685 = smul.addr %s4684, 8
        %s4686 = scalar_lea.vmem %s6, %s4685
      $region56: #{fused_forward.1} parent=51 // pred_fallthru
        _
    $region52: #{fused_forward.1} parent=5 // pred_fallthru
      _
  $region6: #{fused_forward.1} parent=0 // loop_footer
    %s16 = sadd.s32 1, %s12
  $region7: #{fused_forward.1} parent=0 // loop_footer_branch
    %11 = sbr.rel target = $region3
  $region8: #{fused_forward.1} parent=0 // loop_exit
    _

</llo_original>
